<compile_context>
chip_gen: v6e
topology: v6e:2x2x1
jax: 0.10.0
libtpu: 0.0.40
codegen_flags: <defaults>
</compile_context>

<pallas_src>
import jax
import jax.numpy as jnp
from jax.experimental import pallas as pl
from jax.experimental.pallas import tpu as pltpu


def _build_kernel(*, deltas, M, N, C_out, negative_slope):
    """Returns the Pallas kernel body; all config captured statically by closure."""

    def kernel(x_ref, w_ref, bias_ref, o_ref):
        xf = x_ref[0].astype(jnp.float32)                 # (C_in_p, L) padded + flattened

        # combined (skip + all BN) bias, broadcast over the lane axis once
        acc = jnp.broadcast_to(bias_ref[...], (C_out, N)).astype(jnp.float32)

        # one MXU dot per unique static window offset (scale-folded weights)
        for t, delta in enumerate(deltas):
            win = xf[:, M + delta: M + delta + N]         # (C_in_p, N) static slice
            acc = acc + jnp.dot(w_ref[t], win,            # MXU, f32 accumulation
                                preferred_element_type=jnp.float32)

        # final activation: LeakyReLU
        out = jnp.where(acc >= 0, acc, negative_slope * acc)
        o_ref[0] = out.astype(o_ref.dtype)

    return kernel


def residual_aconv(x, conv_weights, bn_scales, bn_biases,
                   skip_weight=None, skip_scale=None, skip_bias=None,
                   *, dilations, negative_slope=0.01):
    """ResidualAConv forward.  x: (B, C_in, H, W) NCHW.  Returns (B, C_out, H, W)."""
    B, C_in, H, W = x.shape
    C_out = conv_weights[0].shape[0]
    has_skip = skip_weight is not None
    if not has_skip:
        assert C_in == C_out, "identity skip requires C_in == C_out"

    f32 = jnp.float32
    P = max(dilations)                        # spatial halo (covers every dilation)
    Hp, Wp = H + 2 * P, W + 2 * P
    HpWp = Hp * Wp
    N = ((HpWp + 127) // 128) * 128           # lane-dense output width (x128)
    M = P * Wp + P                            # max |window offset| -> 1-D margin
    L = 2 * M + N                             # flattened working length
    C_in_p = ((C_in + 7) // 8) * 8            # sublane-aligned input channels

    # ---- input layout plumbing (pure JAX, no compute hoisted out of the kernel) ----
    xw = jnp.pad(x.astype(f32), ((0, 0), (0, C_in_p - C_in), (P, P), (P, P)))
    xw = xw.reshape(B, C_in_p, HpWp)
    xw = jnp.pad(xw, ((0, 0), (0, 0), (M, L - M - HpWp)))           # (B, C_in_p, L)

    # ---- parameter folding (inference BN -> weights/bias, skip merged into delta=0) ----
    tap_weights = {}                          # flattened offset -> (C_out, C_in) matrix
    for w, s, d in zip(conv_weights, bn_scales, dilations):
        wf = w.astype(f32) * s.astype(f32)[:, None, None, None]     # fold BN scale
        for ky in range(3):
            for kx in range(3):
                delta = (ky - 1) * d * Wp + (kx - 1) * d
                tap_weights[delta] = tap_weights.get(delta, 0.0) + wf[:, :, ky, kx]

    if has_skip:                              # 1x1 conv (bias=False) + folded BN
        skip_mat = skip_scale.astype(f32)[:, None] * skip_weight.astype(f32)
    else:                                     # identity skip (C_in == C_out)
        skip_mat = jnp.eye(C_out, C_in, dtype=f32)
    tap_weights[0] = tap_weights.get(0, 0.0) + skip_mat

    deltas = tuple(sorted(tap_weights.keys()))
    w_all = jnp.stack([tap_weights[dlt] for dlt in deltas], axis=0)  # (T, C_out, C_in)
    w_all = jnp.pad(w_all, ((0, 0), (0, 0), (0, C_in_p - C_in)))     # (T, C_out, C_in_p)
    T = len(deltas)

    bias_total = sum(b.astype(f32) for b in bn_biases)
    if has_skip:
        bias_total = bias_total + skip_bias.astype(f32)
    bias_total = bias_total[:, None]                                  # (C_out, 1)

    kernel = _build_kernel(deltas=deltas, M=M, N=N, C_out=C_out,
                           negative_slope=negative_slope)

    out = pl.pallas_call(
        kernel,
        out_shape=jax.ShapeDtypeStruct((B, C_out, N), x.dtype),
        grid_spec=pltpu.PrefetchScalarGridSpec(
            num_scalar_prefetch=0,
            grid=(B,),
            in_specs=[
                pl.BlockSpec((1, C_in_p, L), lambda b: (b, 0, 0)),
                pl.BlockSpec((T, C_out, C_in_p), lambda b: (0, 0, 0)),
                pl.BlockSpec((C_out, 1), lambda b: (0, 0)),
            ],
            out_specs=pl.BlockSpec((1, C_out, N), lambda b: (b, 0, 0)),
        ),
        compiler_params=pltpu.CompilerParams(
            dimension_semantics=("parallel",),
            vmem_limit_bytes=32 * 1024 * 1024,
        ),
    )(xw, w_all, bias_total)

    # crop the lane padding and the conv halo back to (B, C_out, H, W)
    out = out[:, :, :HpWp].reshape(B, C_out, Hp, Wp)[:, :, P:P + H, P:P + W]
    return out


# ------------------------------ pure-JAX reference ------------------------------
def residual_aconv_ref(x, conv_weights, bn_scales, bn_biases,
                       skip_weight, skip_scale, skip_bias,
                       dilations, negative_slope=0.01):
    dn = ("NCHW", "OIHW", "NCHW")
    hi = jax.lax.Precision.HIGHEST
    if skip_weight is not None:
        res = jax.lax.conv_general_dilated(
            x, skip_weight[:, :, None, None], (1, 1), "VALID",
            dimension_numbers=dn, precision=hi)
        res = res * skip_scale[None, :, None, None] + skip_bias[None, :, None, None]
    else:
        res = x
    for w, s, b, d in zip(conv_weights, bn_scales, bn_biases, dilations):
        y = jax.lax.conv_general_dilated(
            x, w, (1, 1), [(d, d), (d, d)], rhs_dilation=(d, d),
            dimension_numbers=dn, precision=hi)
        res = res + y * s[None, :, None, None] + b[None, :, None, None]
    return jnp.where(res >= 0, res, negative_slope * res)


def _folded_bn_params(key, channels, eps=1e-5):
    k1, k2, k3, k4 = jax.random.split(key, 4)
    gamma = 1.0 + 0.1 * jax.random.normal(k1, (channels,), jnp.float32)
    beta = 0.1 * jax.random.normal(k2, (channels,), jnp.float32)
    running_mean = 0.1 * jax.random.normal(k3, (channels,), jnp.float32)
    running_var = jax.random.uniform(k4, (channels,), jnp.float32, 0.5, 1.5)
    scale = gamma / jnp.sqrt(running_var + eps)
    bias = beta - running_mean * scale
    return scale, bias


def _make_case(key, B, C_in, C_out, H, W, dilations, with_skip):
    ks = jax.random.split(key, 2 + 2 * len(dilations) + 2)
    x = jax.random.normal(ks[0], (B, C_in, H, W), jnp.float32)
    conv_weights, bn_scales, bn_biases = [], [], []
    for i in range(len(dilations)):
        w = 0.25 * jax.random.normal(ks[1 + 2 * i], (C_out, C_in, 3, 3), jnp.float32)
        s, b = _folded_bn_params(ks[2 + 2 * i], C_out)
        conv_weights.append(w)
        bn_scales.append(s)
        bn_biases.append(b)
    if with_skip:
        skip_weight = 0.25 * jax.random.normal(ks[-2], (C_out, C_in), jnp.float32)
        skip_scale, skip_bias = _folded_bn_params(ks[-1], C_out)
    else:
        skip_weight = skip_scale = skip_bias = None
    return x, conv_weights, bn_scales, bn_biases, skip_weight, skip_scale, skip_bias


if __name__ == "__main__":
    key = jax.random.PRNGKey(0)
    k0, k1 = jax.random.split(key)
    dilations = (1, 2)

    # Case 1: C_in != C_out  -> learned 1x1 conv + BN skip
    case1 = _make_case(k0, B=2, C_in=4, C_out=8, H=16, W=16,
                       dilations=dilations, with_skip=True)
    # Case 2: C_in == C_out  -> identity skip
    case2 = _make_case(k1, B=2, C_in=8, C_out=8, H=16, W=16,
                       dilations=dilations, with_skip=False)

    fwd = jax.jit(lambda *a: residual_aconv(*a, dilations=dilations))

    for args in (case1, case2):
        out = jax.block_until_ready(fwd(*args))
        ref = residual_aconv_ref(*args, dilations=dilations)
        assert out.shape == ref.shape, (out.shape, ref.shape)
        max_err = float(jnp.max(jnp.abs(out - ref)))
        # tolerance accounts for MXU f32 accumulation / BN-folding rounding differences
        # vs the XLA reference convolution across TPU generations
        assert jnp.allclose(out, ref, atol=1e-2, rtol=1e-2), f"max abs err = {max_err}"

    print("KERNEL_OK")
</pallas_src>

<mosaic_0001>
module attributes {stable_mosaic.version = 11 : i64} {
  func.func @kernel(%arg0: i32, %arg1: memref<1x8x596xf32, #tpu.memory_space<vmem>>, %arg2: memref<17x8x8xf32, #tpu.memory_space<vmem>>, %arg3: memref<8x1xf32, #tpu.memory_space<vmem>>, %arg4: memref<1x8x512xf32, #tpu.memory_space<vmem>>) attributes {dimension_semantics = [#tpu.dimension_semantics<parallel>], iteration_bounds = array<i64: 2>, scalar_prefetch = 0 : i64, scratch_operands = 0 : i64, tpu.core_type = #tpu.core_type<tc>, window_params = [{transform_indices = @transform_0, window_bounds = array<i64: 1, 8, 596>}, {pipeline_mode = #tpu.pipeline_mode<synchronous>, transform_indices = @transform_1, window_bounds = array<i64: 17, 8, 8>}, {pipeline_mode = #tpu.pipeline_mode<synchronous>, transform_indices = @transform_2, window_bounds = array<i64: 8, 1>}, {transform_indices = @transform_3, window_bounds = array<i64: 1, 8, 512>}]} {
    %c0 = arith.constant 0 : index
    %c0_0 = arith.constant 0 : index
    %c0_1 = arith.constant 0 : index
    %0 = vector.load %arg1[%c0, %c0_0, %c0_1] : memref<1x8x596xf32, #tpu.memory_space<vmem>>, vector<1x8x596xf32>
    %1 = vector.shape_cast %0 : vector<1x8x596xf32> to vector<8x596xf32>
    %c0_2 = arith.constant 0 : index
    %c0_3 = arith.constant 0 : index
    %2 = vector.load %arg3[%c0_2, %c0_3] : memref<8x1xf32, #tpu.memory_space<vmem>>, vector<8x1xf32>
    %3 = vector.shape_cast %2 : vector<8x1xf32> to vector<8x1xf32>
    %4 = vector.broadcast %3 : vector<8x1xf32> to vector<8x512xf32>
    %5 = vector.extract_strided_slice %1 {offsets = [0, 0], sizes = [8, 512], strides = [1, 1]} : vector<8x596xf32> to vector<8x512xf32>
    %c0_4 = arith.constant 0 : index
    %c0_5 = arith.constant 0 : index
    %c0_6 = arith.constant 0 : index
    %6 = vector.load %arg2[%c0_4, %c0_5, %c0_6] : memref<17x8x8xf32, #tpu.memory_space<vmem>>, vector<1x8x8xf32>
    %7 = vector.shape_cast %6 : vector<1x8x8xf32> to vector<8x8xf32>
    %cst = arith.constant dense<0.000000e+00> : vector<8x512xf32>
    %8 = tpu.matmul %7, %5, %cst {dimension_numbers = #tpu.dot_dimension_numbers<[1], [0], [0], [1], [0, 0, 1, 1], [], []>} : vector<8x8xf32>, vector<8x512xf32>, vector<8x512xf32> -> vector<8x512xf32>
    %9 = arith.addf %4, %8 : vector<8x512xf32>
    %10 = vector.extract_strided_slice %1 {offsets = [0, 2], sizes = [8, 512], strides = [1, 1]} : vector<8x596xf32> to vector<8x512xf32>
    %c1 = arith.constant 1 : index
    %c0_7 = arith.constant 0 : index
    %c0_8 = arith.constant 0 : index
    %11 = vector.load %arg2[%c1, %c0_7, %c0_8] : memref<17x8x8xf32, #tpu.memory_space<vmem>>, vector<1x8x8xf32>
    %12 = vector.shape_cast %11 : vector<1x8x8xf32> to vector<8x8xf32>
    %cst_9 = arith.constant dense<0.000000e+00> : vector<8x512xf32>
    %13 = tpu.matmul %12, %10, %cst_9 {dimension_numbers = #tpu.dot_dimension_numbers<[1], [0], [0], [1], [0, 0, 1, 1], [], []>} : vector<8x8xf32>, vector<8x512xf32>, vector<8x512xf32> -> vector<8x512xf32>
    %14 = arith.addf %9, %13 : vector<8x512xf32>
    %15 = vector.extract_strided_slice %1 {offsets = [0, 4], sizes = [8, 512], strides = [1, 1]} : vector<8x596xf32> to vector<8x512xf32>
    %c2 = arith.constant 2 : index
    %c0_10 = arith.constant 0 : index
    %c0_11 = arith.constant 0 : index
    %16 = vector.load %arg2[%c2, %c0_10, %c0_11] : memref<17x8x8xf32, #tpu.memory_space<vmem>>, vector<1x8x8xf32>
    %17 = vector.shape_cast %16 : vector<1x8x8xf32> to vector<8x8xf32>
    %cst_12 = arith.constant dense<0.000000e+00> : vector<8x512xf32>
    %18 = tpu.matmul %17, %15, %cst_12 {dimension_numbers = #tpu.dot_dimension_numbers<[1], [0], [0], [1], [0, 0, 1, 1], [], []>} : vector<8x8xf32>, vector<8x512xf32>, vector<8x512xf32> -> vector<8x512xf32>
    %19 = arith.addf %14, %18 : vector<8x512xf32>
    %20 = vector.extract_strided_slice %1 {offsets = [0, 21], sizes = [8, 512], strides = [1, 1]} : vector<8x596xf32> to vector<8x512xf32>
    %c3 = arith.constant 3 : index
    %c0_13 = arith.constant 0 : index
    %c0_14 = arith.constant 0 : index
    %21 = vector.load %arg2[%c3, %c0_13, %c0_14] : memref<17x8x8xf32, #tpu.memory_space<vmem>>, vector<1x8x8xf32>
    %22 = vector.shape_cast %21 : vector<1x8x8xf32> to vector<8x8xf32>
    %cst_15 = arith.constant dense<0.000000e+00> : vector<8x512xf32>
    %23 = tpu.matmul %22, %20, %cst_15 {dimension_numbers = #tpu.dot_dimension_numbers<[1], [0], [0], [1], [0, 0, 1, 1], [], []>} : vector<8x8xf32>, vector<8x512xf32>, vector<8x512xf32> -> vector<8x512xf32>
    %24 = arith.addf %19, %23 : vector<8x512xf32>
    %25 = vector.extract_strided_slice %1 {offsets = [0, 22], sizes = [8, 512], strides = [1, 1]} : vector<8x596xf32> to vector<8x512xf32>
    %c4 = arith.constant 4 : index
    %c0_16 = arith.constant 0 : index
    %c0_17 = arith.constant 0 : index
    %26 = vector.load %arg2[%c4, %c0_16, %c0_17] : memref<17x8x8xf32, #tpu.memory_space<vmem>>, vector<1x8x8xf32>
    %27 = vector.shape_cast %26 : vector<1x8x8xf32> to vector<8x8xf32>
    %cst_18 = arith.constant dense<0.000000e+00> : vector<8x512xf32>
    %28 = tpu.matmul %27, %25, %cst_18 {dimension_numbers = #tpu.dot_dimension_numbers<[1], [0], [0], [1], [0, 0, 1, 1], [], []>} : vector<8x8xf32>, vector<8x512xf32>, vector<8x512xf32> -> vector<8x512xf32>
    %29 = arith.addf %24, %28 : vector<8x512xf32>
    %30 = vector.extract_strided_slice %1 {offsets = [0, 23], sizes = [8, 512], strides = [1, 1]} : vector<8x596xf32> to vector<8x512xf32>
    %c5 = arith.constant 5 : index
    %c0_19 = arith.constant 0 : index
    %c0_20 = arith.constant 0 : index
    %31 = vector.load %arg2[%c5, %c0_19, %c0_20] : memref<17x8x8xf32, #tpu.memory_space<vmem>>, vector<1x8x8xf32>
    %32 = vector.shape_cast %31 : vector<1x8x8xf32> to vector<8x8xf32>
    %cst_21 = arith.constant dense<0.000000e+00> : vector<8x512xf32>
    %33 = tpu.matmul %32, %30, %cst_21 {dimension_numbers = #tpu.dot_dimension_numbers<[1], [0], [0], [1], [0, 0, 1, 1], [], []>} : vector<8x8xf32>, vector<8x512xf32>, vector<8x512xf32> -> vector<8x512xf32>
    %34 = arith.addf %29, %33 : vector<8x512xf32>
    %35 = vector.extract_strided_slice %1 {offsets = [0, 40], sizes = [8, 512], strides = [1, 1]} : vector<8x596xf32> to vector<8x512xf32>
    %c6 = arith.constant 6 : index
    %c0_22 = arith.constant 0 : index
    %c0_23 = arith.constant 0 : index
    %36 = vector.load %arg2[%c6, %c0_22, %c0_23] : memref<17x8x8xf32, #tpu.memory_space<vmem>>, vector<1x8x8xf32>
    %37 = vector.shape_cast %36 : vector<1x8x8xf32> to vector<8x8xf32>
    %cst_24 = arith.constant dense<0.000000e+00> : vector<8x512xf32>
    %38 = tpu.matmul %37, %35, %cst_24 {dimension_numbers = #tpu.dot_dimension_numbers<[1], [0], [0], [1], [0, 0, 1, 1], [], []>} : vector<8x8xf32>, vector<8x512xf32>, vector<8x512xf32> -> vector<8x512xf32>
    %39 = arith.addf %34, %38 : vector<8x512xf32>
    %40 = vector.extract_strided_slice %1 {offsets = [0, 41], sizes = [8, 512], strides = [1, 1]} : vector<8x596xf32> to vector<8x512xf32>
    %c7 = arith.constant 7 : index
    %c0_25 = arith.constant 0 : index
    %c0_26 = arith.constant 0 : index
    %41 = vector.load %arg2[%c7, %c0_25, %c0_26] : memref<17x8x8xf32, #tpu.memory_space<vmem>>, vector<1x8x8xf32>
    %42 = vector.shape_cast %41 : vector<1x8x8xf32> to vector<8x8xf32>
    %cst_27 = arith.constant dense<0.000000e+00> : vector<8x512xf32>
    %43 = tpu.matmul %42, %40, %cst_27 {dimension_numbers = #tpu.dot_dimension_numbers<[1], [0], [0], [1], [0, 0, 1, 1], [], []>} : vector<8x8xf32>, vector<8x512xf32>, vector<8x512xf32> -> vector<8x512xf32>
    %44 = arith.addf %39, %43 : vector<8x512xf32>
    %45 = vector.extract_strided_slice %1 {offsets = [0, 42], sizes = [8, 512], strides = [1, 1]} : vector<8x596xf32> to vector<8x512xf32>
    %c8 = arith.constant 8 : index
    %c0_28 = arith.constant 0 : index
    %c0_29 = arith.constant 0 : index
    %46 = vector.load %arg2[%c8, %c0_28, %c0_29] : memref<17x8x8xf32, #tpu.memory_space<vmem>>, vector<1x8x8xf32>
    %47 = vector.shape_cast %46 : vector<1x8x8xf32> to vector<8x8xf32>
    %cst_30 = arith.constant dense<0.000000e+00> : vector<8x512xf32>
    %48 = tpu.matmul %47, %45, %cst_30 {dimension_numbers = #tpu.dot_dimension_numbers<[1], [0], [0], [1], [0, 0, 1, 1], [], []>} : vector<8x8xf32>, vector<8x512xf32>, vector<8x512xf32> -> vector<8x512xf32>
    %49 = arith.addf %44, %48 : vector<8x512xf32>
    %50 = vector.extract_strided_slice %1 {offsets = [0, 43], sizes = [8, 512], strides = [1, 1]} : vector<8x596xf32> to vector<8x512xf32>
    %c9 = arith.constant 9 : index
    %c0_31 = arith.constant 0 : index
    %c0_32 = arith.constant 0 : index
    %51 = vector.load %arg2[%c9, %c0_31, %c0_32] : memref<17x8x8xf32, #tpu.memory_space<vmem>>, vector<1x8x8xf32>
    %52 = vector.shape_cast %51 : vector<1x8x8xf32> to vector<8x8xf32>
    %cst_33 = arith.constant dense<0.000000e+00> : vector<8x512xf32>
    %53 = tpu.matmul %52, %50, %cst_33 {dimension_numbers = #tpu.dot_dimension_numbers<[1], [0], [0], [1], [0, 0, 1, 1], [], []>} : vector<8x8xf32>, vector<8x512xf32>, vector<8x512xf32> -> vector<8x512xf32>
    %54 = arith.addf %49, %53 : vector<8x512xf32>
    %55 = vector.extract_strided_slice %1 {offsets = [0, 44], sizes = [8, 512], strides = [1, 1]} : vector<8x596xf32> to vector<8x512xf32>
    %c10 = arith.constant 10 : index
    %c0_34 = arith.constant 0 : index
    %c0_35 = arith.constant 0 : index
    %56 = vector.load %arg2[%c10, %c0_34, %c0_35] : memref<17x8x8xf32, #tpu.memory_space<vmem>>, vector<1x8x8xf32>
    %57 = vector.shape_cast %56 : vector<1x8x8xf32> to vector<8x8xf32>
    %cst_36 = arith.constant dense<0.000000e+00> : vector<8x512xf32>
    %58 = tpu.matmul %57, %55, %cst_36 {dimension_numbers = #tpu.dot_dimension_numbers<[1], [0], [0], [1], [0, 0, 1, 1], [], []>} : vector<8x8xf32>, vector<8x512xf32>, vector<8x512xf32> -> vector<8x512xf32>
    %59 = arith.addf %54, %58 : vector<8x512xf32>
    %60 = vector.extract_strided_slice %1 {offsets = [0, 61], sizes = [8, 512], strides = [1, 1]} : vector<8x596xf32> to vector<8x512xf32>
    %c11 = arith.constant 11 : index
    %c0_37 = arith.constant 0 : index
    %c0_38 = arith.constant 0 : index
    %61 = vector.load %arg2[%c11, %c0_37, %c0_38] : memref<17x8x8xf32, #tpu.memory_space<vmem>>, vector<1x8x8xf32>
    %62 = vector.shape_cast %61 : vector<1x8x8xf32> to vector<8x8xf32>
    %cst_39 = arith.constant dense<0.000000e+00> : vector<8x512xf32>
    %63 = tpu.matmul %62, %60, %cst_39 {dimension_numbers = #tpu.dot_dimension_numbers<[1], [0], [0], [1], [0, 0, 1, 1], [], []>} : vector<8x8xf32>, vector<8x512xf32>, vector<8x512xf32> -> vector<8x512xf32>
    %64 = arith.addf %59, %63 : vector<8x512xf32>
    %65 = vector.extract_strided_slice %1 {offsets = [0, 62], sizes = [8, 512], strides = [1, 1]} : vector<8x596xf32> to vector<8x512xf32>
    %c12 = arith.constant 12 : index
    %c0_40 = arith.constant 0 : index
    %c0_41 = arith.constant 0 : index
    %66 = vector.load %arg2[%c12, %c0_40, %c0_41] : memref<17x8x8xf32, #tpu.memory_space<vmem>>, vector<1x8x8xf32>
    %67 = vector.shape_cast %66 : vector<1x8x8xf32> to vector<8x8xf32>
    %cst_42 = arith.constant dense<0.000000e+00> : vector<8x512xf32>
    %68 = tpu.matmul %67, %65, %cst_42 {dimension_numbers = #tpu.dot_dimension_numbers<[1], [0], [0], [1], [0, 0, 1, 1], [], []>} : vector<8x8xf32>, vector<8x512xf32>, vector<8x512xf32> -> vector<8x512xf32>
    %69 = arith.addf %64, %68 : vector<8x512xf32>
    %70 = vector.extract_strided_slice %1 {offsets = [0, 63], sizes = [8, 512], strides = [1, 1]} : vector<8x596xf32> to vector<8x512xf32>
    %c13 = arith.constant 13 : index
    %c0_43 = arith.constant 0 : index
    %c0_44 = arith.constant 0 : index
    %71 = vector.load %arg2[%c13, %c0_43, %c0_44] : memref<17x8x8xf32, #tpu.memory_space<vmem>>, vector<1x8x8xf32>
    %72 = vector.shape_cast %71 : vector<1x8x8xf32> to vector<8x8xf32>
    %cst_45 = arith.constant dense<0.000000e+00> : vector<8x512xf32>
    %73 = tpu.matmul %72, %70, %cst_45 {dimension_numbers = #tpu.dot_dimension_numbers<[1], [0], [0], [1], [0, 0, 1, 1], [], []>} : vector<8x8xf32>, vector<8x512xf32>, vector<8x512xf32> -> vector<8x512xf32>
    %74 = arith.addf %69, %73 : vector<8x512xf32>
    %75 = vector.extract_strided_slice %1 {offsets = [0, 80], sizes = [8, 512], strides = [1, 1]} : vector<8x596xf32> to vector<8x512xf32>
    %c14 = arith.constant 14 : index
    %c0_46 = arith.constant 0 : index
    %c0_47 = arith.constant 0 : index
    %76 = vector.load %arg2[%c14, %c0_46, %c0_47] : memref<17x8x8xf32, #tpu.memory_space<vmem>>, vector<1x8x8xf32>
    %77 = vector.shape_cast %76 : vector<1x8x8xf32> to vector<8x8xf32>
    %cst_48 = arith.constant dense<0.000000e+00> : vector<8x512xf32>
    %78 = tpu.matmul %77, %75, %cst_48 {dimension_numbers = #tpu.dot_dimension_numbers<[1], [0], [0], [1], [0, 0, 1, 1], [], []>} : vector<8x8xf32>, vector<8x512xf32>, vector<8x512xf32> -> vector<8x512xf32>
    %79 = arith.addf %74, %78 : vector<8x512xf32>
    %80 = vector.extract_strided_slice %1 {offsets = [0, 82], sizes = [8, 512], strides = [1, 1]} : vector<8x596xf32> to vector<8x512xf32>
    %c15 = arith.constant 15 : index
    %c0_49 = arith.constant 0 : index
    %c0_50 = arith.constant 0 : index
    %81 = vector.load %arg2[%c15, %c0_49, %c0_50] : memref<17x8x8xf32, #tpu.memory_space<vmem>>, vector<1x8x8xf32>
    %82 = vector.shape_cast %81 : vector<1x8x8xf32> to vector<8x8xf32>
    %cst_51 = arith.constant dense<0.000000e+00> : vector<8x512xf32>
    %83 = tpu.matmul %82, %80, %cst_51 {dimension_numbers = #tpu.dot_dimension_numbers<[1], [0], [0], [1], [0, 0, 1, 1], [], []>} : vector<8x8xf32>, vector<8x512xf32>, vector<8x512xf32> -> vector<8x512xf32>
    %84 = arith.addf %79, %83 : vector<8x512xf32>
    %85 = vector.extract_strided_slice %1 {offsets = [0, 84], sizes = [8, 512], strides = [1, 1]} : vector<8x596xf32> to vector<8x512xf32>
    %c16 = arith.constant 16 : index
    %c0_52 = arith.constant 0 : index
    %c0_53 = arith.constant 0 : index
    %86 = vector.load %arg2[%c16, %c0_52, %c0_53] : memref<17x8x8xf32, #tpu.memory_space<vmem>>, vector<1x8x8xf32>
    %87 = vector.shape_cast %86 : vector<1x8x8xf32> to vector<8x8xf32>
    %cst_54 = arith.constant dense<0.000000e+00> : vector<8x512xf32>
    %88 = tpu.matmul %87, %85, %cst_54 {dimension_numbers = #tpu.dot_dimension_numbers<[1], [0], [0], [1], [0, 0, 1, 1], [], []>} : vector<8x8xf32>, vector<8x512xf32>, vector<8x512xf32> -> vector<8x512xf32>
    %89 = arith.addf %84, %88 : vector<8x512xf32>
    %cst_55 = arith.constant 0.000000e+00 : f32
    %90 = vector.broadcast %cst_55 : f32 to vector<8x512xf32>
    %91 = arith.cmpf oge, %89, %90 : vector<8x512xf32>
    %cst_56 = arith.constant 0.00999999977 : f32
    %92 = vector.broadcast %cst_56 : f32 to vector<8x512xf32>
    %93 = arith.mulf %92, %89 : vector<8x512xf32>
    %94 = arith.select %91, %89, %93 : vector<8x512xi1>, vector<8x512xf32>
    %c0_57 = arith.constant 0 : index
    %c0_58 = arith.constant 0 : index
    %c0_59 = arith.constant 0 : index
    %95 = vector.load %arg4[%c0_57, %c0_58, %c0_59] : memref<1x8x512xf32, #tpu.memory_space<vmem>>, vector<1x8x512xf32>
    %96 = vector.shape_cast %95 : vector<1x8x512xf32> to vector<8x512xf32>
    %97 = vector.shape_cast %94 : vector<8x512xf32> to vector<1x8x512xf32>
    tpu.vector_store %arg4[%c0_57, %c0_58, %c0_59], %97 {strides = array<i32>} : memref<1x8x512xf32, #tpu.memory_space<vmem>>, vector<1x8x512xf32>,
    return
  }
  func.func @transform_0(%arg0: i32) -> (i32, i32, i32) {
    %c0_i32 = arith.constant 0 : i32
    %c0_i32_0 = arith.constant 0 : i32
    %c0_i32_1 = arith.constant 0 : i32
    return %arg0, %c0_i32, %c0_i32_0 : i32, i32, i32
  }
  func.func @transform_1(%arg0: i32) -> (i32, i32, i32) {
    %c0_i32 = arith.constant 0 : i32
    %c0_i32_0 = arith.constant 0 : i32
    %c0_i32_1 = arith.constant 0 : i32
    %c0_i32_2 = arith.constant 0 : i32
    return %c0_i32, %c0_i32_0, %c0_i32_1 : i32, i32, i32
  }
  func.func @transform_2(%arg0: i32) -> (i32, i32) {
    %c0_i32 = arith.constant 0 : i32
    %c0_i32_0 = arith.constant 0 : i32
    %c0_i32_1 = arith.constant 0 : i32
    return %c0_i32, %c0_i32_0 : i32, i32
  }
  func.func @transform_3(%arg0: i32) -> (i32, i32, i32) {
    %c0_i32 = arith.constant 0 : i32
    %c0_i32_0 = arith.constant 0 : i32
    %c0_i32_1 = arith.constant 0 : i32
    return %arg0, %c0_i32, %c0_i32_0 : i32, i32, i32
  }
}

</mosaic_0001>

<llo_original>
// kernel: _lambda_.1
$region0: #{_lambda_.1}
  #allocation0 [shape = 'u32[]', space=smem, size = 0x4, offset = 0x4, fixed_abs, tag = 'smem constant byte address 0x4 - core index']
  #allocation1 [shape = 'u32[144,128]{1,0:T(1,128)}', space=vmem, size = 0x12000, scoped, tag = 'internal scratch']
  %s0 = inlined_call_operand.vmem [shape: f32[2,8,596], index: 0, kind: input, shape index: {}]
  %s1 = inlined_call_operand.vmem [shape: f32[17,8,8], index: 1, kind: input, shape index: {}]
  %s2 = inlined_call_operand.vmem [shape: f32[8,1], index: 2, kind: input, shape index: {}]
  %s3 = inlined_call_operand.vmem [shape: f32[2,8,512], index: 3, kind: output, shape index: {}]
  %s4 = sld [smem:[#allocation0]]
  $region45: #{_lambda_.1} parent=0
    _
  %s6 = ssub.s32 1, %s4
  %s7 = scalar_select 0, %s6, %s4
  loop: start=0, step=1, limit=4
  $region2: #{_lambda_.1} parent=0 // loop_pre_header
    _
  $region3: #{_lambda_.1} parent=0 // loop_header
    %s9 = sphi 0, %s13
    %p10 = scmp.ge.s32.totalorder %s9, 4
    %s19 = sphi 0, %s21
    %s22 = sphi 0, %s19
    %s23 = sphi 0, %s22
    %s39 = sphi 0, %s23
    %s43 = sphi 0, %s43
    %s45 = sphi 0, %s43
    %s46 = sphi 0, %s45
    %s60 = sphi 0, %s46
    %s64 = sphi 0, %s64
    %s66 = sphi 0, %s64
    %s67 = sphi 0, %s66
    %s81 = sphi 0, %s67
    %s87 = sphi 0, %s89
    %s90 = sphi 0, %s87
    %s91 = sphi 0, %s90
    %s107 = sphi 0, %s91
  $region4: #{_lambda_.1} parent=0 // loop_header_branch
    %12 = sbr.rel (%p10) target = $region8
  $region5: #{_lambda_.1} parent=0 // loop_body
    %s14 = ssub.s32 %s9, 1
    %s15 = ssub.s32 %s9, 2
    %s16 = sadd.s32 %s9, 1
    %s17 = ssub.s32 %s9, %s16
    %p18 = scmp.eq.s32.totalorder %s17, 0
    %s20 = sadd.s32 %s19, 1
    %s21 = scalar_select %p18, %s19, %s20
    %p24 = pneg %p18
    %p25 = scmp.eq.s32.totalorder %s9, 1
    %p26 = por %p24, %p25
    %p27 = scmp.ne.s32.totalorder %s19, %s22
    %p28 = scmp.eq.s32.totalorder %s9, 0
    %p29 = por %p27, %p28
    %p30 = scmp.ne.s32.totalorder %s19, %s22
    %p31 = scmp.eq.s32.totalorder %s14, 1
    %p32 = por %p30, %p31
    %p33 = scmp.ne.s32.totalorder %s22, %s23
    %p34 = scmp.eq.s32.totalorder %s14, 0
    %p35 = por %p33, %p34
    %p36 = scmp.ne.s32.totalorder %s22, %s23
    %p37 = scmp.eq.s32.totalorder %s15, 1
    %p38 = por %p36, %p37
    %p40 = scmp.ne.s32.totalorder %s23, %s39
    %p41 = scmp.eq.s32.totalorder %s15, 0
    %p42 = por %p40, %p41
    %s44 = sadd.s32 %s43, 1
    %p47 = scmp.eq.s32.totalorder %s9, 1
    %p48 = scmp.ne.s32.totalorder %s43, %s45
    %p49 = scmp.eq.s32.totalorder %s9, 0
    %p50 = por %p48, %p49
    %p51 = scmp.ne.s32.totalorder %s43, %s45
    %p52 = scmp.eq.s32.totalorder %s14, 1
    %p53 = por %p51, %p52
    %p54 = scmp.ne.s32.totalorder %s45, %s46
    %p55 = scmp.eq.s32.totalorder %s14, 0
    %p56 = por %p54, %p55
    %p57 = scmp.ne.s32.totalorder %s45, %s46
    %p58 = scmp.eq.s32.totalorder %s15, 1
    %p59 = por %p57, %p58
    %p61 = scmp.ne.s32.totalorder %s46, %s60
    %p62 = scmp.eq.s32.totalorder %s15, 0
    %p63 = por %p61, %p62
    %s65 = sadd.s32 %s64, 1
    %p68 = scmp.eq.s32.totalorder %s9, 1
    %p69 = scmp.ne.s32.totalorder %s64, %s66
    %p70 = scmp.eq.s32.totalorder %s9, 0
    %p71 = por %p69, %p70
    %p72 = scmp.ne.s32.totalorder %s64, %s66
    %p73 = scmp.eq.s32.totalorder %s14, 1
    %p74 = por %p72, %p73
    %p75 = scmp.ne.s32.totalorder %s66, %s67
    %p76 = scmp.eq.s32.totalorder %s14, 0
    %p77 = por %p75, %p76
    %p78 = scmp.ne.s32.totalorder %s66, %s67
    %p79 = scmp.eq.s32.totalorder %s15, 1
    %p80 = por %p78, %p79
    %p82 = scmp.ne.s32.totalorder %s67, %s81
    %p83 = scmp.eq.s32.totalorder %s15, 0
    %p84 = por %p82, %p83
    %s85 = ssub.s32 %s9, %s16
    %p86 = scmp.eq.s32.totalorder %s85, 0
    %s88 = sadd.s32 %s87, 1
    %s89 = scalar_select %p86, %s87, %s88
    %p92 = pneg %p86
    %p93 = scmp.eq.s32.totalorder %s9, 1
    %p94 = por %p92, %p93
    %p95 = scmp.ne.s32.totalorder %s87, %s90
    %p96 = scmp.eq.s32.totalorder %s9, 0
    %p97 = por %p95, %p96
    %p98 = scmp.ne.s32.totalorder %s87, %s90
    %p99 = scmp.eq.s32.totalorder %s14, 1
    %p100 = por %p98, %p99
    %p101 = scmp.ne.s32.totalorder %s90, %s91
    %p102 = scmp.eq.s32.totalorder %s14, 0
    %p103 = por %p101, %p102
    %p104 = scmp.ne.s32.totalorder %s90, %s91
    %p105 = scmp.eq.s32.totalorder %s15, 1
    %p106 = por %p104, %p105
    %p108 = scmp.ne.s32.totalorder %s91, %s107
    %p109 = scmp.eq.s32.totalorder %s15, 0
    %p110 = por %p108, %p109
    %p111 = scmp.le.s32.totalorder 1, %s9
    %p112 = scmp.lt.s32.totalorder %s9, 3
    %p113 = pnand %p111, %p112
    %p114 = pneg %p113
    // Predicated region
    $region9: #{_lambda_.1} parent=5 // pred_check
      _
    $region10: #{_lambda_.1} parent=5 // pred_check_branch
      %116 = sbr.rel (%p113) target = $region12
    $region11: #{_lambda_.1} parent=5 // pred_region
      %s117 = ssub.s32 %s9, 1
      // Predicated region
      $region13: #{_lambda_.1} parent=11 // pred_check
        %p118 = pneg %p56
      $region14: #{_lambda_.1} parent=11 // pred_check_branch
        %120 = sbr.rel (%p118) target = $region16
      $region15: #{_lambda_.1} parent=11 // pred_region
        _
      $region16: #{_lambda_.1} parent=11 // pred_fallthru
        _
      // Predicated region
      $region17: #{_lambda_.1} parent=11 // pred_check
        %p121 = pneg %p77
      $region18: #{_lambda_.1} parent=11 // pred_check_branch
        %123 = sbr.rel (%p121) target = $region20
      $region19: #{_lambda_.1} parent=11 // pred_region
        _
      $region20: #{_lambda_.1} parent=11 // pred_fallthru
        _
    $region12: #{_lambda_.1} parent=5 // pred_fallthru
      _
    %p124 = scmp.lt.s32.totalorder %s9, 2
    // Predicated region
    $region21: #{_lambda_.1} parent=5 // pred_check
      %p125 = pneg %p124
    $region22: #{_lambda_.1} parent=5 // pred_check_branch
      %127 = sbr.rel (%p125) target = $region24
    $region23: #{_lambda_.1} parent=5 // pred_region
      // Predicated region
      $region25: #{_lambda_.1} parent=23 // pred_check
        %p128 = pneg %p29
      $region26: #{_lambda_.1} parent=23 // pred_check_branch
        %130 = sbr.rel (%p128) target = $region28
      $region27: #{_lambda_.1} parent=23 // pred_region
        %p131 = scmp.lt.s32.totalorder %s9, 1
        %s132 = scalar_select %p131, %s9, 1
        %s133 = smul.addr %s132, 5
        %s134 = smul.addr %s133, 8
        %s135 = scalar_lea.vmem %s0, %s134
      $region28: #{_lambda_.1} parent=23 // pred_fallthru
        _
    $region24: #{_lambda_.1} parent=5 // pred_fallthru
      _
    %p136 = scmp.le.s32.totalorder 1, %s9
    %p137 = scmp.lt.s32.totalorder %s9, 3
    %p138 = pnand %p136, %p137
    %p139 = pneg %p138
    // Predicated region
    $region29: #{_lambda_.1} parent=5 // pred_check
      _
    $region30: #{_lambda_.1} parent=5 // pred_check_branch
      %141 = sbr.rel (%p138) target = $region32
    $region31: #{_lambda_.1} parent=5 // pred_region
      %s142 = ssub.s32 %s9, 1
      %p143 = scmp.lt.s32.totalorder %s14, 1
      %s144 = scalar_select %p143, %s14, 1
      %s145 = smul.addr %s144, 5
      %s146 = smul.addr %s145, 8
      %s147 = scalar_lea.vmem %s0, %s146
      %p148 = pneg %p35
      %p149 = pneg %p32
      %p150 = pneg %p56
      %p151 = pneg %p53
      %p152 = pneg %p77
      %p153 = pneg %p74
      %p154 = pneg %p103
      %p155 = pneg %p100
      %p156 = scmp.lt.s32.totalorder %s14, 1
      %s157 = scalar_select %p156, %s14, 1
      %s158 = smul.addr %s157, 4
      %s159 = smul.addr %s158, 8
      %s160 = scalar_lea.vmem %s3, %s159
      %p161 = scmp.lt.s32.totalorder %s14, 1
      %s162 = scalar_select %p161, %s14, 1
      %s163 = smul.addr %s162, 5
      %s164 = smul.addr %s163, 8
      %s165 = scalar_lea.vmem %s0, %s164
      %p166 = scmp.lt.s32.totalorder %s14, 1
      %s167 = scalar_select %p166, %s14, 1
      %s168 = smul.addr %s167, 4
      %s169 = smul.addr %s168, 8
      %s170 = scalar_lea.vmem %s3, %s169
      %v171 = vld [vmem:[%s165] sm:$0xff]
      %v172 = vld [vmem:[%s165 + $0x8] sm:$0xff]
      %v173 = vld [vmem:[%s165 + $0x10] sm:$0xff]
      %v174 = vld [vmem:[%s165 + $0x18] sm:$0xff]
      %v175 = vld [vmem:[%s165 + $0x20] sm:$0xff]
      %v176 = vld [vmem:[%s2] sm:$0xff]
      %178 = vset.pattern.permute.xlu0 0
      %179 = vperm.xlu0 %178, %v176
      %v180 = vpop.permute.xlu0 %179
      %v182 = vld [vmem:[%s1] sm:$0xff]
      %vm183 = vcmask 64512
      %v185 = vsel %vm183, %v182, 0
      %187 = vmatprep.subr.mxu0 0.0
      %188 = vmatpush1.msra.mxu0 0.0
      %189 = vmatprep.subr.mxu0 0.0
      %190 = vmatpush1.msra.mxu0 0.0
      %191 = vmatprep.subr.mxu0 0.0
      %192 = vmatpush1.msra.mxu0 0.0
      %193 = vmatprep.subr.mxu0 0.0
      %194 = vmatpush1.msra.mxu0 0.0
      %195 = vmatprep.subr.mxu0 0.0
      %196 = vmatpush1.msra.mxu0 0.0
      %197 = vmatprep.subr.mxu0 0.0
      %198 = vmatpush1.msra.mxu0 0.0
      %199 = vmatprep.subr.mxu0 0.0
      %200 = vmatpush1.msra.mxu0 0.0
      %201 = vmatprep.subr.mxu0 0.0
      %202 = vmatpush1.msra.mxu0 0.0
      %203 = vmatprep.subr.mxu0 0.0
      %204 = vmatpush1.msra.mxu0 0.0
      %205 = vmatprep.subr.mxu0 0.0
      %206 = vmatpush1.msra.mxu0 0.0
      %207 = vmatprep.subr.mxu0 0.0
      %208 = vmatpush1.msra.mxu0 0.0
      %209 = vmatprep.subr.mxu0 0.0
      %210 = vmatpush1.msra.mxu0 0.0
      %211 = vmatprep.subr.mxu0 0.0
      %212 = vmatpush1.msra.mxu0 0.0
      %213 = vmatprep.subr.mxu0 0.0
      %214 = vmatpush1.msra.mxu0 0.0
      %215 = vmatprep.subr.mxu0 0.0
      %216 = vmatpush1.msra.mxu0 0.0
      %217 = vmatprep.subr.mxu0 %v172
      %218 = vmatpush1.msra.mxu0 %v171
      %219 = vmatprep.subr.mxu0 0.0
      %220 = vmatpush2.msra.mxu0 0.0
      %221 = vmatprep.subr.mxu0 0.0
      %222 = vmatpush2.msra.mxu0 0.0
      %223 = vmatprep.subr.mxu0 0.0
      %224 = vmatpush2.msra.mxu0 0.0
      %225 = vmatprep.subr.mxu0 0.0
      %226 = vmatpush2.msra.mxu0 0.0
      %227 = vmatprep.subr.mxu0 0.0
      %228 = vmatpush2.msra.mxu0 0.0
      %229 = vmatprep.subr.mxu0 0.0
      %230 = vmatpush2.msra.mxu0 0.0
      %231 = vmatprep.subr.mxu0 0.0
      %232 = vmatpush2.msra.mxu0 0.0
      %233 = vmatprep.subr.mxu0 0.0
      %234 = vmatpush2.msra.mxu0 0.0
      %235 = vmatprep.subr.mxu0 0.0
      %236 = vmatpush2.msra.mxu0 0.0
      %237 = vmatprep.subr.mxu0 0.0
      %238 = vmatpush2.msra.mxu0 0.0
      %239 = vmatprep.subr.mxu0 0.0
      %240 = vmatpush2.msra.mxu0 0.0
      %241 = vmatprep.subr.mxu0 0.0
      %242 = vmatpush2.msra.mxu0 0.0
      %243 = vmatprep.subr.mxu0 0.0
      %244 = vmatpush2.msra.mxu0 0.0
      %245 = vmatprep.subr.mxu0 0.0
      %246 = vmatpush2.msra.mxu0 0.0
      %247 = vmatprep.subr.mxu0 0.0
      %248 = vmatpush2.msra.mxu0 0.0
      %249 = vmatprep.subr.mxu0 0.0
      %250 = vmatpush2.msra.mxu0 0.0
      %251 = vmatprep.mubr.f32.mxu0 0.0
      %252 = vmatmul.mubr.f32.gmra.mxu0 %v185
      %v253 = vpop.f32.mrf.mxu0
      %v254 = vadd.f32 0.0, %v253
      %v255 = vpop.f32.mrf.mxu0
      %v256 = vadd.f32 0.0, %v255
      %257 = vdwg.mxu0
      %258 = vmatprep.subr.mxu0 0.0
      %259 = vmatpush1.msra.mxu0 0.0
      %260 = vmatprep.subr.mxu0 0.0
      %261 = vmatpush1.msra.mxu0 0.0
      %262 = vmatprep.subr.mxu0 0.0
      %263 = vmatpush1.msra.mxu0 0.0
      %264 = vmatprep.subr.mxu0 0.0
      %265 = vmatpush1.msra.mxu0 0.0
      %266 = vmatprep.subr.mxu0 0.0
      %267 = vmatpush1.msra.mxu0 0.0
      %268 = vmatprep.subr.mxu0 0.0
      %269 = vmatpush1.msra.mxu0 0.0
      %270 = vmatprep.subr.mxu0 0.0
      %271 = vmatpush1.msra.mxu0 0.0
      %272 = vmatprep.subr.mxu0 0.0
      %273 = vmatpush1.msra.mxu0 0.0
      %274 = vmatprep.subr.mxu0 0.0
      %275 = vmatpush1.msra.mxu0 0.0
      %276 = vmatprep.subr.mxu0 0.0
      %277 = vmatpush1.msra.mxu0 0.0
      %278 = vmatprep.subr.mxu0 0.0
      %279 = vmatpush1.msra.mxu0 0.0
      %280 = vmatprep.subr.mxu0 0.0
      %281 = vmatpush1.msra.mxu0 0.0
      %282 = vmatprep.subr.mxu0 0.0
      %283 = vmatpush1.msra.mxu0 0.0
      %284 = vmatprep.subr.mxu0 0.0
      %285 = vmatpush1.msra.mxu0 0.0
      %286 = vmatprep.subr.mxu0 0.0
      %287 = vmatpush1.msra.mxu0 0.0
      %288 = vmatprep.subr.mxu0 %v174
      %289 = vmatpush1.msra.mxu0 %v173
      %290 = vmatprep.subr.mxu0 0.0
      %291 = vmatpush2.msra.mxu0 0.0
      %292 = vmatprep.subr.mxu0 0.0
      %293 = vmatpush2.msra.mxu0 0.0
      %294 = vmatprep.subr.mxu0 0.0
      %295 = vmatpush2.msra.mxu0 0.0
      %296 = vmatprep.subr.mxu0 0.0
      %297 = vmatpush2.msra.mxu0 0.0
      %298 = vmatprep.subr.mxu0 0.0
      %299 = vmatpush2.msra.mxu0 0.0
      %300 = vmatprep.subr.mxu0 0.0
      %301 = vmatpush2.msra.mxu0 0.0
      %302 = vmatprep.subr.mxu0 0.0
      %303 = vmatpush2.msra.mxu0 0.0
      %304 = vmatprep.subr.mxu0 0.0
      %305 = vmatpush2.msra.mxu0 0.0
      %306 = vmatprep.subr.mxu0 0.0
      %307 = vmatpush2.msra.mxu0 0.0
      %308 = vmatprep.subr.mxu0 0.0
      %309 = vmatpush2.msra.mxu0 0.0
      %310 = vmatprep.subr.mxu0 0.0
      %311 = vmatpush2.msra.mxu0 0.0
      %312 = vmatprep.subr.mxu0 0.0
      %313 = vmatpush2.msra.mxu0 0.0
      %314 = vmatprep.subr.mxu0 0.0
      %315 = vmatpush2.msra.mxu0 0.0
      %316 = vmatprep.subr.mxu0 0.0
      %317 = vmatpush2.msra.mxu0 0.0
      %318 = vmatprep.subr.mxu0 0.0
      %319 = vmatpush2.msra.mxu0 0.0
      %320 = vmatprep.subr.mxu0 0.0
      %321 = vmatpush2.msra.mxu0 0.0
      %322 = vmatprep.mubr.f32.mxu0 0.0
      %323 = vmatmul.mubr.f32.gmra.mxu0 %v185
      %v324 = vpop.f32.mrf.mxu0
      %v325 = vadd.f32 0.0, %v324
      %v326 = vpop.f32.mrf.mxu0
      %v327 = vadd.f32 0.0, %v326
      %328 = vdwg.mxu0
      %v329 = vadd.f32 %v180, %v254
      %v330 = vadd.f32 %v180, %v256
      %v331 = vadd.f32 %v180, %v325
      %v332 = vadd.f32 %v180, %v327
      %s333 = scalar_lea.vmem %s1, 8
      %v334 = vld [vmem:[%s333] sm:$0xff]
      %340 = vrot.lane.b32.xlu0 %v171, 126
      %v341 = vpop.permute.xlu0 %340
      %342 = vrot.lane.b32.xlu0 %v172, 126
      %v343 = vpop.permute.xlu0 %342
      %344 = vrot.lane.b32.xlu0 %v173, 126
      %v345 = vpop.permute.xlu0 %344
      %346 = vrot.lane.b32.xlu0 %v174, 126
      %v347 = vpop.permute.xlu0 %346
      %348 = vrot.lane.b32.xlu0 %v175, 126
      %v349 = vpop.permute.xlu0 %348
      %vm350 = vcmask 1031168
      %v351 = vsel %vm350, %v341, %v343
      %v352 = vsel %vm350, %v343, %v345
      %v353 = vsel %vm350, %v345, %v347
      %v354 = vsel %vm350, %v347, %v349
      %v360 = vsel %vm183, %v334, 0
      %362 = vmatprep.subr.mxu0 0.0
      %363 = vmatpush1.msra.mxu0 0.0
      %364 = vmatprep.subr.mxu0 0.0
      %365 = vmatpush1.msra.mxu0 0.0
      %366 = vmatprep.subr.mxu0 0.0
      %367 = vmatpush1.msra.mxu0 0.0
      %368 = vmatprep.subr.mxu0 0.0
      %369 = vmatpush1.msra.mxu0 0.0
      %370 = vmatprep.subr.mxu0 0.0
      %371 = vmatpush1.msra.mxu0 0.0
      %372 = vmatprep.subr.mxu0 0.0
      %373 = vmatpush1.msra.mxu0 0.0
      %374 = vmatprep.subr.mxu0 0.0
      %375 = vmatpush1.msra.mxu0 0.0
      %376 = vmatprep.subr.mxu0 0.0
      %377 = vmatpush1.msra.mxu0 0.0
      %378 = vmatprep.subr.mxu0 0.0
      %379 = vmatpush1.msra.mxu0 0.0
      %380 = vmatprep.subr.mxu0 0.0
      %381 = vmatpush1.msra.mxu0 0.0
      %382 = vmatprep.subr.mxu0 0.0
      %383 = vmatpush1.msra.mxu0 0.0
      %384 = vmatprep.subr.mxu0 0.0
      %385 = vmatpush1.msra.mxu0 0.0
      %386 = vmatprep.subr.mxu0 0.0
      %387 = vmatpush1.msra.mxu0 0.0
      %388 = vmatprep.subr.mxu0 0.0
      %389 = vmatpush1.msra.mxu0 0.0
      %390 = vmatprep.subr.mxu0 0.0
      %391 = vmatpush1.msra.mxu0 0.0
      %392 = vmatprep.subr.mxu0 %v352
      %393 = vmatpush1.msra.mxu0 %v351
      %394 = vmatprep.subr.mxu0 0.0
      %395 = vmatpush2.msra.mxu0 0.0
      %396 = vmatprep.subr.mxu0 0.0
      %397 = vmatpush2.msra.mxu0 0.0
      %398 = vmatprep.subr.mxu0 0.0
      %399 = vmatpush2.msra.mxu0 0.0
      %400 = vmatprep.subr.mxu0 0.0
      %401 = vmatpush2.msra.mxu0 0.0
      %402 = vmatprep.subr.mxu0 0.0
      %403 = vmatpush2.msra.mxu0 0.0
      %404 = vmatprep.subr.mxu0 0.0
      %405 = vmatpush2.msra.mxu0 0.0
      %406 = vmatprep.subr.mxu0 0.0
      %407 = vmatpush2.msra.mxu0 0.0
      %408 = vmatprep.subr.mxu0 0.0
      %409 = vmatpush2.msra.mxu0 0.0
      %410 = vmatprep.subr.mxu0 0.0
      %411 = vmatpush2.msra.mxu0 0.0
      %412 = vmatprep.subr.mxu0 0.0
      %413 = vmatpush2.msra.mxu0 0.0
      %414 = vmatprep.subr.mxu0 0.0
      %415 = vmatpush2.msra.mxu0 0.0
      %416 = vmatprep.subr.mxu0 0.0
      %417 = vmatpush2.msra.mxu0 0.0
      %418 = vmatprep.subr.mxu0 0.0
      %419 = vmatpush2.msra.mxu0 0.0
      %420 = vmatprep.subr.mxu0 0.0
      %421 = vmatpush2.msra.mxu0 0.0
      %422 = vmatprep.subr.mxu0 0.0
      %423 = vmatpush2.msra.mxu0 0.0
      %424 = vmatprep.subr.mxu0 0.0
      %425 = vmatpush2.msra.mxu0 0.0
      %426 = vmatprep.mubr.f32.mxu0 0.0
      %427 = vmatmul.mubr.f32.gmra.mxu0 %v360
      %v428 = vpop.f32.mrf.mxu0
      %v429 = vadd.f32 0.0, %v428
      %v430 = vpop.f32.mrf.mxu0
      %v431 = vadd.f32 0.0, %v430
      %432 = vdwg.mxu0
      %433 = vmatprep.subr.mxu0 0.0
      %434 = vmatpush1.msra.mxu0 0.0
      %435 = vmatprep.subr.mxu0 0.0
      %436 = vmatpush1.msra.mxu0 0.0
      %437 = vmatprep.subr.mxu0 0.0
      %438 = vmatpush1.msra.mxu0 0.0
      %439 = vmatprep.subr.mxu0 0.0
      %440 = vmatpush1.msra.mxu0 0.0
      %441 = vmatprep.subr.mxu0 0.0
      %442 = vmatpush1.msra.mxu0 0.0
      %443 = vmatprep.subr.mxu0 0.0
      %444 = vmatpush1.msra.mxu0 0.0
      %445 = vmatprep.subr.mxu0 0.0
      %446 = vmatpush1.msra.mxu0 0.0
      %447 = vmatprep.subr.mxu0 0.0
      %448 = vmatpush1.msra.mxu0 0.0
      %449 = vmatprep.subr.mxu0 0.0
      %450 = vmatpush1.msra.mxu0 0.0
      %451 = vmatprep.subr.mxu0 0.0
      %452 = vmatpush1.msra.mxu0 0.0
      %453 = vmatprep.subr.mxu0 0.0
      %454 = vmatpush1.msra.mxu0 0.0
      %455 = vmatprep.subr.mxu0 0.0
      %456 = vmatpush1.msra.mxu0 0.0
      %457 = vmatprep.subr.mxu0 0.0
      %458 = vmatpush1.msra.mxu0 0.0
      %459 = vmatprep.subr.mxu0 0.0
      %460 = vmatpush1.msra.mxu0 0.0
      %461 = vmatprep.subr.mxu0 0.0
      %462 = vmatpush1.msra.mxu0 0.0
      %463 = vmatprep.subr.mxu0 %v354
      %464 = vmatpush1.msra.mxu0 %v353
      %465 = vmatprep.subr.mxu0 0.0
      %466 = vmatpush2.msra.mxu0 0.0
      %467 = vmatprep.subr.mxu0 0.0
      %468 = vmatpush2.msra.mxu0 0.0
      %469 = vmatprep.subr.mxu0 0.0
      %470 = vmatpush2.msra.mxu0 0.0
      %471 = vmatprep.subr.mxu0 0.0
      %472 = vmatpush2.msra.mxu0 0.0
      %473 = vmatprep.subr.mxu0 0.0
      %474 = vmatpush2.msra.mxu0 0.0
      %475 = vmatprep.subr.mxu0 0.0
      %476 = vmatpush2.msra.mxu0 0.0
      %477 = vmatprep.subr.mxu0 0.0
      %478 = vmatpush2.msra.mxu0 0.0
      %479 = vmatprep.subr.mxu0 0.0
      %480 = vmatpush2.msra.mxu0 0.0
      %481 = vmatprep.subr.mxu0 0.0
      %482 = vmatpush2.msra.mxu0 0.0
      %483 = vmatprep.subr.mxu0 0.0
      %484 = vmatpush2.msra.mxu0 0.0
      %485 = vmatprep.subr.mxu0 0.0
      %486 = vmatpush2.msra.mxu0 0.0
      %487 = vmatprep.subr.mxu0 0.0
      %488 = vmatpush2.msra.mxu0 0.0
      %489 = vmatprep.subr.mxu0 0.0
      %490 = vmatpush2.msra.mxu0 0.0
      %491 = vmatprep.subr.mxu0 0.0
      %492 = vmatpush2.msra.mxu0 0.0
      %493 = vmatprep.subr.mxu0 0.0
      %494 = vmatpush2.msra.mxu0 0.0
      %495 = vmatprep.subr.mxu0 0.0
      %496 = vmatpush2.msra.mxu0 0.0
      %497 = vmatprep.mubr.f32.mxu0 0.0
      %498 = vmatmul.mubr.f32.gmra.mxu0 %v360
      %v499 = vpop.f32.mrf.mxu0
      %v500 = vadd.f32 0.0, %v499
      %v501 = vpop.f32.mrf.mxu0
      %v502 = vadd.f32 0.0, %v501
      %503 = vdwg.mxu0
      %v504 = vadd.f32 %v329, %v429
      %v505 = vadd.f32 %v330, %v431
      %v506 = vadd.f32 %v331, %v500
      %v507 = vadd.f32 %v332, %v502
      %s508 = scalar_lea.vmem %s1, 16
      %v509 = vld [vmem:[%s508] sm:$0xff]
      %510 = vrot.lane.b32.xlu0 %v171, 124
      %v511 = vpop.permute.xlu0 %510
      %512 = vrot.lane.b32.xlu0 %v172, 124
      %v513 = vpop.permute.xlu0 %512
      %514 = vrot.lane.b32.xlu0 %v173, 124
      %v515 = vpop.permute.xlu0 %514
      %516 = vrot.lane.b32.xlu0 %v174, 124
      %v517 = vpop.permute.xlu0 %516
      %518 = vrot.lane.b32.xlu0 %v175, 124
      %v519 = vpop.permute.xlu0 %518
      %vm520 = vcmask 1014784
      %v521 = vsel %vm520, %v511, %v513
      %v522 = vsel %vm520, %v513, %v515
      %v523 = vsel %vm520, %v515, %v517
      %v524 = vsel %vm520, %v517, %v519
      %v530 = vsel %vm183, %v509, 0
      %532 = vmatprep.subr.mxu0 0.0
      %533 = vmatpush1.msra.mxu0 0.0
      %534 = vmatprep.subr.mxu0 0.0
      %535 = vmatpush1.msra.mxu0 0.0
      %536 = vmatprep.subr.mxu0 0.0
      %537 = vmatpush1.msra.mxu0 0.0
      %538 = vmatprep.subr.mxu0 0.0
      %539 = vmatpush1.msra.mxu0 0.0
      %540 = vmatprep.subr.mxu0 0.0
      %541 = vmatpush1.msra.mxu0 0.0
      %542 = vmatprep.subr.mxu0 0.0
      %543 = vmatpush1.msra.mxu0 0.0
      %544 = vmatprep.subr.mxu0 0.0
      %545 = vmatpush1.msra.mxu0 0.0
      %546 = vmatprep.subr.mxu0 0.0
      %547 = vmatpush1.msra.mxu0 0.0
      %548 = vmatprep.subr.mxu0 0.0
      %549 = vmatpush1.msra.mxu0 0.0
      %550 = vmatprep.subr.mxu0 0.0
      %551 = vmatpush1.msra.mxu0 0.0
      %552 = vmatprep.subr.mxu0 0.0
      %553 = vmatpush1.msra.mxu0 0.0
      %554 = vmatprep.subr.mxu0 0.0
      %555 = vmatpush1.msra.mxu0 0.0
      %556 = vmatprep.subr.mxu0 0.0
      %557 = vmatpush1.msra.mxu0 0.0
      %558 = vmatprep.subr.mxu0 0.0
      %559 = vmatpush1.msra.mxu0 0.0
      %560 = vmatprep.subr.mxu0 0.0
      %561 = vmatpush1.msra.mxu0 0.0
      %562 = vmatprep.subr.mxu0 %v522
      %563 = vmatpush1.msra.mxu0 %v521
      %564 = vmatprep.subr.mxu0 0.0
      %565 = vmatpush2.msra.mxu0 0.0
      %566 = vmatprep.subr.mxu0 0.0
      %567 = vmatpush2.msra.mxu0 0.0
      %568 = vmatprep.subr.mxu0 0.0
      %569 = vmatpush2.msra.mxu0 0.0
      %570 = vmatprep.subr.mxu0 0.0
      %571 = vmatpush2.msra.mxu0 0.0
      %572 = vmatprep.subr.mxu0 0.0
      %573 = vmatpush2.msra.mxu0 0.0
      %574 = vmatprep.subr.mxu0 0.0
      %575 = vmatpush2.msra.mxu0 0.0
      %576 = vmatprep.subr.mxu0 0.0
      %577 = vmatpush2.msra.mxu0 0.0
      %578 = vmatprep.subr.mxu0 0.0
      %579 = vmatpush2.msra.mxu0 0.0
      %580 = vmatprep.subr.mxu0 0.0
      %581 = vmatpush2.msra.mxu0 0.0
      %582 = vmatprep.subr.mxu0 0.0
      %583 = vmatpush2.msra.mxu0 0.0
      %584 = vmatprep.subr.mxu0 0.0
      %585 = vmatpush2.msra.mxu0 0.0
      %586 = vmatprep.subr.mxu0 0.0
      %587 = vmatpush2.msra.mxu0 0.0
      %588 = vmatprep.subr.mxu0 0.0
      %589 = vmatpush2.msra.mxu0 0.0
      %590 = vmatprep.subr.mxu0 0.0
      %591 = vmatpush2.msra.mxu0 0.0
      %592 = vmatprep.subr.mxu0 0.0
      %593 = vmatpush2.msra.mxu0 0.0
      %594 = vmatprep.subr.mxu0 0.0
      %595 = vmatpush2.msra.mxu0 0.0
      %596 = vmatprep.mubr.f32.mxu0 0.0
      %597 = vmatmul.mubr.f32.gmra.mxu0 %v530
      %v598 = vpop.f32.mrf.mxu0
      %v599 = vadd.f32 0.0, %v598
      %v600 = vpop.f32.mrf.mxu0
      %v601 = vadd.f32 0.0, %v600
      %602 = vdwg.mxu0
      %603 = vmatprep.subr.mxu0 0.0
      %604 = vmatpush1.msra.mxu0 0.0
      %605 = vmatprep.subr.mxu0 0.0
      %606 = vmatpush1.msra.mxu0 0.0
      %607 = vmatprep.subr.mxu0 0.0
      %608 = vmatpush1.msra.mxu0 0.0
      %609 = vmatprep.subr.mxu0 0.0
      %610 = vmatpush1.msra.mxu0 0.0
      %611 = vmatprep.subr.mxu0 0.0
      %612 = vmatpush1.msra.mxu0 0.0
      %613 = vmatprep.subr.mxu0 0.0
      %614 = vmatpush1.msra.mxu0 0.0
      %615 = vmatprep.subr.mxu0 0.0
      %616 = vmatpush1.msra.mxu0 0.0
      %617 = vmatprep.subr.mxu0 0.0
      %618 = vmatpush1.msra.mxu0 0.0
      %619 = vmatprep.subr.mxu0 0.0
      %620 = vmatpush1.msra.mxu0 0.0
      %621 = vmatprep.subr.mxu0 0.0
      %622 = vmatpush1.msra.mxu0 0.0
      %623 = vmatprep.subr.mxu0 0.0
      %624 = vmatpush1.msra.mxu0 0.0
      %625 = vmatprep.subr.mxu0 0.0
      %626 = vmatpush1.msra.mxu0 0.0
      %627 = vmatprep.subr.mxu0 0.0
      %628 = vmatpush1.msra.mxu0 0.0
      %629 = vmatprep.subr.mxu0 0.0
      %630 = vmatpush1.msra.mxu0 0.0
      %631 = vmatprep.subr.mxu0 0.0
      %632 = vmatpush1.msra.mxu0 0.0
      %633 = vmatprep.subr.mxu0 %v524
      %634 = vmatpush1.msra.mxu0 %v523
      %635 = vmatprep.subr.mxu0 0.0
      %636 = vmatpush2.msra.mxu0 0.0
      %637 = vmatprep.subr.mxu0 0.0
      %638 = vmatpush2.msra.mxu0 0.0
      %639 = vmatprep.subr.mxu0 0.0
      %640 = vmatpush2.msra.mxu0 0.0
      %641 = vmatprep.subr.mxu0 0.0
      %642 = vmatpush2.msra.mxu0 0.0
      %643 = vmatprep.subr.mxu0 0.0
      %644 = vmatpush2.msra.mxu0 0.0
      %645 = vmatprep.subr.mxu0 0.0
      %646 = vmatpush2.msra.mxu0 0.0
      %647 = vmatprep.subr.mxu0 0.0
      %648 = vmatpush2.msra.mxu0 0.0
      %649 = vmatprep.subr.mxu0 0.0
      %650 = vmatpush2.msra.mxu0 0.0
      %651 = vmatprep.subr.mxu0 0.0
      %652 = vmatpush2.msra.mxu0 0.0
      %653 = vmatprep.subr.mxu0 0.0
      %654 = vmatpush2.msra.mxu0 0.0
      %655 = vmatprep.subr.mxu0 0.0
      %656 = vmatpush2.msra.mxu0 0.0
      %657 = vmatprep.subr.mxu0 0.0
      %658 = vmatpush2.msra.mxu0 0.0
      %659 = vmatprep.subr.mxu0 0.0
      %660 = vmatpush2.msra.mxu0 0.0
      %661 = vmatprep.subr.mxu0 0.0
      %662 = vmatpush2.msra.mxu0 0.0
      %663 = vmatprep.subr.mxu0 0.0
      %664 = vmatpush2.msra.mxu0 0.0
      %665 = vmatprep.subr.mxu0 0.0
      %666 = vmatpush2.msra.mxu0 0.0
      %667 = vmatprep.mubr.f32.mxu0 0.0
      %668 = vmatmul.mubr.f32.gmra.mxu0 %v530
      %v669 = vpop.f32.mrf.mxu0
      %v670 = vadd.f32 0.0, %v669
      %v671 = vpop.f32.mrf.mxu0
      %v672 = vadd.f32 0.0, %v671
      %673 = vdwg.mxu0
      %v674 = vadd.f32 %v504, %v599
      %v675 = vadd.f32 %v505, %v601
      %v676 = vadd.f32 %v506, %v670
      %v677 = vadd.f32 %v507, %v672
      %s678 = scalar_lea.vmem %s1, 24
      %v679 = vld [vmem:[%s678] sm:$0xff]
      %680 = vrot.lane.b32.xlu0 %v171, 107
      %v681 = vpop.permute.xlu0 %680
      %682 = vrot.lane.b32.xlu0 %v172, 107
      %v683 = vpop.permute.xlu0 %682
      %684 = vrot.lane.b32.xlu0 %v173, 107
      %v685 = vpop.permute.xlu0 %684
      %686 = vrot.lane.b32.xlu0 %v174, 107
      %v687 = vpop.permute.xlu0 %686
      %688 = vrot.lane.b32.xlu0 %v175, 107
      %v689 = vpop.permute.xlu0 %688
      %vm690 = vcmask 875520
      %v691 = vsel %vm690, %v681, %v683
      %v692 = vsel %vm690, %v683, %v685
      %v693 = vsel %vm690, %v685, %v687
      %v694 = vsel %vm690, %v687, %v689
      %v700 = vsel %vm183, %v679, 0
      %702 = vmatprep.subr.mxu0 0.0
      %703 = vmatpush1.msra.mxu0 0.0
      %704 = vmatprep.subr.mxu0 0.0
      %705 = vmatpush1.msra.mxu0 0.0
      %706 = vmatprep.subr.mxu0 0.0
      %707 = vmatpush1.msra.mxu0 0.0
      %708 = vmatprep.subr.mxu0 0.0
      %709 = vmatpush1.msra.mxu0 0.0
      %710 = vmatprep.subr.mxu0 0.0
      %711 = vmatpush1.msra.mxu0 0.0
      %712 = vmatprep.subr.mxu0 0.0
      %713 = vmatpush1.msra.mxu0 0.0
      %714 = vmatprep.subr.mxu0 0.0
      %715 = vmatpush1.msra.mxu0 0.0
      %716 = vmatprep.subr.mxu0 0.0
      %717 = vmatpush1.msra.mxu0 0.0
      %718 = vmatprep.subr.mxu0 0.0
      %719 = vmatpush1.msra.mxu0 0.0
      %720 = vmatprep.subr.mxu0 0.0
      %721 = vmatpush1.msra.mxu0 0.0
      %722 = vmatprep.subr.mxu0 0.0
      %723 = vmatpush1.msra.mxu0 0.0
      %724 = vmatprep.subr.mxu0 0.0
      %725 = vmatpush1.msra.mxu0 0.0
      %726 = vmatprep.subr.mxu0 0.0
      %727 = vmatpush1.msra.mxu0 0.0
      %728 = vmatprep.subr.mxu0 0.0
      %729 = vmatpush1.msra.mxu0 0.0
      %730 = vmatprep.subr.mxu0 0.0
      %731 = vmatpush1.msra.mxu0 0.0
      %732 = vmatprep.subr.mxu0 %v692
      %733 = vmatpush1.msra.mxu0 %v691
      %734 = vmatprep.subr.mxu0 0.0
      %735 = vmatpush2.msra.mxu0 0.0
      %736 = vmatprep.subr.mxu0 0.0
      %737 = vmatpush2.msra.mxu0 0.0
      %738 = vmatprep.subr.mxu0 0.0
      %739 = vmatpush2.msra.mxu0 0.0
      %740 = vmatprep.subr.mxu0 0.0
      %741 = vmatpush2.msra.mxu0 0.0
      %742 = vmatprep.subr.mxu0 0.0
      %743 = vmatpush2.msra.mxu0 0.0
      %744 = vmatprep.subr.mxu0 0.0
      %745 = vmatpush2.msra.mxu0 0.0
      %746 = vmatprep.subr.mxu0 0.0
      %747 = vmatpush2.msra.mxu0 0.0
      %748 = vmatprep.subr.mxu0 0.0
      %749 = vmatpush2.msra.mxu0 0.0
      %750 = vmatprep.subr.mxu0 0.0
      %751 = vmatpush2.msra.mxu0 0.0
      %752 = vmatprep.subr.mxu0 0.0
      %753 = vmatpush2.msra.mxu0 0.0
      %754 = vmatprep.subr.mxu0 0.0
      %755 = vmatpush2.msra.mxu0 0.0
      %756 = vmatprep.subr.mxu0 0.0
      %757 = vmatpush2.msra.mxu0 0.0
      %758 = vmatprep.subr.mxu0 0.0
      %759 = vmatpush2.msra.mxu0 0.0
      %760 = vmatprep.subr.mxu0 0.0
      %761 = vmatpush2.msra.mxu0 0.0
      %762 = vmatprep.subr.mxu0 0.0
      %763 = vmatpush2.msra.mxu0 0.0
      %764 = vmatprep.subr.mxu0 0.0
      %765 = vmatpush2.msra.mxu0 0.0
      %766 = vmatprep.mubr.f32.mxu0 0.0
      %767 = vmatmul.mubr.f32.gmra.mxu0 %v700
      %v768 = vpop.f32.mrf.mxu0
      %v769 = vadd.f32 0.0, %v768
      %v770 = vpop.f32.mrf.mxu0
      %v771 = vadd.f32 0.0, %v770
      %772 = vdwg.mxu0
      %773 = vmatprep.subr.mxu0 0.0
      %774 = vmatpush1.msra.mxu0 0.0
      %775 = vmatprep.subr.mxu0 0.0
      %776 = vmatpush1.msra.mxu0 0.0
      %777 = vmatprep.subr.mxu0 0.0
      %778 = vmatpush1.msra.mxu0 0.0
      %779 = vmatprep.subr.mxu0 0.0
      %780 = vmatpush1.msra.mxu0 0.0
      %781 = vmatprep.subr.mxu0 0.0
      %782 = vmatpush1.msra.mxu0 0.0
      %783 = vmatprep.subr.mxu0 0.0
      %784 = vmatpush1.msra.mxu0 0.0
      %785 = vmatprep.subr.mxu0 0.0
      %786 = vmatpush1.msra.mxu0 0.0
      %787 = vmatprep.subr.mxu0 0.0
      %788 = vmatpush1.msra.mxu0 0.0
      %789 = vmatprep.subr.mxu0 0.0
      %790 = vmatpush1.msra.mxu0 0.0
      %791 = vmatprep.subr.mxu0 0.0
      %792 = vmatpush1.msra.mxu0 0.0
      %793 = vmatprep.subr.mxu0 0.0
      %794 = vmatpush1.msra.mxu0 0.0
      %795 = vmatprep.subr.mxu0 0.0
      %796 = vmatpush1.msra.mxu0 0.0
      %797 = vmatprep.subr.mxu0 0.0
      %798 = vmatpush1.msra.mxu0 0.0
      %799 = vmatprep.subr.mxu0 0.0
      %800 = vmatpush1.msra.mxu0 0.0
      %801 = vmatprep.subr.mxu0 0.0
      %802 = vmatpush1.msra.mxu0 0.0
      %803 = vmatprep.subr.mxu0 %v694
      %804 = vmatpush1.msra.mxu0 %v693
      %805 = vmatprep.subr.mxu0 0.0
      %806 = vmatpush2.msra.mxu0 0.0
      %807 = vmatprep.subr.mxu0 0.0
      %808 = vmatpush2.msra.mxu0 0.0
      %809 = vmatprep.subr.mxu0 0.0
      %810 = vmatpush2.msra.mxu0 0.0
      %811 = vmatprep.subr.mxu0 0.0
      %812 = vmatpush2.msra.mxu0 0.0
      %813 = vmatprep.subr.mxu0 0.0
      %814 = vmatpush2.msra.mxu0 0.0
      %815 = vmatprep.subr.mxu0 0.0
      %816 = vmatpush2.msra.mxu0 0.0
      %817 = vmatprep.subr.mxu0 0.0
      %818 = vmatpush2.msra.mxu0 0.0
      %819 = vmatprep.subr.mxu0 0.0
      %820 = vmatpush2.msra.mxu0 0.0
      %821 = vmatprep.subr.mxu0 0.0
      %822 = vmatpush2.msra.mxu0 0.0
      %823 = vmatprep.subr.mxu0 0.0
      %824 = vmatpush2.msra.mxu0 0.0
      %825 = vmatprep.subr.mxu0 0.0
      %826 = vmatpush2.msra.mxu0 0.0
      %827 = vmatprep.subr.mxu0 0.0
      %828 = vmatpush2.msra.mxu0 0.0
      %829 = vmatprep.subr.mxu0 0.0
      %830 = vmatpush2.msra.mxu0 0.0
      %831 = vmatprep.subr.mxu0 0.0
      %832 = vmatpush2.msra.mxu0 0.0
      %833 = vmatprep.subr.mxu0 0.0
      %834 = vmatpush2.msra.mxu0 0.0
      %835 = vmatprep.subr.mxu0 0.0
      %836 = vmatpush2.msra.mxu0 0.0
      %837 = vmatprep.mubr.f32.mxu0 0.0
      %838 = vmatmul.mubr.f32.gmra.mxu0 %v700
      %v839 = vpop.f32.mrf.mxu0
      %v840 = vadd.f32 0.0, %v839
      %v841 = vpop.f32.mrf.mxu0
      %v842 = vadd.f32 0.0, %v841
      %843 = vdwg.mxu0
      %v844 = vadd.f32 %v674, %v769
      %v845 = vadd.f32 %v675, %v771
      %v846 = vadd.f32 %v676, %v840
      %v847 = vadd.f32 %v677, %v842
      %s848 = scalar_lea.vmem %s1, 32
      %v849 = vld [vmem:[%s848] sm:$0xff]
      %850 = vrot.lane.b32.xlu0 %v171, 106
      %v851 = vpop.permute.xlu0 %850
      %852 = vrot.lane.b32.xlu0 %v172, 106
      %v853 = vpop.permute.xlu0 %852
      %854 = vrot.lane.b32.xlu0 %v173, 106
      %v855 = vpop.permute.xlu0 %854
      %856 = vrot.lane.b32.xlu0 %v174, 106
      %v857 = vpop.permute.xlu0 %856
      %858 = vrot.lane.b32.xlu0 %v175, 106
      %v859 = vpop.permute.xlu0 %858
      %vm860 = vcmask 867328
      %v861 = vsel %vm860, %v851, %v853
      %v862 = vsel %vm860, %v853, %v855
      %v863 = vsel %vm860, %v855, %v857
      %v864 = vsel %vm860, %v857, %v859
      %v870 = vsel %vm183, %v849, 0
      %872 = vmatprep.subr.mxu0 0.0
      %873 = vmatpush1.msra.mxu0 0.0
      %874 = vmatprep.subr.mxu0 0.0
      %875 = vmatpush1.msra.mxu0 0.0
      %876 = vmatprep.subr.mxu0 0.0
      %877 = vmatpush1.msra.mxu0 0.0
      %878 = vmatprep.subr.mxu0 0.0
      %879 = vmatpush1.msra.mxu0 0.0
      %880 = vmatprep.subr.mxu0 0.0
      %881 = vmatpush1.msra.mxu0 0.0
      %882 = vmatprep.subr.mxu0 0.0
      %883 = vmatpush1.msra.mxu0 0.0
      %884 = vmatprep.subr.mxu0 0.0
      %885 = vmatpush1.msra.mxu0 0.0
      %886 = vmatprep.subr.mxu0 0.0
      %887 = vmatpush1.msra.mxu0 0.0
      %888 = vmatprep.subr.mxu0 0.0
      %889 = vmatpush1.msra.mxu0 0.0
      %890 = vmatprep.subr.mxu0 0.0
      %891 = vmatpush1.msra.mxu0 0.0
      %892 = vmatprep.subr.mxu0 0.0
      %893 = vmatpush1.msra.mxu0 0.0
      %894 = vmatprep.subr.mxu0 0.0
      %895 = vmatpush1.msra.mxu0 0.0
      %896 = vmatprep.subr.mxu0 0.0
      %897 = vmatpush1.msra.mxu0 0.0
      %898 = vmatprep.subr.mxu0 0.0
      %899 = vmatpush1.msra.mxu0 0.0
      %900 = vmatprep.subr.mxu0 0.0
      %901 = vmatpush1.msra.mxu0 0.0
      %902 = vmatprep.subr.mxu0 %v862
      %903 = vmatpush1.msra.mxu0 %v861
      %904 = vmatprep.subr.mxu0 0.0
      %905 = vmatpush2.msra.mxu0 0.0
      %906 = vmatprep.subr.mxu0 0.0
      %907 = vmatpush2.msra.mxu0 0.0
      %908 = vmatprep.subr.mxu0 0.0
      %909 = vmatpush2.msra.mxu0 0.0
      %910 = vmatprep.subr.mxu0 0.0
      %911 = vmatpush2.msra.mxu0 0.0
      %912 = vmatprep.subr.mxu0 0.0
      %913 = vmatpush2.msra.mxu0 0.0
      %914 = vmatprep.subr.mxu0 0.0
      %915 = vmatpush2.msra.mxu0 0.0
      %916 = vmatprep.subr.mxu0 0.0
      %917 = vmatpush2.msra.mxu0 0.0
      %918 = vmatprep.subr.mxu0 0.0
      %919 = vmatpush2.msra.mxu0 0.0
      %920 = vmatprep.subr.mxu0 0.0
      %921 = vmatpush2.msra.mxu0 0.0
      %922 = vmatprep.subr.mxu0 0.0
      %923 = vmatpush2.msra.mxu0 0.0
      %924 = vmatprep.subr.mxu0 0.0
      %925 = vmatpush2.msra.mxu0 0.0
      %926 = vmatprep.subr.mxu0 0.0
      %927 = vmatpush2.msra.mxu0 0.0
      %928 = vmatprep.subr.mxu0 0.0
      %929 = vmatpush2.msra.mxu0 0.0
      %930 = vmatprep.subr.mxu0 0.0
      %931 = vmatpush2.msra.mxu0 0.0
      %932 = vmatprep.subr.mxu0 0.0
      %933 = vmatpush2.msra.mxu0 0.0
      %934 = vmatprep.subr.mxu0 0.0
      %935 = vmatpush2.msra.mxu0 0.0
      %936 = vmatprep.mubr.f32.mxu0 0.0
      %937 = vmatmul.mubr.f32.gmra.mxu0 %v870
      %v938 = vpop.f32.mrf.mxu0
      %v939 = vadd.f32 0.0, %v938
      %v940 = vpop.f32.mrf.mxu0
      %v941 = vadd.f32 0.0, %v940
      %942 = vdwg.mxu0
      %943 = vmatprep.subr.mxu0 0.0
      %944 = vmatpush1.msra.mxu0 0.0
      %945 = vmatprep.subr.mxu0 0.0
      %946 = vmatpush1.msra.mxu0 0.0
      %947 = vmatprep.subr.mxu0 0.0
      %948 = vmatpush1.msra.mxu0 0.0
      %949 = vmatprep.subr.mxu0 0.0
      %950 = vmatpush1.msra.mxu0 0.0
      %951 = vmatprep.subr.mxu0 0.0
      %952 = vmatpush1.msra.mxu0 0.0
      %953 = vmatprep.subr.mxu0 0.0
      %954 = vmatpush1.msra.mxu0 0.0
      %955 = vmatprep.subr.mxu0 0.0
      %956 = vmatpush1.msra.mxu0 0.0
      %957 = vmatprep.subr.mxu0 0.0
      %958 = vmatpush1.msra.mxu0 0.0
      %959 = vmatprep.subr.mxu0 0.0
      %960 = vmatpush1.msra.mxu0 0.0
      %961 = vmatprep.subr.mxu0 0.0
      %962 = vmatpush1.msra.mxu0 0.0
      %963 = vmatprep.subr.mxu0 0.0
      %964 = vmatpush1.msra.mxu0 0.0
      %965 = vmatprep.subr.mxu0 0.0
      %966 = vmatpush1.msra.mxu0 0.0
      %967 = vmatprep.subr.mxu0 0.0
      %968 = vmatpush1.msra.mxu0 0.0
      %969 = vmatprep.subr.mxu0 0.0
      %970 = vmatpush1.msra.mxu0 0.0
      %971 = vmatprep.subr.mxu0 0.0
      %972 = vmatpush1.msra.mxu0 0.0
      %973 = vmatprep.subr.mxu0 %v864
      %974 = vmatpush1.msra.mxu0 %v863
      %975 = vmatprep.subr.mxu0 0.0
      %976 = vmatpush2.msra.mxu0 0.0
      %977 = vmatprep.subr.mxu0 0.0
      %978 = vmatpush2.msra.mxu0 0.0
      %979 = vmatprep.subr.mxu0 0.0
      %980 = vmatpush2.msra.mxu0 0.0
      %981 = vmatprep.subr.mxu0 0.0
      %982 = vmatpush2.msra.mxu0 0.0
      %983 = vmatprep.subr.mxu0 0.0
      %984 = vmatpush2.msra.mxu0 0.0
      %985 = vmatprep.subr.mxu0 0.0
      %986 = vmatpush2.msra.mxu0 0.0
      %987 = vmatprep.subr.mxu0 0.0
      %988 = vmatpush2.msra.mxu0 0.0
      %989 = vmatprep.subr.mxu0 0.0
      %990 = vmatpush2.msra.mxu0 0.0
      %991 = vmatprep.subr.mxu0 0.0
      %992 = vmatpush2.msra.mxu0 0.0
      %993 = vmatprep.subr.mxu0 0.0
      %994 = vmatpush2.msra.mxu0 0.0
      %995 = vmatprep.subr.mxu0 0.0
      %996 = vmatpush2.msra.mxu0 0.0
      %997 = vmatprep.subr.mxu0 0.0
      %998 = vmatpush2.msra.mxu0 0.0
      %999 = vmatprep.subr.mxu0 0.0
      %1000 = vmatpush2.msra.mxu0 0.0
      %1001 = vmatprep.subr.mxu0 0.0
      %1002 = vmatpush2.msra.mxu0 0.0
      %1003 = vmatprep.subr.mxu0 0.0
      %1004 = vmatpush2.msra.mxu0 0.0
      %1005 = vmatprep.subr.mxu0 0.0
      %1006 = vmatpush2.msra.mxu0 0.0
      %1007 = vmatprep.mubr.f32.mxu0 0.0
      %1008 = vmatmul.mubr.f32.gmra.mxu0 %v870
      %v1009 = vpop.f32.mrf.mxu0
      %v1010 = vadd.f32 0.0, %v1009
      %v1011 = vpop.f32.mrf.mxu0
      %v1012 = vadd.f32 0.0, %v1011
      %1013 = vdwg.mxu0
      %v1014 = vadd.f32 %v844, %v939
      %v1015 = vadd.f32 %v845, %v941
      %v1016 = vadd.f32 %v846, %v1010
      %v1017 = vadd.f32 %v847, %v1012
      %s1018 = scalar_lea.vmem %s1, 40
      %v1019 = vld [vmem:[%s1018] sm:$0xff]
      %1020 = vrot.lane.b32.xlu0 %v171, 105
      %v1021 = vpop.permute.xlu0 %1020
      %1022 = vrot.lane.b32.xlu0 %v172, 105
      %v1023 = vpop.permute.xlu0 %1022
      %1024 = vrot.lane.b32.xlu0 %v173, 105
      %v1025 = vpop.permute.xlu0 %1024
      %1026 = vrot.lane.b32.xlu0 %v174, 105
      %v1027 = vpop.permute.xlu0 %1026
      %1028 = vrot.lane.b32.xlu0 %v175, 105
      %v1029 = vpop.permute.xlu0 %1028
      %vm1030 = vcmask 859136
      %v1031 = vsel %vm1030, %v1021, %v1023
      %v1032 = vsel %vm1030, %v1023, %v1025
      %v1033 = vsel %vm1030, %v1025, %v1027
      %v1034 = vsel %vm1030, %v1027, %v1029
      %v1040 = vsel %vm183, %v1019, 0
      %1042 = vmatprep.subr.mxu0 0.0
      %1043 = vmatpush1.msra.mxu0 0.0
      %1044 = vmatprep.subr.mxu0 0.0
      %1045 = vmatpush1.msra.mxu0 0.0
      %1046 = vmatprep.subr.mxu0 0.0
      %1047 = vmatpush1.msra.mxu0 0.0
      %1048 = vmatprep.subr.mxu0 0.0
      %1049 = vmatpush1.msra.mxu0 0.0
      %1050 = vmatprep.subr.mxu0 0.0
      %1051 = vmatpush1.msra.mxu0 0.0
      %1052 = vmatprep.subr.mxu0 0.0
      %1053 = vmatpush1.msra.mxu0 0.0
      %1054 = vmatprep.subr.mxu0 0.0
      %1055 = vmatpush1.msra.mxu0 0.0
      %1056 = vmatprep.subr.mxu0 0.0
      %1057 = vmatpush1.msra.mxu0 0.0
      %1058 = vmatprep.subr.mxu0 0.0
      %1059 = vmatpush1.msra.mxu0 0.0
      %1060 = vmatprep.subr.mxu0 0.0
      %1061 = vmatpush1.msra.mxu0 0.0
      %1062 = vmatprep.subr.mxu0 0.0
      %1063 = vmatpush1.msra.mxu0 0.0
      %1064 = vmatprep.subr.mxu0 0.0
      %1065 = vmatpush1.msra.mxu0 0.0
      %1066 = vmatprep.subr.mxu0 0.0
      %1067 = vmatpush1.msra.mxu0 0.0
      %1068 = vmatprep.subr.mxu0 0.0
      %1069 = vmatpush1.msra.mxu0 0.0
      %1070 = vmatprep.subr.mxu0 0.0
      %1071 = vmatpush1.msra.mxu0 0.0
      %1072 = vmatprep.subr.mxu0 %v1032
      %1073 = vmatpush1.msra.mxu0 %v1031
      %1074 = vmatprep.subr.mxu0 0.0
      %1075 = vmatpush2.msra.mxu0 0.0
      %1076 = vmatprep.subr.mxu0 0.0
      %1077 = vmatpush2.msra.mxu0 0.0
      %1078 = vmatprep.subr.mxu0 0.0
      %1079 = vmatpush2.msra.mxu0 0.0
      %1080 = vmatprep.subr.mxu0 0.0
      %1081 = vmatpush2.msra.mxu0 0.0
      %1082 = vmatprep.subr.mxu0 0.0
      %1083 = vmatpush2.msra.mxu0 0.0
      %1084 = vmatprep.subr.mxu0 0.0
      %1085 = vmatpush2.msra.mxu0 0.0
      %1086 = vmatprep.subr.mxu0 0.0
      %1087 = vmatpush2.msra.mxu0 0.0
      %1088 = vmatprep.subr.mxu0 0.0
      %1089 = vmatpush2.msra.mxu0 0.0
      %1090 = vmatprep.subr.mxu0 0.0
      %1091 = vmatpush2.msra.mxu0 0.0
      %1092 = vmatprep.subr.mxu0 0.0
      %1093 = vmatpush2.msra.mxu0 0.0
      %1094 = vmatprep.subr.mxu0 0.0
      %1095 = vmatpush2.msra.mxu0 0.0
      %1096 = vmatprep.subr.mxu0 0.0
      %1097 = vmatpush2.msra.mxu0 0.0
      %1098 = vmatprep.subr.mxu0 0.0
      %1099 = vmatpush2.msra.mxu0 0.0
      %1100 = vmatprep.subr.mxu0 0.0
      %1101 = vmatpush2.msra.mxu0 0.0
      %1102 = vmatprep.subr.mxu0 0.0
      %1103 = vmatpush2.msra.mxu0 0.0
      %1104 = vmatprep.subr.mxu0 0.0
      %1105 = vmatpush2.msra.mxu0 0.0
      %1106 = vmatprep.mubr.f32.mxu0 0.0
      %1107 = vmatmul.mubr.f32.gmra.mxu0 %v1040
      %v1108 = vpop.f32.mrf.mxu0
      %v1109 = vadd.f32 0.0, %v1108
      %v1110 = vpop.f32.mrf.mxu0
      %v1111 = vadd.f32 0.0, %v1110
      %1112 = vdwg.mxu0
      %1113 = vmatprep.subr.mxu0 0.0
      %1114 = vmatpush1.msra.mxu0 0.0
      %1115 = vmatprep.subr.mxu0 0.0
      %1116 = vmatpush1.msra.mxu0 0.0
      %1117 = vmatprep.subr.mxu0 0.0
      %1118 = vmatpush1.msra.mxu0 0.0
      %1119 = vmatprep.subr.mxu0 0.0
      %1120 = vmatpush1.msra.mxu0 0.0
      %1121 = vmatprep.subr.mxu0 0.0
      %1122 = vmatpush1.msra.mxu0 0.0
      %1123 = vmatprep.subr.mxu0 0.0
      %1124 = vmatpush1.msra.mxu0 0.0
      %1125 = vmatprep.subr.mxu0 0.0
      %1126 = vmatpush1.msra.mxu0 0.0
      %1127 = vmatprep.subr.mxu0 0.0
      %1128 = vmatpush1.msra.mxu0 0.0
      %1129 = vmatprep.subr.mxu0 0.0
      %1130 = vmatpush1.msra.mxu0 0.0
      %1131 = vmatprep.subr.mxu0 0.0
      %1132 = vmatpush1.msra.mxu0 0.0
      %1133 = vmatprep.subr.mxu0 0.0
      %1134 = vmatpush1.msra.mxu0 0.0
      %1135 = vmatprep.subr.mxu0 0.0
      %1136 = vmatpush1.msra.mxu0 0.0
      %1137 = vmatprep.subr.mxu0 0.0
      %1138 = vmatpush1.msra.mxu0 0.0
      %1139 = vmatprep.subr.mxu0 0.0
      %1140 = vmatpush1.msra.mxu0 0.0
      %1141 = vmatprep.subr.mxu0 0.0
      %1142 = vmatpush1.msra.mxu0 0.0
      %1143 = vmatprep.subr.mxu0 %v1034
      %1144 = vmatpush1.msra.mxu0 %v1033
      %1145 = vmatprep.subr.mxu0 0.0
      %1146 = vmatpush2.msra.mxu0 0.0
      %1147 = vmatprep.subr.mxu0 0.0
      %1148 = vmatpush2.msra.mxu0 0.0
      %1149 = vmatprep.subr.mxu0 0.0
      %1150 = vmatpush2.msra.mxu0 0.0
      %1151 = vmatprep.subr.mxu0 0.0
      %1152 = vmatpush2.msra.mxu0 0.0
      %1153 = vmatprep.subr.mxu0 0.0
      %1154 = vmatpush2.msra.mxu0 0.0
      %1155 = vmatprep.subr.mxu0 0.0
      %1156 = vmatpush2.msra.mxu0 0.0
      %1157 = vmatprep.subr.mxu0 0.0
      %1158 = vmatpush2.msra.mxu0 0.0
      %1159 = vmatprep.subr.mxu0 0.0
      %1160 = vmatpush2.msra.mxu0 0.0
      %1161 = vmatprep.subr.mxu0 0.0
      %1162 = vmatpush2.msra.mxu0 0.0
      %1163 = vmatprep.subr.mxu0 0.0
      %1164 = vmatpush2.msra.mxu0 0.0
      %1165 = vmatprep.subr.mxu0 0.0
      %1166 = vmatpush2.msra.mxu0 0.0
      %1167 = vmatprep.subr.mxu0 0.0
      %1168 = vmatpush2.msra.mxu0 0.0
      %1169 = vmatprep.subr.mxu0 0.0
      %1170 = vmatpush2.msra.mxu0 0.0
      %1171 = vmatprep.subr.mxu0 0.0
      %1172 = vmatpush2.msra.mxu0 0.0
      %1173 = vmatprep.subr.mxu0 0.0
      %1174 = vmatpush2.msra.mxu0 0.0
      %1175 = vmatprep.subr.mxu0 0.0
      %1176 = vmatpush2.msra.mxu0 0.0
      %1177 = vmatprep.mubr.f32.mxu0 0.0
      %1178 = vmatmul.mubr.f32.gmra.mxu0 %v1040
      %v1179 = vpop.f32.mrf.mxu0
      %v1180 = vadd.f32 0.0, %v1179
      %v1181 = vpop.f32.mrf.mxu0
      %v1182 = vadd.f32 0.0, %v1181
      %1183 = vdwg.mxu0
      %v1184 = vadd.f32 %v1014, %v1109
      %v1185 = vadd.f32 %v1015, %v1111
      %v1186 = vadd.f32 %v1016, %v1180
      %v1187 = vadd.f32 %v1017, %v1182
      %s1188 = scalar_lea.vmem %s1, 48
      %v1189 = vld [vmem:[%s1188] sm:$0xff]
      %1190 = vrot.lane.b32.xlu0 %v171, 88
      %v1191 = vpop.permute.xlu0 %1190
      %1192 = vrot.lane.b32.xlu0 %v172, 88
      %v1193 = vpop.permute.xlu0 %1192
      %1194 = vrot.lane.b32.xlu0 %v173, 88
      %v1195 = vpop.permute.xlu0 %1194
      %1196 = vrot.lane.b32.xlu0 %v174, 88
      %v1197 = vpop.permute.xlu0 %1196
      %1198 = vrot.lane.b32.xlu0 %v175, 88
      %v1199 = vpop.permute.xlu0 %1198
      %vm1200 = vcmask 719872
      %v1201 = vsel %vm1200, %v1191, %v1193
      %v1202 = vsel %vm1200, %v1193, %v1195
      %v1203 = vsel %vm1200, %v1195, %v1197
      %v1204 = vsel %vm1200, %v1197, %v1199
      %v1210 = vsel %vm183, %v1189, 0
      %1212 = vmatprep.subr.mxu0 0.0
      %1213 = vmatpush1.msra.mxu0 0.0
      %1214 = vmatprep.subr.mxu0 0.0
      %1215 = vmatpush1.msra.mxu0 0.0
      %1216 = vmatprep.subr.mxu0 0.0
      %1217 = vmatpush1.msra.mxu0 0.0
      %1218 = vmatprep.subr.mxu0 0.0
      %1219 = vmatpush1.msra.mxu0 0.0
      %1220 = vmatprep.subr.mxu0 0.0
      %1221 = vmatpush1.msra.mxu0 0.0
      %1222 = vmatprep.subr.mxu0 0.0
      %1223 = vmatpush1.msra.mxu0 0.0
      %1224 = vmatprep.subr.mxu0 0.0
      %1225 = vmatpush1.msra.mxu0 0.0
      %1226 = vmatprep.subr.mxu0 0.0
      %1227 = vmatpush1.msra.mxu0 0.0
      %1228 = vmatprep.subr.mxu0 0.0
      %1229 = vmatpush1.msra.mxu0 0.0
      %1230 = vmatprep.subr.mxu0 0.0
      %1231 = vmatpush1.msra.mxu0 0.0
      %1232 = vmatprep.subr.mxu0 0.0
      %1233 = vmatpush1.msra.mxu0 0.0
      %1234 = vmatprep.subr.mxu0 0.0
      %1235 = vmatpush1.msra.mxu0 0.0
      %1236 = vmatprep.subr.mxu0 0.0
      %1237 = vmatpush1.msra.mxu0 0.0
      %1238 = vmatprep.subr.mxu0 0.0
      %1239 = vmatpush1.msra.mxu0 0.0
      %1240 = vmatprep.subr.mxu0 0.0
      %1241 = vmatpush1.msra.mxu0 0.0
      %1242 = vmatprep.subr.mxu0 %v1202
      %1243 = vmatpush1.msra.mxu0 %v1201
      %1244 = vmatprep.subr.mxu0 0.0
      %1245 = vmatpush2.msra.mxu0 0.0
      %1246 = vmatprep.subr.mxu0 0.0
      %1247 = vmatpush2.msra.mxu0 0.0
      %1248 = vmatprep.subr.mxu0 0.0
      %1249 = vmatpush2.msra.mxu0 0.0
      %1250 = vmatprep.subr.mxu0 0.0
      %1251 = vmatpush2.msra.mxu0 0.0
      %1252 = vmatprep.subr.mxu0 0.0
      %1253 = vmatpush2.msra.mxu0 0.0
      %1254 = vmatprep.subr.mxu0 0.0
      %1255 = vmatpush2.msra.mxu0 0.0
      %1256 = vmatprep.subr.mxu0 0.0
      %1257 = vmatpush2.msra.mxu0 0.0
      %1258 = vmatprep.subr.mxu0 0.0
      %1259 = vmatpush2.msra.mxu0 0.0
      %1260 = vmatprep.subr.mxu0 0.0
      %1261 = vmatpush2.msra.mxu0 0.0
      %1262 = vmatprep.subr.mxu0 0.0
      %1263 = vmatpush2.msra.mxu0 0.0
      %1264 = vmatprep.subr.mxu0 0.0
      %1265 = vmatpush2.msra.mxu0 0.0
      %1266 = vmatprep.subr.mxu0 0.0
      %1267 = vmatpush2.msra.mxu0 0.0
      %1268 = vmatprep.subr.mxu0 0.0
      %1269 = vmatpush2.msra.mxu0 0.0
      %1270 = vmatprep.subr.mxu0 0.0
      %1271 = vmatpush2.msra.mxu0 0.0
      %1272 = vmatprep.subr.mxu0 0.0
      %1273 = vmatpush2.msra.mxu0 0.0
      %1274 = vmatprep.subr.mxu0 0.0
      %1275 = vmatpush2.msra.mxu0 0.0
      %1276 = vmatprep.mubr.f32.mxu0 0.0
      %1277 = vmatmul.mubr.f32.gmra.mxu0 %v1210
      %v1278 = vpop.f32.mrf.mxu0
      %v1279 = vadd.f32 0.0, %v1278
      %v1280 = vpop.f32.mrf.mxu0
      %v1281 = vadd.f32 0.0, %v1280
      %1282 = vdwg.mxu0
      %1283 = vmatprep.subr.mxu0 0.0
      %1284 = vmatpush1.msra.mxu0 0.0
      %1285 = vmatprep.subr.mxu0 0.0
      %1286 = vmatpush1.msra.mxu0 0.0
      %1287 = vmatprep.subr.mxu0 0.0
      %1288 = vmatpush1.msra.mxu0 0.0
      %1289 = vmatprep.subr.mxu0 0.0
      %1290 = vmatpush1.msra.mxu0 0.0
      %1291 = vmatprep.subr.mxu0 0.0
      %1292 = vmatpush1.msra.mxu0 0.0
      %1293 = vmatprep.subr.mxu0 0.0
      %1294 = vmatpush1.msra.mxu0 0.0
      %1295 = vmatprep.subr.mxu0 0.0
      %1296 = vmatpush1.msra.mxu0 0.0
      %1297 = vmatprep.subr.mxu0 0.0
      %1298 = vmatpush1.msra.mxu0 0.0
      %1299 = vmatprep.subr.mxu0 0.0
      %1300 = vmatpush1.msra.mxu0 0.0
      %1301 = vmatprep.subr.mxu0 0.0
      %1302 = vmatpush1.msra.mxu0 0.0
      %1303 = vmatprep.subr.mxu0 0.0
      %1304 = vmatpush1.msra.mxu0 0.0
      %1305 = vmatprep.subr.mxu0 0.0
      %1306 = vmatpush1.msra.mxu0 0.0
      %1307 = vmatprep.subr.mxu0 0.0
      %1308 = vmatpush1.msra.mxu0 0.0
      %1309 = vmatprep.subr.mxu0 0.0
      %1310 = vmatpush1.msra.mxu0 0.0
      %1311 = vmatprep.subr.mxu0 0.0
      %1312 = vmatpush1.msra.mxu0 0.0
      %1313 = vmatprep.subr.mxu0 %v1204
      %1314 = vmatpush1.msra.mxu0 %v1203
      %1315 = vmatprep.subr.mxu0 0.0
      %1316 = vmatpush2.msra.mxu0 0.0
      %1317 = vmatprep.subr.mxu0 0.0
      %1318 = vmatpush2.msra.mxu0 0.0
      %1319 = vmatprep.subr.mxu0 0.0
      %1320 = vmatpush2.msra.mxu0 0.0
      %1321 = vmatprep.subr.mxu0 0.0
      %1322 = vmatpush2.msra.mxu0 0.0
      %1323 = vmatprep.subr.mxu0 0.0
      %1324 = vmatpush2.msra.mxu0 0.0
      %1325 = vmatprep.subr.mxu0 0.0
      %1326 = vmatpush2.msra.mxu0 0.0
      %1327 = vmatprep.subr.mxu0 0.0
      %1328 = vmatpush2.msra.mxu0 0.0
      %1329 = vmatprep.subr.mxu0 0.0
      %1330 = vmatpush2.msra.mxu0 0.0
      %1331 = vmatprep.subr.mxu0 0.0
      %1332 = vmatpush2.msra.mxu0 0.0
      %1333 = vmatprep.subr.mxu0 0.0
      %1334 = vmatpush2.msra.mxu0 0.0
      %1335 = vmatprep.subr.mxu0 0.0
      %1336 = vmatpush2.msra.mxu0 0.0
      %1337 = vmatprep.subr.mxu0 0.0
      %1338 = vmatpush2.msra.mxu0 0.0
      %1339 = vmatprep.subr.mxu0 0.0
      %1340 = vmatpush2.msra.mxu0 0.0
      %1341 = vmatprep.subr.mxu0 0.0
      %1342 = vmatpush2.msra.mxu0 0.0
      %1343 = vmatprep.subr.mxu0 0.0
      %1344 = vmatpush2.msra.mxu0 0.0
      %1345 = vmatprep.subr.mxu0 0.0
      %1346 = vmatpush2.msra.mxu0 0.0
      %1347 = vmatprep.mubr.f32.mxu0 0.0
      %1348 = vmatmul.mubr.f32.gmra.mxu0 %v1210
      %v1349 = vpop.f32.mrf.mxu0
      %v1350 = vadd.f32 0.0, %v1349
      %v1351 = vpop.f32.mrf.mxu0
      %v1352 = vadd.f32 0.0, %v1351
      %1353 = vdwg.mxu0
      %v1354 = vadd.f32 %v1184, %v1279
      %v1355 = vadd.f32 %v1185, %v1281
      %v1356 = vadd.f32 %v1186, %v1350
      %v1357 = vadd.f32 %v1187, %v1352
      %s1358 = scalar_lea.vmem %s1, 56
      %v1359 = vld [vmem:[%s1358] sm:$0xff]
      %1360 = vrot.lane.b32.xlu0 %v171, 87
      %v1361 = vpop.permute.xlu0 %1360
      %1362 = vrot.lane.b32.xlu0 %v172, 87
      %v1363 = vpop.permute.xlu0 %1362
      %1364 = vrot.lane.b32.xlu0 %v173, 87
      %v1365 = vpop.permute.xlu0 %1364
      %1366 = vrot.lane.b32.xlu0 %v174, 87
      %v1367 = vpop.permute.xlu0 %1366
      %1368 = vrot.lane.b32.xlu0 %v175, 87
      %v1369 = vpop.permute.xlu0 %1368
      %vm1370 = vcmask 711680
      %v1371 = vsel %vm1370, %v1361, %v1363
      %v1372 = vsel %vm1370, %v1363, %v1365
      %v1373 = vsel %vm1370, %v1365, %v1367
      %v1374 = vsel %vm1370, %v1367, %v1369
      %v1380 = vsel %vm183, %v1359, 0
      %1382 = vmatprep.subr.mxu0 0.0
      %1383 = vmatpush1.msra.mxu0 0.0
      %1384 = vmatprep.subr.mxu0 0.0
      %1385 = vmatpush1.msra.mxu0 0.0
      %1386 = vmatprep.subr.mxu0 0.0
      %1387 = vmatpush1.msra.mxu0 0.0
      %1388 = vmatprep.subr.mxu0 0.0
      %1389 = vmatpush1.msra.mxu0 0.0
      %1390 = vmatprep.subr.mxu0 0.0
      %1391 = vmatpush1.msra.mxu0 0.0
      %1392 = vmatprep.subr.mxu0 0.0
      %1393 = vmatpush1.msra.mxu0 0.0
      %1394 = vmatprep.subr.mxu0 0.0
      %1395 = vmatpush1.msra.mxu0 0.0
      %1396 = vmatprep.subr.mxu0 0.0
      %1397 = vmatpush1.msra.mxu0 0.0
      %1398 = vmatprep.subr.mxu0 0.0
      %1399 = vmatpush1.msra.mxu0 0.0
      %1400 = vmatprep.subr.mxu0 0.0
      %1401 = vmatpush1.msra.mxu0 0.0
      %1402 = vmatprep.subr.mxu0 0.0
      %1403 = vmatpush1.msra.mxu0 0.0
      %1404 = vmatprep.subr.mxu0 0.0
      %1405 = vmatpush1.msra.mxu0 0.0
      %1406 = vmatprep.subr.mxu0 0.0
      %1407 = vmatpush1.msra.mxu0 0.0
      %1408 = vmatprep.subr.mxu0 0.0
      %1409 = vmatpush1.msra.mxu0 0.0
      %1410 = vmatprep.subr.mxu0 0.0
      %1411 = vmatpush1.msra.mxu0 0.0
      %1412 = vmatprep.subr.mxu0 %v1372
      %1413 = vmatpush1.msra.mxu0 %v1371
      %1414 = vmatprep.subr.mxu0 0.0
      %1415 = vmatpush2.msra.mxu0 0.0
      %1416 = vmatprep.subr.mxu0 0.0
      %1417 = vmatpush2.msra.mxu0 0.0
      %1418 = vmatprep.subr.mxu0 0.0
      %1419 = vmatpush2.msra.mxu0 0.0
      %1420 = vmatprep.subr.mxu0 0.0
      %1421 = vmatpush2.msra.mxu0 0.0
      %1422 = vmatprep.subr.mxu0 0.0
      %1423 = vmatpush2.msra.mxu0 0.0
      %1424 = vmatprep.subr.mxu0 0.0
      %1425 = vmatpush2.msra.mxu0 0.0
      %1426 = vmatprep.subr.mxu0 0.0
      %1427 = vmatpush2.msra.mxu0 0.0
      %1428 = vmatprep.subr.mxu0 0.0
      %1429 = vmatpush2.msra.mxu0 0.0
      %1430 = vmatprep.subr.mxu0 0.0
      %1431 = vmatpush2.msra.mxu0 0.0
      %1432 = vmatprep.subr.mxu0 0.0
      %1433 = vmatpush2.msra.mxu0 0.0
      %1434 = vmatprep.subr.mxu0 0.0
      %1435 = vmatpush2.msra.mxu0 0.0
      %1436 = vmatprep.subr.mxu0 0.0
      %1437 = vmatpush2.msra.mxu0 0.0
      %1438 = vmatprep.subr.mxu0 0.0
      %1439 = vmatpush2.msra.mxu0 0.0
      %1440 = vmatprep.subr.mxu0 0.0
      %1441 = vmatpush2.msra.mxu0 0.0
      %1442 = vmatprep.subr.mxu0 0.0
      %1443 = vmatpush2.msra.mxu0 0.0
      %1444 = vmatprep.subr.mxu0 0.0
      %1445 = vmatpush2.msra.mxu0 0.0
      %1446 = vmatprep.mubr.f32.mxu0 0.0
      %1447 = vmatmul.mubr.f32.gmra.mxu0 %v1380
      %v1448 = vpop.f32.mrf.mxu0
      %v1449 = vadd.f32 0.0, %v1448
      %v1450 = vpop.f32.mrf.mxu0
      %v1451 = vadd.f32 0.0, %v1450
      %1452 = vdwg.mxu0
      %1453 = vmatprep.subr.mxu0 0.0
      %1454 = vmatpush1.msra.mxu0 0.0
      %1455 = vmatprep.subr.mxu0 0.0
      %1456 = vmatpush1.msra.mxu0 0.0
      %1457 = vmatprep.subr.mxu0 0.0
      %1458 = vmatpush1.msra.mxu0 0.0
      %1459 = vmatprep.subr.mxu0 0.0
      %1460 = vmatpush1.msra.mxu0 0.0
      %1461 = vmatprep.subr.mxu0 0.0
      %1462 = vmatpush1.msra.mxu0 0.0
      %1463 = vmatprep.subr.mxu0 0.0
      %1464 = vmatpush1.msra.mxu0 0.0
      %1465 = vmatprep.subr.mxu0 0.0
      %1466 = vmatpush1.msra.mxu0 0.0
      %1467 = vmatprep.subr.mxu0 0.0
      %1468 = vmatpush1.msra.mxu0 0.0
      %1469 = vmatprep.subr.mxu0 0.0
      %1470 = vmatpush1.msra.mxu0 0.0
      %1471 = vmatprep.subr.mxu0 0.0
      %1472 = vmatpush1.msra.mxu0 0.0
      %1473 = vmatprep.subr.mxu0 0.0
      %1474 = vmatpush1.msra.mxu0 0.0
      %1475 = vmatprep.subr.mxu0 0.0
      %1476 = vmatpush1.msra.mxu0 0.0
      %1477 = vmatprep.subr.mxu0 0.0
      %1478 = vmatpush1.msra.mxu0 0.0
      %1479 = vmatprep.subr.mxu0 0.0
      %1480 = vmatpush1.msra.mxu0 0.0
      %1481 = vmatprep.subr.mxu0 0.0
      %1482 = vmatpush1.msra.mxu0 0.0
      %1483 = vmatprep.subr.mxu0 %v1374
      %1484 = vmatpush1.msra.mxu0 %v1373
      %1485 = vmatprep.subr.mxu0 0.0
      %1486 = vmatpush2.msra.mxu0 0.0
      %1487 = vmatprep.subr.mxu0 0.0
      %1488 = vmatpush2.msra.mxu0 0.0
      %1489 = vmatprep.subr.mxu0 0.0
      %1490 = vmatpush2.msra.mxu0 0.0
      %1491 = vmatprep.subr.mxu0 0.0
      %1492 = vmatpush2.msra.mxu0 0.0
      %1493 = vmatprep.subr.mxu0 0.0
      %1494 = vmatpush2.msra.mxu0 0.0
      %1495 = vmatprep.subr.mxu0 0.0
      %1496 = vmatpush2.msra.mxu0 0.0
      %1497 = vmatprep.subr.mxu0 0.0
      %1498 = vmatpush2.msra.mxu0 0.0
      %1499 = vmatprep.subr.mxu0 0.0
      %1500 = vmatpush2.msra.mxu0 0.0
      %1501 = vmatprep.subr.mxu0 0.0
      %1502 = vmatpush2.msra.mxu0 0.0
      %1503 = vmatprep.subr.mxu0 0.0
      %1504 = vmatpush2.msra.mxu0 0.0
      %1505 = vmatprep.subr.mxu0 0.0
      %1506 = vmatpush2.msra.mxu0 0.0
      %1507 = vmatprep.subr.mxu0 0.0
      %1508 = vmatpush2.msra.mxu0 0.0
      %1509 = vmatprep.subr.mxu0 0.0
      %1510 = vmatpush2.msra.mxu0 0.0
      %1511 = vmatprep.subr.mxu0 0.0
      %1512 = vmatpush2.msra.mxu0 0.0
      %1513 = vmatprep.subr.mxu0 0.0
      %1514 = vmatpush2.msra.mxu0 0.0
      %1515 = vmatprep.subr.mxu0 0.0
      %1516 = vmatpush2.msra.mxu0 0.0
      %1517 = vmatprep.mubr.f32.mxu0 0.0
      %1518 = vmatmul.mubr.f32.gmra.mxu0 %v1380
      %v1519 = vpop.f32.mrf.mxu0
      %v1520 = vadd.f32 0.0, %v1519
      %v1521 = vpop.f32.mrf.mxu0
      %v1522 = vadd.f32 0.0, %v1521
      %1523 = vdwg.mxu0
      %v1524 = vadd.f32 %v1354, %v1449
      %v1525 = vadd.f32 %v1355, %v1451
      %v1526 = vadd.f32 %v1356, %v1520
      %v1527 = vadd.f32 %v1357, %v1522
      %s1528 = scalar_lea.vmem %s1, 64
      %v1529 = vld [vmem:[%s1528] sm:$0xff]
      %1530 = vrot.lane.b32.xlu0 %v171, 86
      %v1531 = vpop.permute.xlu0 %1530
      %1532 = vrot.lane.b32.xlu0 %v172, 86
      %v1533 = vpop.permute.xlu0 %1532
      %1534 = vrot.lane.b32.xlu0 %v173, 86
      %v1535 = vpop.permute.xlu0 %1534
      %1536 = vrot.lane.b32.xlu0 %v174, 86
      %v1537 = vpop.permute.xlu0 %1536
      %1538 = vrot.lane.b32.xlu0 %v175, 86
      %v1539 = vpop.permute.xlu0 %1538
      %vm1540 = vcmask 703488
      %v1541 = vsel %vm1540, %v1531, %v1533
      %v1542 = vsel %vm1540, %v1533, %v1535
      %v1543 = vsel %vm1540, %v1535, %v1537
      %v1544 = vsel %vm1540, %v1537, %v1539
      %v1550 = vsel %vm183, %v1529, 0
      %1552 = vmatprep.subr.mxu0 0.0
      %1553 = vmatpush1.msra.mxu0 0.0
      %1554 = vmatprep.subr.mxu0 0.0
      %1555 = vmatpush1.msra.mxu0 0.0
      %1556 = vmatprep.subr.mxu0 0.0
      %1557 = vmatpush1.msra.mxu0 0.0
      %1558 = vmatprep.subr.mxu0 0.0
      %1559 = vmatpush1.msra.mxu0 0.0
      %1560 = vmatprep.subr.mxu0 0.0
      %1561 = vmatpush1.msra.mxu0 0.0
      %1562 = vmatprep.subr.mxu0 0.0
      %1563 = vmatpush1.msra.mxu0 0.0
      %1564 = vmatprep.subr.mxu0 0.0
      %1565 = vmatpush1.msra.mxu0 0.0
      %1566 = vmatprep.subr.mxu0 0.0
      %1567 = vmatpush1.msra.mxu0 0.0
      %1568 = vmatprep.subr.mxu0 0.0
      %1569 = vmatpush1.msra.mxu0 0.0
      %1570 = vmatprep.subr.mxu0 0.0
      %1571 = vmatpush1.msra.mxu0 0.0
      %1572 = vmatprep.subr.mxu0 0.0
      %1573 = vmatpush1.msra.mxu0 0.0
      %1574 = vmatprep.subr.mxu0 0.0
      %1575 = vmatpush1.msra.mxu0 0.0
      %1576 = vmatprep.subr.mxu0 0.0
      %1577 = vmatpush1.msra.mxu0 0.0
      %1578 = vmatprep.subr.mxu0 0.0
      %1579 = vmatpush1.msra.mxu0 0.0
      %1580 = vmatprep.subr.mxu0 0.0
      %1581 = vmatpush1.msra.mxu0 0.0
      %1582 = vmatprep.subr.mxu0 %v1542
      %1583 = vmatpush1.msra.mxu0 %v1541
      %1584 = vmatprep.subr.mxu0 0.0
      %1585 = vmatpush2.msra.mxu0 0.0
      %1586 = vmatprep.subr.mxu0 0.0
      %1587 = vmatpush2.msra.mxu0 0.0
      %1588 = vmatprep.subr.mxu0 0.0
      %1589 = vmatpush2.msra.mxu0 0.0
      %1590 = vmatprep.subr.mxu0 0.0
      %1591 = vmatpush2.msra.mxu0 0.0
      %1592 = vmatprep.subr.mxu0 0.0
      %1593 = vmatpush2.msra.mxu0 0.0
      %1594 = vmatprep.subr.mxu0 0.0
      %1595 = vmatpush2.msra.mxu0 0.0
      %1596 = vmatprep.subr.mxu0 0.0
      %1597 = vmatpush2.msra.mxu0 0.0
      %1598 = vmatprep.subr.mxu0 0.0
      %1599 = vmatpush2.msra.mxu0 0.0
      %1600 = vmatprep.subr.mxu0 0.0
      %1601 = vmatpush2.msra.mxu0 0.0
      %1602 = vmatprep.subr.mxu0 0.0
      %1603 = vmatpush2.msra.mxu0 0.0
      %1604 = vmatprep.subr.mxu0 0.0
      %1605 = vmatpush2.msra.mxu0 0.0
      %1606 = vmatprep.subr.mxu0 0.0
      %1607 = vmatpush2.msra.mxu0 0.0
      %1608 = vmatprep.subr.mxu0 0.0
      %1609 = vmatpush2.msra.mxu0 0.0
      %1610 = vmatprep.subr.mxu0 0.0
      %1611 = vmatpush2.msra.mxu0 0.0
      %1612 = vmatprep.subr.mxu0 0.0
      %1613 = vmatpush2.msra.mxu0 0.0
      %1614 = vmatprep.subr.mxu0 0.0
      %1615 = vmatpush2.msra.mxu0 0.0
      %1616 = vmatprep.mubr.f32.mxu0 0.0
      %1617 = vmatmul.mubr.f32.gmra.mxu0 %v1550
      %v1618 = vpop.f32.mrf.mxu0
      %v1619 = vadd.f32 0.0, %v1618
      %v1620 = vpop.f32.mrf.mxu0
      %v1621 = vadd.f32 0.0, %v1620
      %1622 = vdwg.mxu0
      %1623 = vmatprep.subr.mxu0 0.0
      %1624 = vmatpush1.msra.mxu0 0.0
      %1625 = vmatprep.subr.mxu0 0.0
      %1626 = vmatpush1.msra.mxu0 0.0
      %1627 = vmatprep.subr.mxu0 0.0
      %1628 = vmatpush1.msra.mxu0 0.0
      %1629 = vmatprep.subr.mxu0 0.0
      %1630 = vmatpush1.msra.mxu0 0.0
      %1631 = vmatprep.subr.mxu0 0.0
      %1632 = vmatpush1.msra.mxu0 0.0
      %1633 = vmatprep.subr.mxu0 0.0
      %1634 = vmatpush1.msra.mxu0 0.0
      %1635 = vmatprep.subr.mxu0 0.0
      %1636 = vmatpush1.msra.mxu0 0.0
      %1637 = vmatprep.subr.mxu0 0.0
      %1638 = vmatpush1.msra.mxu0 0.0
      %1639 = vmatprep.subr.mxu0 0.0
      %1640 = vmatpush1.msra.mxu0 0.0
      %1641 = vmatprep.subr.mxu0 0.0
      %1642 = vmatpush1.msra.mxu0 0.0
      %1643 = vmatprep.subr.mxu0 0.0
      %1644 = vmatpush1.msra.mxu0 0.0
      %1645 = vmatprep.subr.mxu0 0.0
      %1646 = vmatpush1.msra.mxu0 0.0
      %1647 = vmatprep.subr.mxu0 0.0
      %1648 = vmatpush1.msra.mxu0 0.0
      %1649 = vmatprep.subr.mxu0 0.0
      %1650 = vmatpush1.msra.mxu0 0.0
      %1651 = vmatprep.subr.mxu0 0.0
      %1652 = vmatpush1.msra.mxu0 0.0
      %1653 = vmatprep.subr.mxu0 %v1544
      %1654 = vmatpush1.msra.mxu0 %v1543
      %1655 = vmatprep.subr.mxu0 0.0
      %1656 = vmatpush2.msra.mxu0 0.0
      %1657 = vmatprep.subr.mxu0 0.0
      %1658 = vmatpush2.msra.mxu0 0.0
      %1659 = vmatprep.subr.mxu0 0.0
      %1660 = vmatpush2.msra.mxu0 0.0
      %1661 = vmatprep.subr.mxu0 0.0
      %1662 = vmatpush2.msra.mxu0 0.0
      %1663 = vmatprep.subr.mxu0 0.0
      %1664 = vmatpush2.msra.mxu0 0.0
      %1665 = vmatprep.subr.mxu0 0.0
      %1666 = vmatpush2.msra.mxu0 0.0
      %1667 = vmatprep.subr.mxu0 0.0
      %1668 = vmatpush2.msra.mxu0 0.0
      %1669 = vmatprep.subr.mxu0 0.0
      %1670 = vmatpush2.msra.mxu0 0.0
      %1671 = vmatprep.subr.mxu0 0.0
      %1672 = vmatpush2.msra.mxu0 0.0
      %1673 = vmatprep.subr.mxu0 0.0
      %1674 = vmatpush2.msra.mxu0 0.0
      %1675 = vmatprep.subr.mxu0 0.0
      %1676 = vmatpush2.msra.mxu0 0.0
      %1677 = vmatprep.subr.mxu0 0.0
      %1678 = vmatpush2.msra.mxu0 0.0
      %1679 = vmatprep.subr.mxu0 0.0
      %1680 = vmatpush2.msra.mxu0 0.0
      %1681 = vmatprep.subr.mxu0 0.0
      %1682 = vmatpush2.msra.mxu0 0.0
      %1683 = vmatprep.subr.mxu0 0.0
      %1684 = vmatpush2.msra.mxu0 0.0
      %1685 = vmatprep.subr.mxu0 0.0
      %1686 = vmatpush2.msra.mxu0 0.0
      %1687 = vmatprep.mubr.f32.mxu0 0.0
      %1688 = vmatmul.mubr.f32.gmra.mxu0 %v1550
      %v1689 = vpop.f32.mrf.mxu0
      %v1690 = vadd.f32 0.0, %v1689
      %v1691 = vpop.f32.mrf.mxu0
      %v1692 = vadd.f32 0.0, %v1691
      %1693 = vdwg.mxu0
      %v1694 = vadd.f32 %v1524, %v1619
      %v1695 = vadd.f32 %v1525, %v1621
      %v1696 = vadd.f32 %v1526, %v1690
      %v1697 = vadd.f32 %v1527, %v1692
      %s1698 = scalar_lea.vmem %s1, 72
      %v1699 = vld [vmem:[%s1698] sm:$0xff]
      %1700 = vrot.lane.b32.xlu0 %v171, 85
      %v1701 = vpop.permute.xlu0 %1700
      %1702 = vrot.lane.b32.xlu0 %v172, 85
      %v1703 = vpop.permute.xlu0 %1702
      %1704 = vrot.lane.b32.xlu0 %v173, 85
      %v1705 = vpop.permute.xlu0 %1704
      %1706 = vrot.lane.b32.xlu0 %v174, 85
      %v1707 = vpop.permute.xlu0 %1706
      %1708 = vrot.lane.b32.xlu0 %v175, 85
      %v1709 = vpop.permute.xlu0 %1708
      %vm1710 = vcmask 695296
      %v1711 = vsel %vm1710, %v1701, %v1703
      %v1712 = vsel %vm1710, %v1703, %v1705
      %v1713 = vsel %vm1710, %v1705, %v1707
      %v1714 = vsel %vm1710, %v1707, %v1709
      %v1720 = vsel %vm183, %v1699, 0
      %1722 = vmatprep.subr.mxu0 0.0
      %1723 = vmatpush1.msra.mxu0 0.0
      %1724 = vmatprep.subr.mxu0 0.0
      %1725 = vmatpush1.msra.mxu0 0.0
      %1726 = vmatprep.subr.mxu0 0.0
      %1727 = vmatpush1.msra.mxu0 0.0
      %1728 = vmatprep.subr.mxu0 0.0
      %1729 = vmatpush1.msra.mxu0 0.0
      %1730 = vmatprep.subr.mxu0 0.0
      %1731 = vmatpush1.msra.mxu0 0.0
      %1732 = vmatprep.subr.mxu0 0.0
      %1733 = vmatpush1.msra.mxu0 0.0
      %1734 = vmatprep.subr.mxu0 0.0
      %1735 = vmatpush1.msra.mxu0 0.0
      %1736 = vmatprep.subr.mxu0 0.0
      %1737 = vmatpush1.msra.mxu0 0.0
      %1738 = vmatprep.subr.mxu0 0.0
      %1739 = vmatpush1.msra.mxu0 0.0
      %1740 = vmatprep.subr.mxu0 0.0
      %1741 = vmatpush1.msra.mxu0 0.0
      %1742 = vmatprep.subr.mxu0 0.0
      %1743 = vmatpush1.msra.mxu0 0.0
      %1744 = vmatprep.subr.mxu0 0.0
      %1745 = vmatpush1.msra.mxu0 0.0
      %1746 = vmatprep.subr.mxu0 0.0
      %1747 = vmatpush1.msra.mxu0 0.0
      %1748 = vmatprep.subr.mxu0 0.0
      %1749 = vmatpush1.msra.mxu0 0.0
      %1750 = vmatprep.subr.mxu0 0.0
      %1751 = vmatpush1.msra.mxu0 0.0
      %1752 = vmatprep.subr.mxu0 %v1712
      %1753 = vmatpush1.msra.mxu0 %v1711
      %1754 = vmatprep.subr.mxu0 0.0
      %1755 = vmatpush2.msra.mxu0 0.0
      %1756 = vmatprep.subr.mxu0 0.0
      %1757 = vmatpush2.msra.mxu0 0.0
      %1758 = vmatprep.subr.mxu0 0.0
      %1759 = vmatpush2.msra.mxu0 0.0
      %1760 = vmatprep.subr.mxu0 0.0
      %1761 = vmatpush2.msra.mxu0 0.0
      %1762 = vmatprep.subr.mxu0 0.0
      %1763 = vmatpush2.msra.mxu0 0.0
      %1764 = vmatprep.subr.mxu0 0.0
      %1765 = vmatpush2.msra.mxu0 0.0
      %1766 = vmatprep.subr.mxu0 0.0
      %1767 = vmatpush2.msra.mxu0 0.0
      %1768 = vmatprep.subr.mxu0 0.0
      %1769 = vmatpush2.msra.mxu0 0.0
      %1770 = vmatprep.subr.mxu0 0.0
      %1771 = vmatpush2.msra.mxu0 0.0
      %1772 = vmatprep.subr.mxu0 0.0
      %1773 = vmatpush2.msra.mxu0 0.0
      %1774 = vmatprep.subr.mxu0 0.0
      %1775 = vmatpush2.msra.mxu0 0.0
      %1776 = vmatprep.subr.mxu0 0.0
      %1777 = vmatpush2.msra.mxu0 0.0
      %1778 = vmatprep.subr.mxu0 0.0
      %1779 = vmatpush2.msra.mxu0 0.0
      %1780 = vmatprep.subr.mxu0 0.0
      %1781 = vmatpush2.msra.mxu0 0.0
      %1782 = vmatprep.subr.mxu0 0.0
      %1783 = vmatpush2.msra.mxu0 0.0
      %1784 = vmatprep.subr.mxu0 0.0
      %1785 = vmatpush2.msra.mxu0 0.0
      %1786 = vmatprep.mubr.f32.mxu0 0.0
      %1787 = vmatmul.mubr.f32.gmra.mxu0 %v1720
      %v1788 = vpop.f32.mrf.mxu0
      %v1789 = vadd.f32 0.0, %v1788
      %v1790 = vpop.f32.mrf.mxu0
      %v1791 = vadd.f32 0.0, %v1790
      %1792 = vdwg.mxu0
      %1793 = vmatprep.subr.mxu0 0.0
      %1794 = vmatpush1.msra.mxu0 0.0
      %1795 = vmatprep.subr.mxu0 0.0
      %1796 = vmatpush1.msra.mxu0 0.0
      %1797 = vmatprep.subr.mxu0 0.0
      %1798 = vmatpush1.msra.mxu0 0.0
      %1799 = vmatprep.subr.mxu0 0.0
      %1800 = vmatpush1.msra.mxu0 0.0
      %1801 = vmatprep.subr.mxu0 0.0
      %1802 = vmatpush1.msra.mxu0 0.0
      %1803 = vmatprep.subr.mxu0 0.0
      %1804 = vmatpush1.msra.mxu0 0.0
      %1805 = vmatprep.subr.mxu0 0.0
      %1806 = vmatpush1.msra.mxu0 0.0
      %1807 = vmatprep.subr.mxu0 0.0
      %1808 = vmatpush1.msra.mxu0 0.0
      %1809 = vmatprep.subr.mxu0 0.0
      %1810 = vmatpush1.msra.mxu0 0.0
      %1811 = vmatprep.subr.mxu0 0.0
      %1812 = vmatpush1.msra.mxu0 0.0
      %1813 = vmatprep.subr.mxu0 0.0
      %1814 = vmatpush1.msra.mxu0 0.0
      %1815 = vmatprep.subr.mxu0 0.0
      %1816 = vmatpush1.msra.mxu0 0.0
      %1817 = vmatprep.subr.mxu0 0.0
      %1818 = vmatpush1.msra.mxu0 0.0
      %1819 = vmatprep.subr.mxu0 0.0
      %1820 = vmatpush1.msra.mxu0 0.0
      %1821 = vmatprep.subr.mxu0 0.0
      %1822 = vmatpush1.msra.mxu0 0.0
      %1823 = vmatprep.subr.mxu0 %v1714
      %1824 = vmatpush1.msra.mxu0 %v1713
      %1825 = vmatprep.subr.mxu0 0.0
      %1826 = vmatpush2.msra.mxu0 0.0
      %1827 = vmatprep.subr.mxu0 0.0
      %1828 = vmatpush2.msra.mxu0 0.0
      %1829 = vmatprep.subr.mxu0 0.0
      %1830 = vmatpush2.msra.mxu0 0.0
      %1831 = vmatprep.subr.mxu0 0.0
      %1832 = vmatpush2.msra.mxu0 0.0
      %1833 = vmatprep.subr.mxu0 0.0
      %1834 = vmatpush2.msra.mxu0 0.0
      %1835 = vmatprep.subr.mxu0 0.0
      %1836 = vmatpush2.msra.mxu0 0.0
      %1837 = vmatprep.subr.mxu0 0.0
      %1838 = vmatpush2.msra.mxu0 0.0
      %1839 = vmatprep.subr.mxu0 0.0
      %1840 = vmatpush2.msra.mxu0 0.0
      %1841 = vmatprep.subr.mxu0 0.0
      %1842 = vmatpush2.msra.mxu0 0.0
      %1843 = vmatprep.subr.mxu0 0.0
      %1844 = vmatpush2.msra.mxu0 0.0
      %1845 = vmatprep.subr.mxu0 0.0
      %1846 = vmatpush2.msra.mxu0 0.0
      %1847 = vmatprep.subr.mxu0 0.0
      %1848 = vmatpush2.msra.mxu0 0.0
      %1849 = vmatprep.subr.mxu0 0.0
      %1850 = vmatpush2.msra.mxu0 0.0
      %1851 = vmatprep.subr.mxu0 0.0
      %1852 = vmatpush2.msra.mxu0 0.0
      %1853 = vmatprep.subr.mxu0 0.0
      %1854 = vmatpush2.msra.mxu0 0.0
      %1855 = vmatprep.subr.mxu0 0.0
      %1856 = vmatpush2.msra.mxu0 0.0
      %1857 = vmatprep.mubr.f32.mxu0 0.0
      %1858 = vmatmul.mubr.f32.gmra.mxu0 %v1720
      %v1859 = vpop.f32.mrf.mxu0
      %v1860 = vadd.f32 0.0, %v1859
      %v1861 = vpop.f32.mrf.mxu0
      %v1862 = vadd.f32 0.0, %v1861
      %1863 = vdwg.mxu0
      %v1864 = vadd.f32 %v1694, %v1789
      %v1865 = vadd.f32 %v1695, %v1791
      %v1866 = vadd.f32 %v1696, %v1860
      %v1867 = vadd.f32 %v1697, %v1862
      %s1868 = scalar_lea.vmem %s1, 80
      %v1869 = vld [vmem:[%s1868] sm:$0xff]
      %1870 = vrot.lane.b32.xlu0 %v171, 84
      %v1871 = vpop.permute.xlu0 %1870
      %1872 = vrot.lane.b32.xlu0 %v172, 84
      %v1873 = vpop.permute.xlu0 %1872
      %1874 = vrot.lane.b32.xlu0 %v173, 84
      %v1875 = vpop.permute.xlu0 %1874
      %1876 = vrot.lane.b32.xlu0 %v174, 84
      %v1877 = vpop.permute.xlu0 %1876
      %1878 = vrot.lane.b32.xlu0 %v175, 84
      %v1879 = vpop.permute.xlu0 %1878
      %vm1880 = vcmask 687104
      %v1881 = vsel %vm1880, %v1871, %v1873
      %v1882 = vsel %vm1880, %v1873, %v1875
      %v1883 = vsel %vm1880, %v1875, %v1877
      %v1884 = vsel %vm1880, %v1877, %v1879
      %v1890 = vsel %vm183, %v1869, 0
      %1892 = vmatprep.subr.mxu0 0.0
      %1893 = vmatpush1.msra.mxu0 0.0
      %1894 = vmatprep.subr.mxu0 0.0
      %1895 = vmatpush1.msra.mxu0 0.0
      %1896 = vmatprep.subr.mxu0 0.0
      %1897 = vmatpush1.msra.mxu0 0.0
      %1898 = vmatprep.subr.mxu0 0.0
      %1899 = vmatpush1.msra.mxu0 0.0
      %1900 = vmatprep.subr.mxu0 0.0
      %1901 = vmatpush1.msra.mxu0 0.0
      %1902 = vmatprep.subr.mxu0 0.0
      %1903 = vmatpush1.msra.mxu0 0.0
      %1904 = vmatprep.subr.mxu0 0.0
      %1905 = vmatpush1.msra.mxu0 0.0
      %1906 = vmatprep.subr.mxu0 0.0
      %1907 = vmatpush1.msra.mxu0 0.0
      %1908 = vmatprep.subr.mxu0 0.0
      %1909 = vmatpush1.msra.mxu0 0.0
      %1910 = vmatprep.subr.mxu0 0.0
      %1911 = vmatpush1.msra.mxu0 0.0
      %1912 = vmatprep.subr.mxu0 0.0
      %1913 = vmatpush1.msra.mxu0 0.0
      %1914 = vmatprep.subr.mxu0 0.0
      %1915 = vmatpush1.msra.mxu0 0.0
      %1916 = vmatprep.subr.mxu0 0.0
      %1917 = vmatpush1.msra.mxu0 0.0
      %1918 = vmatprep.subr.mxu0 0.0
      %1919 = vmatpush1.msra.mxu0 0.0
      %1920 = vmatprep.subr.mxu0 0.0
      %1921 = vmatpush1.msra.mxu0 0.0
      %1922 = vmatprep.subr.mxu0 %v1882
      %1923 = vmatpush1.msra.mxu0 %v1881
      %1924 = vmatprep.subr.mxu0 0.0
      %1925 = vmatpush2.msra.mxu0 0.0
      %1926 = vmatprep.subr.mxu0 0.0
      %1927 = vmatpush2.msra.mxu0 0.0
      %1928 = vmatprep.subr.mxu0 0.0
      %1929 = vmatpush2.msra.mxu0 0.0
      %1930 = vmatprep.subr.mxu0 0.0
      %1931 = vmatpush2.msra.mxu0 0.0
      %1932 = vmatprep.subr.mxu0 0.0
      %1933 = vmatpush2.msra.mxu0 0.0
      %1934 = vmatprep.subr.mxu0 0.0
      %1935 = vmatpush2.msra.mxu0 0.0
      %1936 = vmatprep.subr.mxu0 0.0
      %1937 = vmatpush2.msra.mxu0 0.0
      %1938 = vmatprep.subr.mxu0 0.0
      %1939 = vmatpush2.msra.mxu0 0.0
      %1940 = vmatprep.subr.mxu0 0.0
      %1941 = vmatpush2.msra.mxu0 0.0
      %1942 = vmatprep.subr.mxu0 0.0
      %1943 = vmatpush2.msra.mxu0 0.0
      %1944 = vmatprep.subr.mxu0 0.0
      %1945 = vmatpush2.msra.mxu0 0.0
      %1946 = vmatprep.subr.mxu0 0.0
      %1947 = vmatpush2.msra.mxu0 0.0
      %1948 = vmatprep.subr.mxu0 0.0
      %1949 = vmatpush2.msra.mxu0 0.0
      %1950 = vmatprep.subr.mxu0 0.0
      %1951 = vmatpush2.msra.mxu0 0.0
      %1952 = vmatprep.subr.mxu0 0.0
      %1953 = vmatpush2.msra.mxu0 0.0
      %1954 = vmatprep.subr.mxu0 0.0
      %1955 = vmatpush2.msra.mxu0 0.0
      %1956 = vmatprep.mubr.f32.mxu0 0.0
      %1957 = vmatmul.mubr.f32.gmra.mxu0 %v1890
      %v1958 = vpop.f32.mrf.mxu0
      %v1959 = vadd.f32 0.0, %v1958
      %v1960 = vpop.f32.mrf.mxu0
      %v1961 = vadd.f32 0.0, %v1960
      %1962 = vdwg.mxu0
      %1963 = vmatprep.subr.mxu0 0.0
      %1964 = vmatpush1.msra.mxu0 0.0
      %1965 = vmatprep.subr.mxu0 0.0
      %1966 = vmatpush1.msra.mxu0 0.0
      %1967 = vmatprep.subr.mxu0 0.0
      %1968 = vmatpush1.msra.mxu0 0.0
      %1969 = vmatprep.subr.mxu0 0.0
      %1970 = vmatpush1.msra.mxu0 0.0
      %1971 = vmatprep.subr.mxu0 0.0
      %1972 = vmatpush1.msra.mxu0 0.0
      %1973 = vmatprep.subr.mxu0 0.0
      %1974 = vmatpush1.msra.mxu0 0.0
      %1975 = vmatprep.subr.mxu0 0.0
      %1976 = vmatpush1.msra.mxu0 0.0
      %1977 = vmatprep.subr.mxu0 0.0
      %1978 = vmatpush1.msra.mxu0 0.0
      %1979 = vmatprep.subr.mxu0 0.0
      %1980 = vmatpush1.msra.mxu0 0.0
      %1981 = vmatprep.subr.mxu0 0.0
      %1982 = vmatpush1.msra.mxu0 0.0
      %1983 = vmatprep.subr.mxu0 0.0
      %1984 = vmatpush1.msra.mxu0 0.0
      %1985 = vmatprep.subr.mxu0 0.0
      %1986 = vmatpush1.msra.mxu0 0.0
      %1987 = vmatprep.subr.mxu0 0.0
      %1988 = vmatpush1.msra.mxu0 0.0
      %1989 = vmatprep.subr.mxu0 0.0
      %1990 = vmatpush1.msra.mxu0 0.0
      %1991 = vmatprep.subr.mxu0 0.0
      %1992 = vmatpush1.msra.mxu0 0.0
      %1993 = vmatprep.subr.mxu0 %v1884
      %1994 = vmatpush1.msra.mxu0 %v1883
      %1995 = vmatprep.subr.mxu0 0.0
      %1996 = vmatpush2.msra.mxu0 0.0
      %1997 = vmatprep.subr.mxu0 0.0
      %1998 = vmatpush2.msra.mxu0 0.0
      %1999 = vmatprep.subr.mxu0 0.0
      %2000 = vmatpush2.msra.mxu0 0.0
      %2001 = vmatprep.subr.mxu0 0.0
      %2002 = vmatpush2.msra.mxu0 0.0
      %2003 = vmatprep.subr.mxu0 0.0
      %2004 = vmatpush2.msra.mxu0 0.0
      %2005 = vmatprep.subr.mxu0 0.0
      %2006 = vmatpush2.msra.mxu0 0.0
      %2007 = vmatprep.subr.mxu0 0.0
      %2008 = vmatpush2.msra.mxu0 0.0
      %2009 = vmatprep.subr.mxu0 0.0
      %2010 = vmatpush2.msra.mxu0 0.0
      %2011 = vmatprep.subr.mxu0 0.0
      %2012 = vmatpush2.msra.mxu0 0.0
      %2013 = vmatprep.subr.mxu0 0.0
      %2014 = vmatpush2.msra.mxu0 0.0
      %2015 = vmatprep.subr.mxu0 0.0
      %2016 = vmatpush2.msra.mxu0 0.0
      %2017 = vmatprep.subr.mxu0 0.0
      %2018 = vmatpush2.msra.mxu0 0.0
      %2019 = vmatprep.subr.mxu0 0.0
      %2020 = vmatpush2.msra.mxu0 0.0
      %2021 = vmatprep.subr.mxu0 0.0
      %2022 = vmatpush2.msra.mxu0 0.0
      %2023 = vmatprep.subr.mxu0 0.0
      %2024 = vmatpush2.msra.mxu0 0.0
      %2025 = vmatprep.subr.mxu0 0.0
      %2026 = vmatpush2.msra.mxu0 0.0
      %2027 = vmatprep.mubr.f32.mxu0 0.0
      %2028 = vmatmul.mubr.f32.gmra.mxu0 %v1890
      %v2029 = vpop.f32.mrf.mxu0
      %v2030 = vadd.f32 0.0, %v2029
      %v2031 = vpop.f32.mrf.mxu0
      %v2032 = vadd.f32 0.0, %v2031
      %2033 = vdwg.mxu0
      %v2034 = vadd.f32 %v1864, %v1959
      %v2035 = vadd.f32 %v1865, %v1961
      %v2036 = vadd.f32 %v1866, %v2030
      %v2037 = vadd.f32 %v1867, %v2032
      %s2038 = scalar_lea.vmem %s1, 88
      %v2039 = vld [vmem:[%s2038] sm:$0xff]
      %2040 = vrot.lane.b32.xlu0 %v171, 67
      %v2041 = vpop.permute.xlu0 %2040
      %2042 = vrot.lane.b32.xlu0 %v172, 67
      %v2043 = vpop.permute.xlu0 %2042
      %2044 = vrot.lane.b32.xlu0 %v173, 67
      %v2045 = vpop.permute.xlu0 %2044
      %2046 = vrot.lane.b32.xlu0 %v174, 67
      %v2047 = vpop.permute.xlu0 %2046
      %2048 = vrot.lane.b32.xlu0 %v175, 67
      %v2049 = vpop.permute.xlu0 %2048
      %vm2050 = vcmask 547840
      %v2051 = vsel %vm2050, %v2041, %v2043
      %v2052 = vsel %vm2050, %v2043, %v2045
      %v2053 = vsel %vm2050, %v2045, %v2047
      %v2054 = vsel %vm2050, %v2047, %v2049
      %v2060 = vsel %vm183, %v2039, 0
      %2062 = vmatprep.subr.mxu0 0.0
      %2063 = vmatpush1.msra.mxu0 0.0
      %2064 = vmatprep.subr.mxu0 0.0
      %2065 = vmatpush1.msra.mxu0 0.0
      %2066 = vmatprep.subr.mxu0 0.0
      %2067 = vmatpush1.msra.mxu0 0.0
      %2068 = vmatprep.subr.mxu0 0.0
      %2069 = vmatpush1.msra.mxu0 0.0
      %2070 = vmatprep.subr.mxu0 0.0
      %2071 = vmatpush1.msra.mxu0 0.0
      %2072 = vmatprep.subr.mxu0 0.0
      %2073 = vmatpush1.msra.mxu0 0.0
      %2074 = vmatprep.subr.mxu0 0.0
      %2075 = vmatpush1.msra.mxu0 0.0
      %2076 = vmatprep.subr.mxu0 0.0
      %2077 = vmatpush1.msra.mxu0 0.0
      %2078 = vmatprep.subr.mxu0 0.0
      %2079 = vmatpush1.msra.mxu0 0.0
      %2080 = vmatprep.subr.mxu0 0.0
      %2081 = vmatpush1.msra.mxu0 0.0
      %2082 = vmatprep.subr.mxu0 0.0
      %2083 = vmatpush1.msra.mxu0 0.0
      %2084 = vmatprep.subr.mxu0 0.0
      %2085 = vmatpush1.msra.mxu0 0.0
      %2086 = vmatprep.subr.mxu0 0.0
      %2087 = vmatpush1.msra.mxu0 0.0
      %2088 = vmatprep.subr.mxu0 0.0
      %2089 = vmatpush1.msra.mxu0 0.0
      %2090 = vmatprep.subr.mxu0 0.0
      %2091 = vmatpush1.msra.mxu0 0.0
      %2092 = vmatprep.subr.mxu0 %v2052
      %2093 = vmatpush1.msra.mxu0 %v2051
      %2094 = vmatprep.subr.mxu0 0.0
      %2095 = vmatpush2.msra.mxu0 0.0
      %2096 = vmatprep.subr.mxu0 0.0
      %2097 = vmatpush2.msra.mxu0 0.0
      %2098 = vmatprep.subr.mxu0 0.0
      %2099 = vmatpush2.msra.mxu0 0.0
      %2100 = vmatprep.subr.mxu0 0.0
      %2101 = vmatpush2.msra.mxu0 0.0
      %2102 = vmatprep.subr.mxu0 0.0
      %2103 = vmatpush2.msra.mxu0 0.0
      %2104 = vmatprep.subr.mxu0 0.0
      %2105 = vmatpush2.msra.mxu0 0.0
      %2106 = vmatprep.subr.mxu0 0.0
      %2107 = vmatpush2.msra.mxu0 0.0
      %2108 = vmatprep.subr.mxu0 0.0
      %2109 = vmatpush2.msra.mxu0 0.0
      %2110 = vmatprep.subr.mxu0 0.0
      %2111 = vmatpush2.msra.mxu0 0.0
      %2112 = vmatprep.subr.mxu0 0.0
      %2113 = vmatpush2.msra.mxu0 0.0
      %2114 = vmatprep.subr.mxu0 0.0
      %2115 = vmatpush2.msra.mxu0 0.0
      %2116 = vmatprep.subr.mxu0 0.0
      %2117 = vmatpush2.msra.mxu0 0.0
      %2118 = vmatprep.subr.mxu0 0.0
      %2119 = vmatpush2.msra.mxu0 0.0
      %2120 = vmatprep.subr.mxu0 0.0
      %2121 = vmatpush2.msra.mxu0 0.0
      %2122 = vmatprep.subr.mxu0 0.0
      %2123 = vmatpush2.msra.mxu0 0.0
      %2124 = vmatprep.subr.mxu0 0.0
      %2125 = vmatpush2.msra.mxu0 0.0
      %2126 = vmatprep.mubr.f32.mxu0 0.0
      %2127 = vmatmul.mubr.f32.gmra.mxu0 %v2060
      %v2128 = vpop.f32.mrf.mxu0
      %v2129 = vadd.f32 0.0, %v2128
      %v2130 = vpop.f32.mrf.mxu0
      %v2131 = vadd.f32 0.0, %v2130
      %2132 = vdwg.mxu0
      %2133 = vmatprep.subr.mxu0 0.0
      %2134 = vmatpush1.msra.mxu0 0.0
      %2135 = vmatprep.subr.mxu0 0.0
      %2136 = vmatpush1.msra.mxu0 0.0
      %2137 = vmatprep.subr.mxu0 0.0
      %2138 = vmatpush1.msra.mxu0 0.0
      %2139 = vmatprep.subr.mxu0 0.0
      %2140 = vmatpush1.msra.mxu0 0.0
      %2141 = vmatprep.subr.mxu0 0.0
      %2142 = vmatpush1.msra.mxu0 0.0
      %2143 = vmatprep.subr.mxu0 0.0
      %2144 = vmatpush1.msra.mxu0 0.0
      %2145 = vmatprep.subr.mxu0 0.0
      %2146 = vmatpush1.msra.mxu0 0.0
      %2147 = vmatprep.subr.mxu0 0.0
      %2148 = vmatpush1.msra.mxu0 0.0
      %2149 = vmatprep.subr.mxu0 0.0
      %2150 = vmatpush1.msra.mxu0 0.0
      %2151 = vmatprep.subr.mxu0 0.0
      %2152 = vmatpush1.msra.mxu0 0.0
      %2153 = vmatprep.subr.mxu0 0.0
      %2154 = vmatpush1.msra.mxu0 0.0
      %2155 = vmatprep.subr.mxu0 0.0
      %2156 = vmatpush1.msra.mxu0 0.0
      %2157 = vmatprep.subr.mxu0 0.0
      %2158 = vmatpush1.msra.mxu0 0.0
      %2159 = vmatprep.subr.mxu0 0.0
      %2160 = vmatpush1.msra.mxu0 0.0
      %2161 = vmatprep.subr.mxu0 0.0
      %2162 = vmatpush1.msra.mxu0 0.0
      %2163 = vmatprep.subr.mxu0 %v2054
      %2164 = vmatpush1.msra.mxu0 %v2053
      %2165 = vmatprep.subr.mxu0 0.0
      %2166 = vmatpush2.msra.mxu0 0.0
      %2167 = vmatprep.subr.mxu0 0.0
      %2168 = vmatpush2.msra.mxu0 0.0
      %2169 = vmatprep.subr.mxu0 0.0
      %2170 = vmatpush2.msra.mxu0 0.0
      %2171 = vmatprep.subr.mxu0 0.0
      %2172 = vmatpush2.msra.mxu0 0.0
      %2173 = vmatprep.subr.mxu0 0.0
      %2174 = vmatpush2.msra.mxu0 0.0
      %2175 = vmatprep.subr.mxu0 0.0
      %2176 = vmatpush2.msra.mxu0 0.0
      %2177 = vmatprep.subr.mxu0 0.0
      %2178 = vmatpush2.msra.mxu0 0.0
      %2179 = vmatprep.subr.mxu0 0.0
      %2180 = vmatpush2.msra.mxu0 0.0
      %2181 = vmatprep.subr.mxu0 0.0
      %2182 = vmatpush2.msra.mxu0 0.0
      %2183 = vmatprep.subr.mxu0 0.0
      %2184 = vmatpush2.msra.mxu0 0.0
      %2185 = vmatprep.subr.mxu0 0.0
      %2186 = vmatpush2.msra.mxu0 0.0
      %2187 = vmatprep.subr.mxu0 0.0
      %2188 = vmatpush2.msra.mxu0 0.0
      %2189 = vmatprep.subr.mxu0 0.0
      %2190 = vmatpush2.msra.mxu0 0.0
      %2191 = vmatprep.subr.mxu0 0.0
      %2192 = vmatpush2.msra.mxu0 0.0
      %2193 = vmatprep.subr.mxu0 0.0
      %2194 = vmatpush2.msra.mxu0 0.0
      %2195 = vmatprep.subr.mxu0 0.0
      %2196 = vmatpush2.msra.mxu0 0.0
      %2197 = vmatprep.mubr.f32.mxu0 0.0
      %2198 = vmatmul.mubr.f32.gmra.mxu0 %v2060
      %v2199 = vpop.f32.mrf.mxu0
      %v2200 = vadd.f32 0.0, %v2199
      %v2201 = vpop.f32.mrf.mxu0
      %v2202 = vadd.f32 0.0, %v2201
      %2203 = vdwg.mxu0
      %v2204 = vadd.f32 %v2034, %v2129
      %v2205 = vadd.f32 %v2035, %v2131
      %v2206 = vadd.f32 %v2036, %v2200
      %v2207 = vadd.f32 %v2037, %v2202
      %s2208 = scalar_lea.vmem %s1, 96
      %v2209 = vld [vmem:[%s2208] sm:$0xff]
      %2210 = vrot.lane.b32.xlu0 %v171, 66
      %v2211 = vpop.permute.xlu0 %2210
      %2212 = vrot.lane.b32.xlu0 %v172, 66
      %v2213 = vpop.permute.xlu0 %2212
      %2214 = vrot.lane.b32.xlu0 %v173, 66
      %v2215 = vpop.permute.xlu0 %2214
      %2216 = vrot.lane.b32.xlu0 %v174, 66
      %v2217 = vpop.permute.xlu0 %2216
      %2218 = vrot.lane.b32.xlu0 %v175, 66
      %v2219 = vpop.permute.xlu0 %2218
      %vm2220 = vcmask 539648
      %v2221 = vsel %vm2220, %v2211, %v2213
      %v2222 = vsel %vm2220, %v2213, %v2215
      %v2223 = vsel %vm2220, %v2215, %v2217
      %v2224 = vsel %vm2220, %v2217, %v2219
      %v2230 = vsel %vm183, %v2209, 0
      %2232 = vmatprep.subr.mxu0 0.0
      %2233 = vmatpush1.msra.mxu0 0.0
      %2234 = vmatprep.subr.mxu0 0.0
      %2235 = vmatpush1.msra.mxu0 0.0
      %2236 = vmatprep.subr.mxu0 0.0
      %2237 = vmatpush1.msra.mxu0 0.0
      %2238 = vmatprep.subr.mxu0 0.0
      %2239 = vmatpush1.msra.mxu0 0.0
      %2240 = vmatprep.subr.mxu0 0.0
      %2241 = vmatpush1.msra.mxu0 0.0
      %2242 = vmatprep.subr.mxu0 0.0
      %2243 = vmatpush1.msra.mxu0 0.0
      %2244 = vmatprep.subr.mxu0 0.0
      %2245 = vmatpush1.msra.mxu0 0.0
      %2246 = vmatprep.subr.mxu0 0.0
      %2247 = vmatpush1.msra.mxu0 0.0
      %2248 = vmatprep.subr.mxu0 0.0
      %2249 = vmatpush1.msra.mxu0 0.0
      %2250 = vmatprep.subr.mxu0 0.0
      %2251 = vmatpush1.msra.mxu0 0.0
      %2252 = vmatprep.subr.mxu0 0.0
      %2253 = vmatpush1.msra.mxu0 0.0
      %2254 = vmatprep.subr.mxu0 0.0
      %2255 = vmatpush1.msra.mxu0 0.0
      %2256 = vmatprep.subr.mxu0 0.0
      %2257 = vmatpush1.msra.mxu0 0.0
      %2258 = vmatprep.subr.mxu0 0.0
      %2259 = vmatpush1.msra.mxu0 0.0
      %2260 = vmatprep.subr.mxu0 0.0
      %2261 = vmatpush1.msra.mxu0 0.0
      %2262 = vmatprep.subr.mxu0 %v2222
      %2263 = vmatpush1.msra.mxu0 %v2221
      %2264 = vmatprep.subr.mxu0 0.0
      %2265 = vmatpush2.msra.mxu0 0.0
      %2266 = vmatprep.subr.mxu0 0.0
      %2267 = vmatpush2.msra.mxu0 0.0
      %2268 = vmatprep.subr.mxu0 0.0
      %2269 = vmatpush2.msra.mxu0 0.0
      %2270 = vmatprep.subr.mxu0 0.0
      %2271 = vmatpush2.msra.mxu0 0.0
      %2272 = vmatprep.subr.mxu0 0.0
      %2273 = vmatpush2.msra.mxu0 0.0
      %2274 = vmatprep.subr.mxu0 0.0
      %2275 = vmatpush2.msra.mxu0 0.0
      %2276 = vmatprep.subr.mxu0 0.0
      %2277 = vmatpush2.msra.mxu0 0.0
      %2278 = vmatprep.subr.mxu0 0.0
      %2279 = vmatpush2.msra.mxu0 0.0
      %2280 = vmatprep.subr.mxu0 0.0
      %2281 = vmatpush2.msra.mxu0 0.0
      %2282 = vmatprep.subr.mxu0 0.0
      %2283 = vmatpush2.msra.mxu0 0.0
      %2284 = vmatprep.subr.mxu0 0.0
      %2285 = vmatpush2.msra.mxu0 0.0
      %2286 = vmatprep.subr.mxu0 0.0
      %2287 = vmatpush2.msra.mxu0 0.0
      %2288 = vmatprep.subr.mxu0 0.0
      %2289 = vmatpush2.msra.mxu0 0.0
      %2290 = vmatprep.subr.mxu0 0.0
      %2291 = vmatpush2.msra.mxu0 0.0
      %2292 = vmatprep.subr.mxu0 0.0
      %2293 = vmatpush2.msra.mxu0 0.0
      %2294 = vmatprep.subr.mxu0 0.0
      %2295 = vmatpush2.msra.mxu0 0.0
      %2296 = vmatprep.mubr.f32.mxu0 0.0
      %2297 = vmatmul.mubr.f32.gmra.mxu0 %v2230
      %v2298 = vpop.f32.mrf.mxu0
      %v2299 = vadd.f32 0.0, %v2298
      %v2300 = vpop.f32.mrf.mxu0
      %v2301 = vadd.f32 0.0, %v2300
      %2302 = vdwg.mxu0
      %2303 = vmatprep.subr.mxu0 0.0
      %2304 = vmatpush1.msra.mxu0 0.0
      %2305 = vmatprep.subr.mxu0 0.0
      %2306 = vmatpush1.msra.mxu0 0.0
      %2307 = vmatprep.subr.mxu0 0.0
      %2308 = vmatpush1.msra.mxu0 0.0
      %2309 = vmatprep.subr.mxu0 0.0
      %2310 = vmatpush1.msra.mxu0 0.0
      %2311 = vmatprep.subr.mxu0 0.0
      %2312 = vmatpush1.msra.mxu0 0.0
      %2313 = vmatprep.subr.mxu0 0.0
      %2314 = vmatpush1.msra.mxu0 0.0
      %2315 = vmatprep.subr.mxu0 0.0
      %2316 = vmatpush1.msra.mxu0 0.0
      %2317 = vmatprep.subr.mxu0 0.0
      %2318 = vmatpush1.msra.mxu0 0.0
      %2319 = vmatprep.subr.mxu0 0.0
      %2320 = vmatpush1.msra.mxu0 0.0
      %2321 = vmatprep.subr.mxu0 0.0
      %2322 = vmatpush1.msra.mxu0 0.0
      %2323 = vmatprep.subr.mxu0 0.0
      %2324 = vmatpush1.msra.mxu0 0.0
      %2325 = vmatprep.subr.mxu0 0.0
      %2326 = vmatpush1.msra.mxu0 0.0
      %2327 = vmatprep.subr.mxu0 0.0
      %2328 = vmatpush1.msra.mxu0 0.0
      %2329 = vmatprep.subr.mxu0 0.0
      %2330 = vmatpush1.msra.mxu0 0.0
      %2331 = vmatprep.subr.mxu0 0.0
      %2332 = vmatpush1.msra.mxu0 0.0
      %2333 = vmatprep.subr.mxu0 %v2224
      %2334 = vmatpush1.msra.mxu0 %v2223
      %2335 = vmatprep.subr.mxu0 0.0
      %2336 = vmatpush2.msra.mxu0 0.0
      %2337 = vmatprep.subr.mxu0 0.0
      %2338 = vmatpush2.msra.mxu0 0.0
      %2339 = vmatprep.subr.mxu0 0.0
      %2340 = vmatpush2.msra.mxu0 0.0
      %2341 = vmatprep.subr.mxu0 0.0
      %2342 = vmatpush2.msra.mxu0 0.0
      %2343 = vmatprep.subr.mxu0 0.0
      %2344 = vmatpush2.msra.mxu0 0.0
      %2345 = vmatprep.subr.mxu0 0.0
      %2346 = vmatpush2.msra.mxu0 0.0
      %2347 = vmatprep.subr.mxu0 0.0
      %2348 = vmatpush2.msra.mxu0 0.0
      %2349 = vmatprep.subr.mxu0 0.0
      %2350 = vmatpush2.msra.mxu0 0.0
      %2351 = vmatprep.subr.mxu0 0.0
      %2352 = vmatpush2.msra.mxu0 0.0
      %2353 = vmatprep.subr.mxu0 0.0
      %2354 = vmatpush2.msra.mxu0 0.0
      %2355 = vmatprep.subr.mxu0 0.0
      %2356 = vmatpush2.msra.mxu0 0.0
      %2357 = vmatprep.subr.mxu0 0.0
      %2358 = vmatpush2.msra.mxu0 0.0
      %2359 = vmatprep.subr.mxu0 0.0
      %2360 = vmatpush2.msra.mxu0 0.0
      %2361 = vmatprep.subr.mxu0 0.0
      %2362 = vmatpush2.msra.mxu0 0.0
      %2363 = vmatprep.subr.mxu0 0.0
      %2364 = vmatpush2.msra.mxu0 0.0
      %2365 = vmatprep.subr.mxu0 0.0
      %2366 = vmatpush2.msra.mxu0 0.0
      %2367 = vmatprep.mubr.f32.mxu0 0.0
      %2368 = vmatmul.mubr.f32.gmra.mxu0 %v2230
      %v2369 = vpop.f32.mrf.mxu0
      %v2370 = vadd.f32 0.0, %v2369
      %v2371 = vpop.f32.mrf.mxu0
      %v2372 = vadd.f32 0.0, %v2371
      %2373 = vdwg.mxu0
      %v2374 = vadd.f32 %v2204, %v2299
      %v2375 = vadd.f32 %v2205, %v2301
      %v2376 = vadd.f32 %v2206, %v2370
      %v2377 = vadd.f32 %v2207, %v2372
      %s2378 = scalar_lea.vmem %s1, 104
      %v2379 = vld [vmem:[%s2378] sm:$0xff]
      %2380 = vrot.lane.b32.xlu0 %v171, 65
      %v2381 = vpop.permute.xlu0 %2380
      %2382 = vrot.lane.b32.xlu0 %v172, 65
      %v2383 = vpop.permute.xlu0 %2382
      %2384 = vrot.lane.b32.xlu0 %v173, 65
      %v2385 = vpop.permute.xlu0 %2384
      %2386 = vrot.lane.b32.xlu0 %v174, 65
      %v2387 = vpop.permute.xlu0 %2386
      %2388 = vrot.lane.b32.xlu0 %v175, 65
      %v2389 = vpop.permute.xlu0 %2388
      %vm2390 = vcmask 531456
      %v2391 = vsel %vm2390, %v2381, %v2383
      %v2392 = vsel %vm2390, %v2383, %v2385
      %v2393 = vsel %vm2390, %v2385, %v2387
      %v2394 = vsel %vm2390, %v2387, %v2389
      %v2400 = vsel %vm183, %v2379, 0
      %2402 = vmatprep.subr.mxu0 0.0
      %2403 = vmatpush1.msra.mxu0 0.0
      %2404 = vmatprep.subr.mxu0 0.0
      %2405 = vmatpush1.msra.mxu0 0.0
      %2406 = vmatprep.subr.mxu0 0.0
      %2407 = vmatpush1.msra.mxu0 0.0
      %2408 = vmatprep.subr.mxu0 0.0
      %2409 = vmatpush1.msra.mxu0 0.0
      %2410 = vmatprep.subr.mxu0 0.0
      %2411 = vmatpush1.msra.mxu0 0.0
      %2412 = vmatprep.subr.mxu0 0.0
      %2413 = vmatpush1.msra.mxu0 0.0
      %2414 = vmatprep.subr.mxu0 0.0
      %2415 = vmatpush1.msra.mxu0 0.0
      %2416 = vmatprep.subr.mxu0 0.0
      %2417 = vmatpush1.msra.mxu0 0.0
      %2418 = vmatprep.subr.mxu0 0.0
      %2419 = vmatpush1.msra.mxu0 0.0
      %2420 = vmatprep.subr.mxu0 0.0
      %2421 = vmatpush1.msra.mxu0 0.0
      %2422 = vmatprep.subr.mxu0 0.0
      %2423 = vmatpush1.msra.mxu0 0.0
      %2424 = vmatprep.subr.mxu0 0.0
      %2425 = vmatpush1.msra.mxu0 0.0
      %2426 = vmatprep.subr.mxu0 0.0
      %2427 = vmatpush1.msra.mxu0 0.0
      %2428 = vmatprep.subr.mxu0 0.0
      %2429 = vmatpush1.msra.mxu0 0.0
      %2430 = vmatprep.subr.mxu0 0.0
      %2431 = vmatpush1.msra.mxu0 0.0
      %2432 = vmatprep.subr.mxu0 %v2392
      %2433 = vmatpush1.msra.mxu0 %v2391
      %2434 = vmatprep.subr.mxu0 0.0
      %2435 = vmatpush2.msra.mxu0 0.0
      %2436 = vmatprep.subr.mxu0 0.0
      %2437 = vmatpush2.msra.mxu0 0.0
      %2438 = vmatprep.subr.mxu0 0.0
      %2439 = vmatpush2.msra.mxu0 0.0
      %2440 = vmatprep.subr.mxu0 0.0
      %2441 = vmatpush2.msra.mxu0 0.0
      %2442 = vmatprep.subr.mxu0 0.0
      %2443 = vmatpush2.msra.mxu0 0.0
      %2444 = vmatprep.subr.mxu0 0.0
      %2445 = vmatpush2.msra.mxu0 0.0
      %2446 = vmatprep.subr.mxu0 0.0
      %2447 = vmatpush2.msra.mxu0 0.0
      %2448 = vmatprep.subr.mxu0 0.0
      %2449 = vmatpush2.msra.mxu0 0.0
      %2450 = vmatprep.subr.mxu0 0.0
      %2451 = vmatpush2.msra.mxu0 0.0
      %2452 = vmatprep.subr.mxu0 0.0
      %2453 = vmatpush2.msra.mxu0 0.0
      %2454 = vmatprep.subr.mxu0 0.0
      %2455 = vmatpush2.msra.mxu0 0.0
      %2456 = vmatprep.subr.mxu0 0.0
      %2457 = vmatpush2.msra.mxu0 0.0
      %2458 = vmatprep.subr.mxu0 0.0
      %2459 = vmatpush2.msra.mxu0 0.0
      %2460 = vmatprep.subr.mxu0 0.0
      %2461 = vmatpush2.msra.mxu0 0.0
      %2462 = vmatprep.subr.mxu0 0.0
      %2463 = vmatpush2.msra.mxu0 0.0
      %2464 = vmatprep.subr.mxu0 0.0
      %2465 = vmatpush2.msra.mxu0 0.0
      %2466 = vmatprep.mubr.f32.mxu0 0.0
      %2467 = vmatmul.mubr.f32.gmra.mxu0 %v2400
      %v2468 = vpop.f32.mrf.mxu0
      %v2469 = vadd.f32 0.0, %v2468
      %v2470 = vpop.f32.mrf.mxu0
      %v2471 = vadd.f32 0.0, %v2470
      %2472 = vdwg.mxu0
      %2473 = vmatprep.subr.mxu0 0.0
      %2474 = vmatpush1.msra.mxu0 0.0
      %2475 = vmatprep.subr.mxu0 0.0
      %2476 = vmatpush1.msra.mxu0 0.0
      %2477 = vmatprep.subr.mxu0 0.0
      %2478 = vmatpush1.msra.mxu0 0.0
      %2479 = vmatprep.subr.mxu0 0.0
      %2480 = vmatpush1.msra.mxu0 0.0
      %2481 = vmatprep.subr.mxu0 0.0
      %2482 = vmatpush1.msra.mxu0 0.0
      %2483 = vmatprep.subr.mxu0 0.0
      %2484 = vmatpush1.msra.mxu0 0.0
      %2485 = vmatprep.subr.mxu0 0.0
      %2486 = vmatpush1.msra.mxu0 0.0
      %2487 = vmatprep.subr.mxu0 0.0
      %2488 = vmatpush1.msra.mxu0 0.0
      %2489 = vmatprep.subr.mxu0 0.0
      %2490 = vmatpush1.msra.mxu0 0.0
      %2491 = vmatprep.subr.mxu0 0.0
      %2492 = vmatpush1.msra.mxu0 0.0
      %2493 = vmatprep.subr.mxu0 0.0
      %2494 = vmatpush1.msra.mxu0 0.0
      %2495 = vmatprep.subr.mxu0 0.0
      %2496 = vmatpush1.msra.mxu0 0.0
      %2497 = vmatprep.subr.mxu0 0.0
      %2498 = vmatpush1.msra.mxu0 0.0
      %2499 = vmatprep.subr.mxu0 0.0
      %2500 = vmatpush1.msra.mxu0 0.0
      %2501 = vmatprep.subr.mxu0 0.0
      %2502 = vmatpush1.msra.mxu0 0.0
      %2503 = vmatprep.subr.mxu0 %v2394
      %2504 = vmatpush1.msra.mxu0 %v2393
      %2505 = vmatprep.subr.mxu0 0.0
      %2506 = vmatpush2.msra.mxu0 0.0
      %2507 = vmatprep.subr.mxu0 0.0
      %2508 = vmatpush2.msra.mxu0 0.0
      %2509 = vmatprep.subr.mxu0 0.0
      %2510 = vmatpush2.msra.mxu0 0.0
      %2511 = vmatprep.subr.mxu0 0.0
      %2512 = vmatpush2.msra.mxu0 0.0
      %2513 = vmatprep.subr.mxu0 0.0
      %2514 = vmatpush2.msra.mxu0 0.0
      %2515 = vmatprep.subr.mxu0 0.0
      %2516 = vmatpush2.msra.mxu0 0.0
      %2517 = vmatprep.subr.mxu0 0.0
      %2518 = vmatpush2.msra.mxu0 0.0
      %2519 = vmatprep.subr.mxu0 0.0
      %2520 = vmatpush2.msra.mxu0 0.0
      %2521 = vmatprep.subr.mxu0 0.0
      %2522 = vmatpush2.msra.mxu0 0.0
      %2523 = vmatprep.subr.mxu0 0.0
      %2524 = vmatpush2.msra.mxu0 0.0
      %2525 = vmatprep.subr.mxu0 0.0
      %2526 = vmatpush2.msra.mxu0 0.0
      %2527 = vmatprep.subr.mxu0 0.0
      %2528 = vmatpush2.msra.mxu0 0.0
      %2529 = vmatprep.subr.mxu0 0.0
      %2530 = vmatpush2.msra.mxu0 0.0
      %2531 = vmatprep.subr.mxu0 0.0
      %2532 = vmatpush2.msra.mxu0 0.0
      %2533 = vmatprep.subr.mxu0 0.0
      %2534 = vmatpush2.msra.mxu0 0.0
      %2535 = vmatprep.subr.mxu0 0.0
      %2536 = vmatpush2.msra.mxu0 0.0
      %2537 = vmatprep.mubr.f32.mxu0 0.0
      %2538 = vmatmul.mubr.f32.gmra.mxu0 %v2400
      %v2539 = vpop.f32.mrf.mxu0
      %v2540 = vadd.f32 0.0, %v2539
      %v2541 = vpop.f32.mrf.mxu0
      %v2542 = vadd.f32 0.0, %v2541
      %2543 = vdwg.mxu0
      %v2544 = vadd.f32 %v2374, %v2469
      %v2545 = vadd.f32 %v2375, %v2471
      %v2546 = vadd.f32 %v2376, %v2540
      %v2547 = vadd.f32 %v2377, %v2542
      %s2548 = scalar_lea.vmem %s1, 112
      %v2549 = vld [vmem:[%s2548] sm:$0xff]
      %2550 = vrot.lane.b32.xlu0 %v171, 48
      %v2551 = vpop.permute.xlu0 %2550
      %2552 = vrot.lane.b32.xlu0 %v172, 48
      %v2553 = vpop.permute.xlu0 %2552
      %2554 = vrot.lane.b32.xlu0 %v173, 48
      %v2555 = vpop.permute.xlu0 %2554
      %2556 = vrot.lane.b32.xlu0 %v174, 48
      %v2557 = vpop.permute.xlu0 %2556
      %2558 = vrot.lane.b32.xlu0 %v175, 48
      %v2559 = vpop.permute.xlu0 %2558
      %vm2560 = vcmask 392192
      %v2561 = vsel %vm2560, %v2551, %v2553
      %v2562 = vsel %vm2560, %v2553, %v2555
      %v2563 = vsel %vm2560, %v2555, %v2557
      %v2564 = vsel %vm2560, %v2557, %v2559
      %v2570 = vsel %vm183, %v2549, 0
      %2572 = vmatprep.subr.mxu0 0.0
      %2573 = vmatpush1.msra.mxu0 0.0
      %2574 = vmatprep.subr.mxu0 0.0
      %2575 = vmatpush1.msra.mxu0 0.0
      %2576 = vmatprep.subr.mxu0 0.0
      %2577 = vmatpush1.msra.mxu0 0.0
      %2578 = vmatprep.subr.mxu0 0.0
      %2579 = vmatpush1.msra.mxu0 0.0
      %2580 = vmatprep.subr.mxu0 0.0
      %2581 = vmatpush1.msra.mxu0 0.0
      %2582 = vmatprep.subr.mxu0 0.0
      %2583 = vmatpush1.msra.mxu0 0.0
      %2584 = vmatprep.subr.mxu0 0.0
      %2585 = vmatpush1.msra.mxu0 0.0
      %2586 = vmatprep.subr.mxu0 0.0
      %2587 = vmatpush1.msra.mxu0 0.0
      %2588 = vmatprep.subr.mxu0 0.0
      %2589 = vmatpush1.msra.mxu0 0.0
      %2590 = vmatprep.subr.mxu0 0.0
      %2591 = vmatpush1.msra.mxu0 0.0
      %2592 = vmatprep.subr.mxu0 0.0
      %2593 = vmatpush1.msra.mxu0 0.0
      %2594 = vmatprep.subr.mxu0 0.0
      %2595 = vmatpush1.msra.mxu0 0.0
      %2596 = vmatprep.subr.mxu0 0.0
      %2597 = vmatpush1.msra.mxu0 0.0
      %2598 = vmatprep.subr.mxu0 0.0
      %2599 = vmatpush1.msra.mxu0 0.0
      %2600 = vmatprep.subr.mxu0 0.0
      %2601 = vmatpush1.msra.mxu0 0.0
      %2602 = vmatprep.subr.mxu0 %v2562
      %2603 = vmatpush1.msra.mxu0 %v2561
      %2604 = vmatprep.subr.mxu0 0.0
      %2605 = vmatpush2.msra.mxu0 0.0
      %2606 = vmatprep.subr.mxu0 0.0
      %2607 = vmatpush2.msra.mxu0 0.0
      %2608 = vmatprep.subr.mxu0 0.0
      %2609 = vmatpush2.msra.mxu0 0.0
      %2610 = vmatprep.subr.mxu0 0.0
      %2611 = vmatpush2.msra.mxu0 0.0
      %2612 = vmatprep.subr.mxu0 0.0
      %2613 = vmatpush2.msra.mxu0 0.0
      %2614 = vmatprep.subr.mxu0 0.0
      %2615 = vmatpush2.msra.mxu0 0.0
      %2616 = vmatprep.subr.mxu0 0.0
      %2617 = vmatpush2.msra.mxu0 0.0
      %2618 = vmatprep.subr.mxu0 0.0
      %2619 = vmatpush2.msra.mxu0 0.0
      %2620 = vmatprep.subr.mxu0 0.0
      %2621 = vmatpush2.msra.mxu0 0.0
      %2622 = vmatprep.subr.mxu0 0.0
      %2623 = vmatpush2.msra.mxu0 0.0
      %2624 = vmatprep.subr.mxu0 0.0
      %2625 = vmatpush2.msra.mxu0 0.0
      %2626 = vmatprep.subr.mxu0 0.0
      %2627 = vmatpush2.msra.mxu0 0.0
      %2628 = vmatprep.subr.mxu0 0.0
      %2629 = vmatpush2.msra.mxu0 0.0
      %2630 = vmatprep.subr.mxu0 0.0
      %2631 = vmatpush2.msra.mxu0 0.0
      %2632 = vmatprep.subr.mxu0 0.0
      %2633 = vmatpush2.msra.mxu0 0.0
      %2634 = vmatprep.subr.mxu0 0.0
      %2635 = vmatpush2.msra.mxu0 0.0
      %2636 = vmatprep.mubr.f32.mxu0 0.0
      %2637 = vmatmul.mubr.f32.gmra.mxu0 %v2570
      %v2638 = vpop.f32.mrf.mxu0
      %v2639 = vadd.f32 0.0, %v2638
      %v2640 = vpop.f32.mrf.mxu0
      %v2641 = vadd.f32 0.0, %v2640
      %2642 = vdwg.mxu0
      %2643 = vmatprep.subr.mxu0 0.0
      %2644 = vmatpush1.msra.mxu0 0.0
      %2645 = vmatprep.subr.mxu0 0.0
      %2646 = vmatpush1.msra.mxu0 0.0
      %2647 = vmatprep.subr.mxu0 0.0
      %2648 = vmatpush1.msra.mxu0 0.0
      %2649 = vmatprep.subr.mxu0 0.0
      %2650 = vmatpush1.msra.mxu0 0.0
      %2651 = vmatprep.subr.mxu0 0.0
      %2652 = vmatpush1.msra.mxu0 0.0
      %2653 = vmatprep.subr.mxu0 0.0
      %2654 = vmatpush1.msra.mxu0 0.0
      %2655 = vmatprep.subr.mxu0 0.0
      %2656 = vmatpush1.msra.mxu0 0.0
      %2657 = vmatprep.subr.mxu0 0.0
      %2658 = vmatpush1.msra.mxu0 0.0
      %2659 = vmatprep.subr.mxu0 0.0
      %2660 = vmatpush1.msra.mxu0 0.0
      %2661 = vmatprep.subr.mxu0 0.0
      %2662 = vmatpush1.msra.mxu0 0.0
      %2663 = vmatprep.subr.mxu0 0.0
      %2664 = vmatpush1.msra.mxu0 0.0
      %2665 = vmatprep.subr.mxu0 0.0
      %2666 = vmatpush1.msra.mxu0 0.0
      %2667 = vmatprep.subr.mxu0 0.0
      %2668 = vmatpush1.msra.mxu0 0.0
      %2669 = vmatprep.subr.mxu0 0.0
      %2670 = vmatpush1.msra.mxu0 0.0
      %2671 = vmatprep.subr.mxu0 0.0
      %2672 = vmatpush1.msra.mxu0 0.0
      %2673 = vmatprep.subr.mxu0 %v2564
      %2674 = vmatpush1.msra.mxu0 %v2563
      %2675 = vmatprep.subr.mxu0 0.0
      %2676 = vmatpush2.msra.mxu0 0.0
      %2677 = vmatprep.subr.mxu0 0.0
      %2678 = vmatpush2.msra.mxu0 0.0
      %2679 = vmatprep.subr.mxu0 0.0
      %2680 = vmatpush2.msra.mxu0 0.0
      %2681 = vmatprep.subr.mxu0 0.0
      %2682 = vmatpush2.msra.mxu0 0.0
      %2683 = vmatprep.subr.mxu0 0.0
      %2684 = vmatpush2.msra.mxu0 0.0
      %2685 = vmatprep.subr.mxu0 0.0
      %2686 = vmatpush2.msra.mxu0 0.0
      %2687 = vmatprep.subr.mxu0 0.0
      %2688 = vmatpush2.msra.mxu0 0.0
      %2689 = vmatprep.subr.mxu0 0.0
      %2690 = vmatpush2.msra.mxu0 0.0
      %2691 = vmatprep.subr.mxu0 0.0
      %2692 = vmatpush2.msra.mxu0 0.0
      %2693 = vmatprep.subr.mxu0 0.0
      %2694 = vmatpush2.msra.mxu0 0.0
      %2695 = vmatprep.subr.mxu0 0.0
      %2696 = vmatpush2.msra.mxu0 0.0
      %2697 = vmatprep.subr.mxu0 0.0
      %2698 = vmatpush2.msra.mxu0 0.0
      %2699 = vmatprep.subr.mxu0 0.0
      %2700 = vmatpush2.msra.mxu0 0.0
      %2701 = vmatprep.subr.mxu0 0.0
      %2702 = vmatpush2.msra.mxu0 0.0
      %2703 = vmatprep.subr.mxu0 0.0
      %2704 = vmatpush2.msra.mxu0 0.0
      %2705 = vmatprep.subr.mxu0 0.0
      %2706 = vmatpush2.msra.mxu0 0.0
      %2707 = vmatprep.mubr.f32.mxu0 0.0
      %2708 = vmatmul.mubr.f32.gmra.mxu0 %v2570
      %v2709 = vpop.f32.mrf.mxu0
      %v2710 = vadd.f32 0.0, %v2709
      %v2711 = vpop.f32.mrf.mxu0
      %v2712 = vadd.f32 0.0, %v2711
      %2713 = vdwg.mxu0
      %v2714 = vadd.f32 %v2544, %v2639
      %v2715 = vadd.f32 %v2545, %v2641
      %v2716 = vadd.f32 %v2546, %v2710
      %v2717 = vadd.f32 %v2547, %v2712
      %s2718 = scalar_lea.vmem %s1, 120
      %v2719 = vld [vmem:[%s2718] sm:$0xff]
      %2720 = vrot.lane.b32.xlu0 %v171, 46
      %v2721 = vpop.permute.xlu0 %2720
      %2722 = vrot.lane.b32.xlu0 %v172, 46
      %v2723 = vpop.permute.xlu0 %2722
      %2724 = vrot.lane.b32.xlu0 %v173, 46
      %v2725 = vpop.permute.xlu0 %2724
      %2726 = vrot.lane.b32.xlu0 %v174, 46
      %v2727 = vpop.permute.xlu0 %2726
      %2728 = vrot.lane.b32.xlu0 %v175, 46
      %v2729 = vpop.permute.xlu0 %2728
      %vm2730 = vcmask 375808
      %v2731 = vsel %vm2730, %v2721, %v2723
      %v2732 = vsel %vm2730, %v2723, %v2725
      %v2733 = vsel %vm2730, %v2725, %v2727
      %v2734 = vsel %vm2730, %v2727, %v2729
      %v2740 = vsel %vm183, %v2719, 0
      %2742 = vmatprep.subr.mxu0 0.0
      %2743 = vmatpush1.msra.mxu0 0.0
      %2744 = vmatprep.subr.mxu0 0.0
      %2745 = vmatpush1.msra.mxu0 0.0
      %2746 = vmatprep.subr.mxu0 0.0
      %2747 = vmatpush1.msra.mxu0 0.0
      %2748 = vmatprep.subr.mxu0 0.0
      %2749 = vmatpush1.msra.mxu0 0.0
      %2750 = vmatprep.subr.mxu0 0.0
      %2751 = vmatpush1.msra.mxu0 0.0
      %2752 = vmatprep.subr.mxu0 0.0
      %2753 = vmatpush1.msra.mxu0 0.0
      %2754 = vmatprep.subr.mxu0 0.0
      %2755 = vmatpush1.msra.mxu0 0.0
      %2756 = vmatprep.subr.mxu0 0.0
      %2757 = vmatpush1.msra.mxu0 0.0
      %2758 = vmatprep.subr.mxu0 0.0
      %2759 = vmatpush1.msra.mxu0 0.0
      %2760 = vmatprep.subr.mxu0 0.0
      %2761 = vmatpush1.msra.mxu0 0.0
      %2762 = vmatprep.subr.mxu0 0.0
      %2763 = vmatpush1.msra.mxu0 0.0
      %2764 = vmatprep.subr.mxu0 0.0
      %2765 = vmatpush1.msra.mxu0 0.0
      %2766 = vmatprep.subr.mxu0 0.0
      %2767 = vmatpush1.msra.mxu0 0.0
      %2768 = vmatprep.subr.mxu0 0.0
      %2769 = vmatpush1.msra.mxu0 0.0
      %2770 = vmatprep.subr.mxu0 0.0
      %2771 = vmatpush1.msra.mxu0 0.0
      %2772 = vmatprep.subr.mxu0 %v2732
      %2773 = vmatpush1.msra.mxu0 %v2731
      %2774 = vmatprep.subr.mxu0 0.0
      %2775 = vmatpush2.msra.mxu0 0.0
      %2776 = vmatprep.subr.mxu0 0.0
      %2777 = vmatpush2.msra.mxu0 0.0
      %2778 = vmatprep.subr.mxu0 0.0
      %2779 = vmatpush2.msra.mxu0 0.0
      %2780 = vmatprep.subr.mxu0 0.0
      %2781 = vmatpush2.msra.mxu0 0.0
      %2782 = vmatprep.subr.mxu0 0.0
      %2783 = vmatpush2.msra.mxu0 0.0
      %2784 = vmatprep.subr.mxu0 0.0
      %2785 = vmatpush2.msra.mxu0 0.0
      %2786 = vmatprep.subr.mxu0 0.0
      %2787 = vmatpush2.msra.mxu0 0.0
      %2788 = vmatprep.subr.mxu0 0.0
      %2789 = vmatpush2.msra.mxu0 0.0
      %2790 = vmatprep.subr.mxu0 0.0
      %2791 = vmatpush2.msra.mxu0 0.0
      %2792 = vmatprep.subr.mxu0 0.0
      %2793 = vmatpush2.msra.mxu0 0.0
      %2794 = vmatprep.subr.mxu0 0.0
      %2795 = vmatpush2.msra.mxu0 0.0
      %2796 = vmatprep.subr.mxu0 0.0
      %2797 = vmatpush2.msra.mxu0 0.0
      %2798 = vmatprep.subr.mxu0 0.0
      %2799 = vmatpush2.msra.mxu0 0.0
      %2800 = vmatprep.subr.mxu0 0.0
      %2801 = vmatpush2.msra.mxu0 0.0
      %2802 = vmatprep.subr.mxu0 0.0
      %2803 = vmatpush2.msra.mxu0 0.0
      %2804 = vmatprep.subr.mxu0 0.0
      %2805 = vmatpush2.msra.mxu0 0.0
      %2806 = vmatprep.mubr.f32.mxu0 0.0
      %2807 = vmatmul.mubr.f32.gmra.mxu0 %v2740
      %v2808 = vpop.f32.mrf.mxu0
      %v2809 = vadd.f32 0.0, %v2808
      %v2810 = vpop.f32.mrf.mxu0
      %v2811 = vadd.f32 0.0, %v2810
      %2812 = vdwg.mxu0
      %2813 = vmatprep.subr.mxu0 0.0
      %2814 = vmatpush1.msra.mxu0 0.0
      %2815 = vmatprep.subr.mxu0 0.0
      %2816 = vmatpush1.msra.mxu0 0.0
      %2817 = vmatprep.subr.mxu0 0.0
      %2818 = vmatpush1.msra.mxu0 0.0
      %2819 = vmatprep.subr.mxu0 0.0
      %2820 = vmatpush1.msra.mxu0 0.0
      %2821 = vmatprep.subr.mxu0 0.0
      %2822 = vmatpush1.msra.mxu0 0.0
      %2823 = vmatprep.subr.mxu0 0.0
      %2824 = vmatpush1.msra.mxu0 0.0
      %2825 = vmatprep.subr.mxu0 0.0
      %2826 = vmatpush1.msra.mxu0 0.0
      %2827 = vmatprep.subr.mxu0 0.0
      %2828 = vmatpush1.msra.mxu0 0.0
      %2829 = vmatprep.subr.mxu0 0.0
      %2830 = vmatpush1.msra.mxu0 0.0
      %2831 = vmatprep.subr.mxu0 0.0
      %2832 = vmatpush1.msra.mxu0 0.0
      %2833 = vmatprep.subr.mxu0 0.0
      %2834 = vmatpush1.msra.mxu0 0.0
      %2835 = vmatprep.subr.mxu0 0.0
      %2836 = vmatpush1.msra.mxu0 0.0
      %2837 = vmatprep.subr.mxu0 0.0
      %2838 = vmatpush1.msra.mxu0 0.0
      %2839 = vmatprep.subr.mxu0 0.0
      %2840 = vmatpush1.msra.mxu0 0.0
      %2841 = vmatprep.subr.mxu0 0.0
      %2842 = vmatpush1.msra.mxu0 0.0
      %2843 = vmatprep.subr.mxu0 %v2734
      %2844 = vmatpush1.msra.mxu0 %v2733
      %2845 = vmatprep.subr.mxu0 0.0
      %2846 = vmatpush2.msra.mxu0 0.0
      %2847 = vmatprep.subr.mxu0 0.0
      %2848 = vmatpush2.msra.mxu0 0.0
      %2849 = vmatprep.subr.mxu0 0.0
      %2850 = vmatpush2.msra.mxu0 0.0
      %2851 = vmatprep.subr.mxu0 0.0
      %2852 = vmatpush2.msra.mxu0 0.0
      %2853 = vmatprep.subr.mxu0 0.0
      %2854 = vmatpush2.msra.mxu0 0.0
      %2855 = vmatprep.subr.mxu0 0.0
      %2856 = vmatpush2.msra.mxu0 0.0
      %2857 = vmatprep.subr.mxu0 0.0
      %2858 = vmatpush2.msra.mxu0 0.0
      %2859 = vmatprep.subr.mxu0 0.0
      %2860 = vmatpush2.msra.mxu0 0.0
      %2861 = vmatprep.subr.mxu0 0.0
      %2862 = vmatpush2.msra.mxu0 0.0
      %2863 = vmatprep.subr.mxu0 0.0
      %2864 = vmatpush2.msra.mxu0 0.0
      %2865 = vmatprep.subr.mxu0 0.0
      %2866 = vmatpush2.msra.mxu0 0.0
      %2867 = vmatprep.subr.mxu0 0.0
      %2868 = vmatpush2.msra.mxu0 0.0
      %2869 = vmatprep.subr.mxu0 0.0
      %2870 = vmatpush2.msra.mxu0 0.0
      %2871 = vmatprep.subr.mxu0 0.0
      %2872 = vmatpush2.msra.mxu0 0.0
      %2873 = vmatprep.subr.mxu0 0.0
      %2874 = vmatpush2.msra.mxu0 0.0
      %2875 = vmatprep.subr.mxu0 0.0
      %2876 = vmatpush2.msra.mxu0 0.0
      %2877 = vmatprep.mubr.f32.mxu0 0.0
      %2878 = vmatmul.mubr.f32.gmra.mxu0 %v2740
      %v2879 = vpop.f32.mrf.mxu0
      %v2880 = vadd.f32 0.0, %v2879
      %v2881 = vpop.f32.mrf.mxu0
      %v2882 = vadd.f32 0.0, %v2881
      %2883 = vdwg.mxu0
      %v2884 = vadd.f32 %v2714, %v2809
      %v2885 = vadd.f32 %v2715, %v2811
      %v2886 = vadd.f32 %v2716, %v2880
      %v2887 = vadd.f32 %v2717, %v2882
      %s2888 = scalar_lea.vmem %s1, 128
      %v2889 = vld [vmem:[%s2888] sm:$0xff]
      %2890 = vrot.lane.b32.xlu0 %v171, 44
      %v2891 = vpop.permute.xlu0 %2890
      %2892 = vrot.lane.b32.xlu0 %v172, 44
      %v2893 = vpop.permute.xlu0 %2892
      %2894 = vrot.lane.b32.xlu0 %v173, 44
      %v2895 = vpop.permute.xlu0 %2894
      %2896 = vrot.lane.b32.xlu0 %v174, 44
      %v2897 = vpop.permute.xlu0 %2896
      %2898 = vrot.lane.b32.xlu0 %v175, 44
      %v2899 = vpop.permute.xlu0 %2898
      %vm2900 = vcmask 359424
      %v2901 = vsel %vm2900, %v2891, %v2893
      %v2902 = vsel %vm2900, %v2893, %v2895
      %v2903 = vsel %vm2900, %v2895, %v2897
      %v2904 = vsel %vm2900, %v2897, %v2899
      %v2910 = vsel %vm183, %v2889, 0
      %2912 = vmatprep.subr.mxu0 0.0
      %2913 = vmatpush1.msra.mxu0 0.0
      %2914 = vmatprep.subr.mxu0 0.0
      %2915 = vmatpush1.msra.mxu0 0.0
      %2916 = vmatprep.subr.mxu0 0.0
      %2917 = vmatpush1.msra.mxu0 0.0
      %2918 = vmatprep.subr.mxu0 0.0
      %2919 = vmatpush1.msra.mxu0 0.0
      %2920 = vmatprep.subr.mxu0 0.0
      %2921 = vmatpush1.msra.mxu0 0.0
      %2922 = vmatprep.subr.mxu0 0.0
      %2923 = vmatpush1.msra.mxu0 0.0
      %2924 = vmatprep.subr.mxu0 0.0
      %2925 = vmatpush1.msra.mxu0 0.0
      %2926 = vmatprep.subr.mxu0 0.0
      %2927 = vmatpush1.msra.mxu0 0.0
      %2928 = vmatprep.subr.mxu0 0.0
      %2929 = vmatpush1.msra.mxu0 0.0
      %2930 = vmatprep.subr.mxu0 0.0
      %2931 = vmatpush1.msra.mxu0 0.0
      %2932 = vmatprep.subr.mxu0 0.0
      %2933 = vmatpush1.msra.mxu0 0.0
      %2934 = vmatprep.subr.mxu0 0.0
      %2935 = vmatpush1.msra.mxu0 0.0
      %2936 = vmatprep.subr.mxu0 0.0
      %2937 = vmatpush1.msra.mxu0 0.0
      %2938 = vmatprep.subr.mxu0 0.0
      %2939 = vmatpush1.msra.mxu0 0.0
      %2940 = vmatprep.subr.mxu0 0.0
      %2941 = vmatpush1.msra.mxu0 0.0
      %2942 = vmatprep.subr.mxu0 %v2902
      %2943 = vmatpush1.msra.mxu0 %v2901
      %2944 = vmatprep.subr.mxu0 0.0
      %2945 = vmatpush2.msra.mxu0 0.0
      %2946 = vmatprep.subr.mxu0 0.0
      %2947 = vmatpush2.msra.mxu0 0.0
      %2948 = vmatprep.subr.mxu0 0.0
      %2949 = vmatpush2.msra.mxu0 0.0
      %2950 = vmatprep.subr.mxu0 0.0
      %2951 = vmatpush2.msra.mxu0 0.0
      %2952 = vmatprep.subr.mxu0 0.0
      %2953 = vmatpush2.msra.mxu0 0.0
      %2954 = vmatprep.subr.mxu0 0.0
      %2955 = vmatpush2.msra.mxu0 0.0
      %2956 = vmatprep.subr.mxu0 0.0
      %2957 = vmatpush2.msra.mxu0 0.0
      %2958 = vmatprep.subr.mxu0 0.0
      %2959 = vmatpush2.msra.mxu0 0.0
      %2960 = vmatprep.subr.mxu0 0.0
      %2961 = vmatpush2.msra.mxu0 0.0
      %2962 = vmatprep.subr.mxu0 0.0
      %2963 = vmatpush2.msra.mxu0 0.0
      %2964 = vmatprep.subr.mxu0 0.0
      %2965 = vmatpush2.msra.mxu0 0.0
      %2966 = vmatprep.subr.mxu0 0.0
      %2967 = vmatpush2.msra.mxu0 0.0
      %2968 = vmatprep.subr.mxu0 0.0
      %2969 = vmatpush2.msra.mxu0 0.0
      %2970 = vmatprep.subr.mxu0 0.0
      %2971 = vmatpush2.msra.mxu0 0.0
      %2972 = vmatprep.subr.mxu0 0.0
      %2973 = vmatpush2.msra.mxu0 0.0
      %2974 = vmatprep.subr.mxu0 0.0
      %2975 = vmatpush2.msra.mxu0 0.0
      %2976 = vmatprep.mubr.f32.mxu0 0.0
      %2977 = vmatmul.mubr.f32.gmra.mxu0 %v2910
      %v2978 = vpop.f32.mrf.mxu0
      %v2979 = vadd.f32 0.0, %v2978
      %v2980 = vpop.f32.mrf.mxu0
      %v2981 = vadd.f32 0.0, %v2980
      %2982 = vdwg.mxu0
      %2983 = vmatprep.subr.mxu0 0.0
      %2984 = vmatpush1.msra.mxu0 0.0
      %2985 = vmatprep.subr.mxu0 0.0
      %2986 = vmatpush1.msra.mxu0 0.0
      %2987 = vmatprep.subr.mxu0 0.0
      %2988 = vmatpush1.msra.mxu0 0.0
      %2989 = vmatprep.subr.mxu0 0.0
      %2990 = vmatpush1.msra.mxu0 0.0
      %2991 = vmatprep.subr.mxu0 0.0
      %2992 = vmatpush1.msra.mxu0 0.0
      %2993 = vmatprep.subr.mxu0 0.0
      %2994 = vmatpush1.msra.mxu0 0.0
      %2995 = vmatprep.subr.mxu0 0.0
      %2996 = vmatpush1.msra.mxu0 0.0
      %2997 = vmatprep.subr.mxu0 0.0
      %2998 = vmatpush1.msra.mxu0 0.0
      %2999 = vmatprep.subr.mxu0 0.0
      %3000 = vmatpush1.msra.mxu0 0.0
      %3001 = vmatprep.subr.mxu0 0.0
      %3002 = vmatpush1.msra.mxu0 0.0
      %3003 = vmatprep.subr.mxu0 0.0
      %3004 = vmatpush1.msra.mxu0 0.0
      %3005 = vmatprep.subr.mxu0 0.0
      %3006 = vmatpush1.msra.mxu0 0.0
      %3007 = vmatprep.subr.mxu0 0.0
      %3008 = vmatpush1.msra.mxu0 0.0
      %3009 = vmatprep.subr.mxu0 0.0
      %3010 = vmatpush1.msra.mxu0 0.0
      %3011 = vmatprep.subr.mxu0 0.0
      %3012 = vmatpush1.msra.mxu0 0.0
      %3013 = vmatprep.subr.mxu0 %v2904
      %3014 = vmatpush1.msra.mxu0 %v2903
      %3015 = vmatprep.subr.mxu0 0.0
      %3016 = vmatpush2.msra.mxu0 0.0
      %3017 = vmatprep.subr.mxu0 0.0
      %3018 = vmatpush2.msra.mxu0 0.0
      %3019 = vmatprep.subr.mxu0 0.0
      %3020 = vmatpush2.msra.mxu0 0.0
      %3021 = vmatprep.subr.mxu0 0.0
      %3022 = vmatpush2.msra.mxu0 0.0
      %3023 = vmatprep.subr.mxu0 0.0
      %3024 = vmatpush2.msra.mxu0 0.0
      %3025 = vmatprep.subr.mxu0 0.0
      %3026 = vmatpush2.msra.mxu0 0.0
      %3027 = vmatprep.subr.mxu0 0.0
      %3028 = vmatpush2.msra.mxu0 0.0
      %3029 = vmatprep.subr.mxu0 0.0
      %3030 = vmatpush2.msra.mxu0 0.0
      %3031 = vmatprep.subr.mxu0 0.0
      %3032 = vmatpush2.msra.mxu0 0.0
      %3033 = vmatprep.subr.mxu0 0.0
      %3034 = vmatpush2.msra.mxu0 0.0
      %3035 = vmatprep.subr.mxu0 0.0
      %3036 = vmatpush2.msra.mxu0 0.0
      %3037 = vmatprep.subr.mxu0 0.0
      %3038 = vmatpush2.msra.mxu0 0.0
      %3039 = vmatprep.subr.mxu0 0.0
      %3040 = vmatpush2.msra.mxu0 0.0
      %3041 = vmatprep.subr.mxu0 0.0
      %3042 = vmatpush2.msra.mxu0 0.0
      %3043 = vmatprep.subr.mxu0 0.0
      %3044 = vmatpush2.msra.mxu0 0.0
      %3045 = vmatprep.subr.mxu0 0.0
      %3046 = vmatpush2.msra.mxu0 0.0
      %3047 = vmatprep.mubr.f32.mxu0 0.0
      %3048 = vmatmul.mubr.f32.gmra.mxu0 %v2910
      %v3049 = vpop.f32.mrf.mxu0
      %v3050 = vadd.f32 0.0, %v3049
      %v3051 = vpop.f32.mrf.mxu0
      %v3052 = vadd.f32 0.0, %v3051
      %3053 = vdwg.mxu0
      %v3054 = vadd.f32 %v2884, %v2979
      %v3055 = vadd.f32 %v2885, %v2981
      %v3056 = vadd.f32 %v2886, %v3050
      %v3057 = vadd.f32 %v2887, %v3052
      %vm3058 = vcmp.ge.f32.partialorder %v3054, 0.0
      %vm3059 = vcmp.ge.f32.partialorder %v3055, 0.0
      %vm3060 = vcmp.ge.f32.partialorder %v3056, 0.0
      %vm3061 = vcmp.ge.f32.partialorder %v3057, 0.0
      %v3062 = vmul.f32 %v3054, 0.01
      %v3063 = vmul.f32 %v3055, 0.01
      %v3064 = vmul.f32 %v3056, 0.01
      %v3065 = vmul.f32 %v3057, 0.01
      %v3066 = vsel %vm3058, %v3054, %v3062
      %v3067 = vsel %vm3059, %v3055, %v3063
      %v3068 = vsel %vm3060, %v3056, %v3064
      %v3069 = vsel %vm3061, %v3057, %v3065
      %3070 = vst [vmem:[%s170] sm:$0xff] %v3066
      %3071 = vst [vmem:[%s170 + $0x8] sm:$0xff] %v3067
      %3072 = vst [vmem:[%s170 + $0x10] sm:$0xff] %v3068
      %3073 = vst [vmem:[%s170 + $0x18] sm:$0xff] %v3069
      %p3074 = scmp.lt.s32.totalorder %s14, 1
      %s3075 = scalar_select %p3074, %s14, 1
      %s3076 = smul.addr %s3075, 4
      %s3077 = smul.addr %s3076, 8
      %s3078 = scalar_lea.vmem %s3, %s3077
      // Predicated region
      $region33: #{_lambda_.1} parent=31 // pred_check
        %p3079 = pneg %p100
      $region34: #{_lambda_.1} parent=31 // pred_check_branch
        %3081 = sbr.rel (%p3079) target = $region36
      $region35: #{_lambda_.1} parent=31 // pred_region
        _
      $region36: #{_lambda_.1} parent=31 // pred_fallthru
        _
    $region32: #{_lambda_.1} parent=5 // pred_fallthru
      _
    %p3082 = scmp.le.s32.totalorder 2, %s9
    // Predicated region
    $region37: #{_lambda_.1} parent=5 // pred_check
      %p3083 = pneg %p3082
    $region38: #{_lambda_.1} parent=5 // pred_check_branch
      %3085 = sbr.rel (%p3083) target = $region40
    $region39: #{_lambda_.1} parent=5 // pred_region
      %s3086 = ssub.s32 %s9, 2
      // Predicated region
      $region41: #{_lambda_.1} parent=39 // pred_check
        %p3087 = pneg %p106
      $region42: #{_lambda_.1} parent=39 // pred_check_branch
        %3089 = sbr.rel (%p3087) target = $region44
      $region43: #{_lambda_.1} parent=39 // pred_region
        %p3090 = scmp.lt.s32.totalorder %s15, 1
        %s3091 = scalar_select %p3090, %s15, 1
        %s3092 = smul.addr %s3091, 4
        %s3093 = smul.addr %s3092, 8
        %s3094 = scalar_lea.vmem %s3, %s3093
      $region44: #{_lambda_.1} parent=39 // pred_fallthru
        _
    $region40: #{_lambda_.1} parent=5 // pred_fallthru
      _
  $region6: #{_lambda_.1} parent=0 // loop_footer
    %s13 = sadd.s32 1, %s9
  $region7: #{_lambda_.1} parent=0 // loop_footer_branch
    %8 = sbr.rel target = $region3
  $region8: #{_lambda_.1} parent=0 // loop_exit
    _

</llo_original>
